<compile_context>
chip_gen: v6e
topology: v6e:2x2x1
jax: 0.10.0
libtpu: 0.0.40
codegen_flags: <defaults>
</compile_context>

<pallas_src>
import functools
import math

import jax
import jax.numpy as jnp
from jax.experimental import pallas as pl
from jax.experimental.pallas import tpu as pltpu

_LN_EPS = 1e-5                      # torch.nn.LayerNorm default
_SQRT2_INV = 1.0 / math.sqrt(2.0)


def _layer_norm(x, g, b):
    mu = jnp.mean(x, axis=-1, keepdims=True)
    var = jnp.mean(jnp.square(x - mu), axis=-1, keepdims=True)
    return (x - mu) * jax.lax.rsqrt(var + _LN_EPS) * g + b


def _gelu(x):
    # exact (erf-based) GELU, matching ACT2FN["gelu"] used by BART configs.
    return 0.5 * x * (1.0 + jax.lax.erf(x * _SQRT2_INV))


def _membart_layer_kernel(
    # inputs
    mask_ref,                 # (1, T)  additive key mask, f32
    xj_ref,                   # (T, D)  joint [memory ; hidden], bf16 (K/V source)
    mem_ref,                  # (M, D)  memory, f32 (residual + memory queries)
    hid_ref,                  # (TQ, D) hidden query block, f32
    wq_ref, bq_ref, wk_ref, bk_ref, wv_ref, bv_ref, wo_ref, bo_ref,
    ln1g_ref, ln1b_ref, fc1w_ref, fc1b_ref, fc2w_ref, fc2b_ref, ln2g_ref, ln2b_ref,
    mln1g_ref, mln1b_ref, mfc1w_ref, mfc1b_ref, mfc2w_ref, mfc2b_ref,
    mln2g_ref, mln2b_ref,
    # outputs
    hid_out_ref,              # (TQ, D)
    mem_out_ref,              # (M, D)
    # scratch (persist across the query-block grid axis)
    k_sc, v_sc,               # (H, T, dh) bf16
    q_sc, qm_sc,              # (H, TQ, dh) / (H, M, dh) bf16
    *, num_heads, mem_len,
):
    j = pl.program_id(1)
    H = num_heads
    M = mem_len
    bf16 = jnp.bfloat16

    mask = mask_ref[...]                                   # (1, T) additive, f32

    def proj_into(x_bf, w_ref, b_ref, out_sc):
        # per-head projection, written straight into VMEM scratch slices (no concat)
        for h in range(H):
            y = jnp.dot(x_bf, w_ref[h], preferred_element_type=jnp.float32)
            out_sc[h] = (y + b_ref[h]).astype(bf16)

    def attention(q_heads):
        # q_heads: (H, rows, dh) bf16 -> (rows, D) f32 (after out-projection)
        s = jnp.einsum("hqd,hkd->hqk", q_heads, k_sc[...],
                       preferred_element_type=jnp.float32)
        s = s + mask                                       # broadcast key mask over (H, rows)
        s = s - jnp.max(s, axis=-1, keepdims=True)
        p = jnp.exp(s)
        p = p * pl.reciprocal(jnp.sum(p, axis=-1, keepdims=True), approx=True)
        o = jnp.einsum("hqk,hkd->hqd", p.astype(bf16), v_sc[...],
                       preferred_element_type=jnp.float32)
        o = jnp.einsum("hqd,hdo->hqo", o.astype(bf16), wo_ref[...],
                       preferred_element_type=jnp.float32)
        return jnp.sum(o, axis=0) + bo_ref[...]

    def ffn(x, w1_ref, b1_ref, w2_ref, b2_ref):
        h = jnp.dot(x.astype(bf16), w1_ref[...],
                    preferred_element_type=jnp.float32) + b1_ref[...]
        h = _gelu(h)
        return jnp.dot(h.astype(bf16), w2_ref[...],
                       preferred_element_type=jnp.float32) + b2_ref[...]

    # ---- once per batch element (query block 0): build K/V cache + memory branch ----
    @pl.when(j == 0)
    def _():
        xj = xj_ref[...]                                   # (T, D) bf16
        for h in range(H):
            k_sc[h] = (jnp.dot(xj, wk_ref[h], preferred_element_type=jnp.float32)
                       + bk_ref[h]).astype(bf16)
            v_sc[h] = (jnp.dot(xj, wv_ref[h], preferred_element_type=jnp.float32)
                       + bv_ref[h]).astype(bf16)

        proj_into(xj[:M, :], wq_ref, bq_ref, qm_sc)        # memory queries
        mem_attn = attention(qm_sc[...])                   # (M, D)
        m1 = _layer_norm(mem_ref[...] + mem_attn, mln1g_ref[...], mln1b_ref[...])
        mff = ffn(m1, mfc1w_ref, mfc1b_ref, mfc2w_ref, mfc2b_ref)
        mem_out_ref[...] = _layer_norm(m1 + mff, mln2g_ref[...], mln2b_ref[...])

    # ---- every query block: hidden-stream attention + FFN ----
    x_blk = hid_ref[...]                                   # (TQ, D) f32 (residual)
    proj_into(x_blk.astype(bf16), wq_ref, bq_ref, q_sc)
    hid_attn = attention(q_sc[...])                        # (TQ, D)
    h1 = _layer_norm(x_blk + hid_attn, ln1g_ref[...], ln1b_ref[...])
    ff = ffn(h1, fc1w_ref, fc1b_ref, fc2w_ref, fc2b_ref)
    hid_out_ref[...] = _layer_norm(h1 + ff, ln2g_ref[...], ln2b_ref[...])


def membart_encoder_layer(hidden, memory, key_keep, layer_head_mask, params,
                          num_heads, block_q=None):
    f32, bf16 = jnp.float32, jnp.bfloat16
    B, S, D = hidden.shape
    M = memory.shape[1]
    T = M + S
    H = num_heads
    dh = D // H
    if block_q is None:
        block_q = S
    assert S % block_q == 0
    NQ = S // block_q
    scale = 1.0 / math.sqrt(dh)

    hidden = hidden.astype(f32)
    memory = memory.astype(f32)
    x_joint_bf = jnp.concatenate([memory, hidden], axis=1).astype(bf16)   # (B, T, D)
    add_mask = ((1.0 - key_keep.astype(f32)) * -1e9)[:, None, :]          # (B, 1, T)
    hm = layer_head_mask.astype(f32)

    def split_heads_in(w, b, col_scale=None):
        # (D, D) -> (H, D, dh);  (1, D) -> (H, 1, dh)
        wh = w.reshape(D, H, dh).transpose(1, 0, 2)
        bh = b.reshape(H, dh)[:, None, :]
        if col_scale is not None:
            wh = wh * col_scale[:, None, None]
            bh = bh * col_scale[:, None, None]
        return wh, bh

    # fold 1/sqrt(dh) into W_q / b_q and layer_head_mask into W_v / b_v (zero kernel cost)
    wq_h, bq_h = split_heads_in(params["q_w"], params["q_b"],
                                col_scale=jnp.full((H,), scale, f32))
    wk_h, bk_h = split_heads_in(params["k_w"], params["k_b"])
    wv_h, bv_h = split_heads_in(params["v_w"], params["v_b"], col_scale=hm)
    wo_h = params["o_w"].reshape(H, dh, D)

    weights = [
        wq_h.astype(bf16), bq_h, wk_h.astype(bf16), bk_h,
        wv_h.astype(bf16), bv_h, wo_h.astype(bf16), params["o_b"],
        params["ln1_g"], params["ln1_b"],
        params["fc1_w"].astype(bf16), params["fc1_b"],
        params["fc2_w"].astype(bf16), params["fc2_b"],
        params["ln2_g"], params["ln2_b"],
        params["mln1_g"], params["mln1_b"],
        params["mfc1_w"].astype(bf16), params["mfc1_b"],
        params["mfc2_w"].astype(bf16), params["mfc2_b"],
        params["mln2_g"], params["mln2_b"],
    ]

    def bcast_spec(a):
        zeros = (0,) * a.ndim
        return pl.BlockSpec(a.shape, lambda b, q, _z=zeros: _z)

    in_specs = [
        pl.BlockSpec((None, 1, T), lambda b, q: (b, 0, 0)),        # additive key mask
        pl.BlockSpec((None, T, D), lambda b, q: (b, 0, 0)),        # joint seq (bf16, K/V src)
        pl.BlockSpec((None, M, D), lambda b, q: (b, 0, 0)),        # memory (f32)
        pl.BlockSpec((None, block_q, D), lambda b, q: (b, q, 0)),  # hidden query block (f32)
    ] + [bcast_spec(w) for w in weights]

    out_specs = [
        pl.BlockSpec((None, block_q, D), lambda b, q: (b, q, 0)),
        pl.BlockSpec((None, M, D), lambda b, q: (b, 0, 0)),
    ]

    kernel = functools.partial(_membart_layer_kernel, num_heads=H, mem_len=M)

    hid_out, mem_out = pl.pallas_call(
        kernel,
        out_shape=(jax.ShapeDtypeStruct((B, S, D), f32),
                   jax.ShapeDtypeStruct((B, M, D), f32)),
        grid=(B, NQ),
        in_specs=in_specs,
        out_specs=out_specs,
        scratch_shapes=[
            pltpu.VMEM((H, T, dh), bf16),        # K cache
            pltpu.VMEM((H, T, dh), bf16),        # V cache
            pltpu.VMEM((H, block_q, dh), bf16),  # hidden-block Q
            pltpu.VMEM((H, M, dh), bf16),        # memory Q
        ],
        compiler_params=pltpu.CompilerParams(
            dimension_semantics=("parallel", "arbitrary"),
            vmem_limit_bytes=40 * 1024 * 1024),
    )(add_mask, x_joint_bf, memory, hidden, *weights)
    return hid_out, mem_out


def init_params(key, d_model, ffn_dim):
    keys = jax.random.split(key, 16)

    def lin(kw, kb, din, dout):
        w = 0.02 * jax.random.normal(kw, (din, dout), jnp.float32)
        b = 0.01 * jax.random.normal(kb, (1, dout), jnp.float32)
        return w, b

    p = {}
    p["q_w"], p["q_b"] = lin(keys[0], keys[1], d_model, d_model)
    p["k_w"], p["k_b"] = lin(keys[2], keys[3], d_model, d_model)
    p["v_w"], p["v_b"] = lin(keys[4], keys[5], d_model, d_model)
    p["o_w"], p["o_b"] = lin(keys[6], keys[7], d_model, d_model)
    p["fc1_w"], p["fc1_b"] = lin(keys[8], keys[9], d_model, ffn_dim)
    p["fc2_w"], p["fc2_b"] = lin(keys[10], keys[11], ffn_dim, d_model)
    p["mfc1_w"], p["mfc1_b"] = lin(keys[12], keys[13], d_model, ffn_dim)
    p["mfc2_w"], p["mfc2_b"] = lin(keys[14], keys[15], ffn_dim, d_model)
    ones = jnp.ones((1, d_model), jnp.float32)
    zeros = jnp.zeros((1, d_model), jnp.float32)
    for name in ("ln1", "ln2", "mln1", "mln2"):
        p[name + "_g"] = ones
        p[name + "_b"] = zeros
    return p


def reference(hidden, memory, key_keep, layer_head_mask, params, num_heads):
    B, S, D = hidden.shape
    M = memory.shape[1]
    T = M + S
    dh = D // num_heads
    x = jnp.concatenate([memory, hidden], axis=1)
    add_mask = ((1.0 - key_keep) * -1e9)[:, None, None, :]   # (B, 1, 1, T)

    def lin(v, w, b):
        return v @ w + b[0]

    def ln(v, g, b):
        mu = v.mean(-1, keepdims=True)
        var = ((v - mu) ** 2).mean(-1, keepdims=True)
        return (v - mu) / jnp.sqrt(var + _LN_EPS) * g[0] + b[0]

    def gelu(v):
        return 0.5 * v * (1.0 + jax.lax.erf(v / math.sqrt(2.0)))

    q = lin(x, params["q_w"], params["q_b"]) / math.sqrt(dh)
    k = lin(x, params["k_w"], params["k_b"])
    v = lin(x, params["v_w"], params["v_b"])
    q = q.reshape(B, T, num_heads, dh).transpose(0, 2, 1, 3)
    k = k.reshape(B, T, num_heads, dh).transpose(0, 2, 1, 3)
    v = v.reshape(B, T, num_heads, dh).transpose(0, 2, 1, 3)
    s = jnp.einsum("bhqd,bhkd->bhqk", q, k) + add_mask
    p = jax.nn.softmax(s, axis=-1) * layer_head_mask[None, :, None, None]
    o = jnp.einsum("bhqk,bhkd->bhqd", p, v).transpose(0, 2, 1, 3).reshape(B, T, D)
    o = lin(o, params["o_w"], params["o_b"])

    mem_a, hid_a = o[:, :M], o[:, M:]
    h1 = ln(hidden + hid_a, params["ln1_g"], params["ln1_b"])
    ff = lin(gelu(lin(h1, params["fc1_w"], params["fc1_b"])), params["fc2_w"], params["fc2_b"])
    h2 = ln(h1 + ff, params["ln2_g"], params["ln2_b"])

    m1 = ln(memory + mem_a, params["mln1_g"], params["mln1_b"])
    mff = lin(gelu(lin(m1, params["mfc1_w"], params["mfc1_b"])),
              params["mfc2_w"], params["mfc2_b"])
    m2 = ln(m1 + mff, params["mln2_g"], params["mln2_b"])
    return h2, m2


if __name__ == "__main__":
    # batch, seq, memory slots, d_model, heads, ffn, hidden query block
    B, S, M, D, H, F, TQ = 2, 16, 8, 32, 4, 64, 8
    T = M + S

    key = jax.random.PRNGKey(0)
    k_h, k_m, k_p = jax.random.split(key, 3)
    hidden = jax.random.normal(k_h, (B, S, D), jnp.float32)
    memory = jax.random.normal(k_m, (B, M, D), jnp.float32)
    params = init_params(k_p, D, F)

    # key-padding mask over the joint [memory ; hidden] sequence:
    # memory keys always visible; last 2 hidden tokens of batch 1 are padding.
    key_keep = jnp.ones((B, T), jnp.float32)
    key_keep = key_keep.at[1, T - 2:].set(0.0)
    layer_head_mask = jnp.array([1.0, 1.0, 0.0, 1.0], jnp.float32)

    hid_out, mem_out = membart_encoder_layer(hidden, memory, key_keep,
                                             layer_head_mask, params, H, block_q=TQ)
    jax.block_until_ready((hid_out, mem_out))

    ref_h, ref_m = reference(hidden, memory, key_keep, layer_head_mask, params, H)
    err = max(float(jnp.max(jnp.abs(hid_out - ref_h))),
              float(jnp.max(jnp.abs(mem_out - ref_m))))
    assert err < 5e-2, f"kernel/reference mismatch: {err}"
    print("KERNEL_OK")
</pallas_src>

<mosaic_0001>
module attributes {stable_mosaic.version = 11 : i64} {
  func.func @_membart_layer_kernel(%arg0: i32, %arg1: i32, %arg2: memref<1x1x24xf32, #tpu.memory_space<vmem>>, %arg3: memref<1x24x32xbf16, #tpu.memory_space<vmem>>, %arg4: memref<1x8x32xf32, #tpu.memory_space<vmem>>, %arg5: memref<1x8x32xf32, #tpu.memory_space<vmem>>, %arg6: memref<4x32x8xbf16, #tpu.memory_space<vmem>>, %arg7: memref<4x1x8xf32, #tpu.memory_space<vmem>>, %arg8: memref<4x32x8xbf16, #tpu.memory_space<vmem>>, %arg9: memref<4x1x8xf32, #tpu.memory_space<vmem>>, %arg10: memref<4x32x8xbf16, #tpu.memory_space<vmem>>, %arg11: memref<4x1x8xf32, #tpu.memory_space<vmem>>, %arg12: memref<4x8x32xbf16, #tpu.memory_space<vmem>>, %arg13: memref<1x32xf32, #tpu.memory_space<vmem>>, %arg14: memref<1x32xf32, #tpu.memory_space<vmem>>, %arg15: memref<1x32xf32, #tpu.memory_space<vmem>>, %arg16: memref<32x64xbf16, #tpu.memory_space<vmem>>, %arg17: memref<1x64xf32, #tpu.memory_space<vmem>>, %arg18: memref<64x32xbf16, #tpu.memory_space<vmem>>, %arg19: memref<1x32xf32, #tpu.memory_space<vmem>>, %arg20: memref<1x32xf32, #tpu.memory_space<vmem>>, %arg21: memref<1x32xf32, #tpu.memory_space<vmem>>, %arg22: memref<1x32xf32, #tpu.memory_space<vmem>>, %arg23: memref<1x32xf32, #tpu.memory_space<vmem>>, %arg24: memref<32x64xbf16, #tpu.memory_space<vmem>>, %arg25: memref<1x64xf32, #tpu.memory_space<vmem>>, %arg26: memref<64x32xbf16, #tpu.memory_space<vmem>>, %arg27: memref<1x32xf32, #tpu.memory_space<vmem>>, %arg28: memref<1x32xf32, #tpu.memory_space<vmem>>, %arg29: memref<1x32xf32, #tpu.memory_space<vmem>>, %arg30: memref<1x8x32xf32, #tpu.memory_space<vmem>>, %arg31: memref<1x8x32xf32, #tpu.memory_space<vmem>>, %arg32: memref<4x24x8xbf16, #tpu.memory_space<vmem>>, %arg33: memref<4x24x8xbf16, #tpu.memory_space<vmem>>, %arg34: memref<4x8x8xbf16, #tpu.memory_space<vmem>>, %arg35: memref<4x8x8xbf16, #tpu.memory_space<vmem>>) attributes {dimension_semantics = [#tpu.dimension_semantics<parallel>, #tpu.dimension_semantics<arbitrary>], iteration_bounds = array<i64: 2, 2>, scalar_prefetch = 0 : i64, scratch_operands = 4 : i64, tpu.core_type = #tpu.core_type<tc>, window_params = [{transform_indices = @transform_0, window_bounds = array<i64: 1, 1, 24>}, {transform_indices = @transform_1, window_bounds = array<i64: 1, 24, 32>}, {transform_indices = @transform_2, window_bounds = array<i64: 1, 8, 32>}, {transform_indices = @transform_3, window_bounds = array<i64: 1, 8, 32>}, {pipeline_mode = #tpu.pipeline_mode<synchronous>, transform_indices = @transform_4, window_bounds = array<i64: 4, 32, 8>}, {pipeline_mode = #tpu.pipeline_mode<synchronous>, transform_indices = @transform_5, window_bounds = array<i64: 4, 1, 8>}, {pipeline_mode = #tpu.pipeline_mode<synchronous>, transform_indices = @transform_6, window_bounds = array<i64: 4, 32, 8>}, {pipeline_mode = #tpu.pipeline_mode<synchronous>, transform_indices = @transform_7, window_bounds = array<i64: 4, 1, 8>}, {pipeline_mode = #tpu.pipeline_mode<synchronous>, transform_indices = @transform_8, window_bounds = array<i64: 4, 32, 8>}, {pipeline_mode = #tpu.pipeline_mode<synchronous>, transform_indices = @transform_9, window_bounds = array<i64: 4, 1, 8>}, {pipeline_mode = #tpu.pipeline_mode<synchronous>, transform_indices = @transform_10, window_bounds = array<i64: 4, 8, 32>}, {pipeline_mode = #tpu.pipeline_mode<synchronous>, transform_indices = @transform_11, window_bounds = array<i64: 1, 32>}, {pipeline_mode = #tpu.pipeline_mode<synchronous>, transform_indices = @transform_12, window_bounds = array<i64: 1, 32>}, {pipeline_mode = #tpu.pipeline_mode<synchronous>, transform_indices = @transform_13, window_bounds = array<i64: 1, 32>}, {pipeline_mode = #tpu.pipeline_mode<synchronous>, transform_indices = @transform_14, window_bounds = array<i64: 32, 64>}, {pipeline_mode = #tpu.pipeline_mode<synchronous>, transform_indices = @transform_15, window_bounds = array<i64: 1, 64>}, {pipeline_mode = #tpu.pipeline_mode<synchronous>, transform_indices = @transform_16, window_bounds = array<i64: 64, 32>}, {pipeline_mode = #tpu.pipeline_mode<synchronous>, transform_indices = @transform_17, window_bounds = array<i64: 1, 32>}, {pipeline_mode = #tpu.pipeline_mode<synchronous>, transform_indices = @transform_18, window_bounds = array<i64: 1, 32>}, {pipeline_mode = #tpu.pipeline_mode<synchronous>, transform_indices = @transform_19, window_bounds = array<i64: 1, 32>}, {pipeline_mode = #tpu.pipeline_mode<synchronous>, transform_indices = @transform_20, window_bounds = array<i64: 1, 32>}, {pipeline_mode = #tpu.pipeline_mode<synchronous>, transform_indices = @transform_21, window_bounds = array<i64: 1, 32>}, {pipeline_mode = #tpu.pipeline_mode<synchronous>, transform_indices = @transform_22, window_bounds = array<i64: 32, 64>}, {pipeline_mode = #tpu.pipeline_mode<synchronous>, transform_indices = @transform_23, window_bounds = array<i64: 1, 64>}, {pipeline_mode = #tpu.pipeline_mode<synchronous>, transform_indices = @transform_24, window_bounds = array<i64: 64, 32>}, {pipeline_mode = #tpu.pipeline_mode<synchronous>, transform_indices = @transform_25, window_bounds = array<i64: 1, 32>}, {pipeline_mode = #tpu.pipeline_mode<synchronous>, transform_indices = @transform_26, window_bounds = array<i64: 1, 32>}, {pipeline_mode = #tpu.pipeline_mode<synchronous>, transform_indices = @transform_27, window_bounds = array<i64: 1, 32>}, {transform_indices = @transform_28, window_bounds = array<i64: 1, 8, 32>}, {transform_indices = @transform_29, window_bounds = array<i64: 1, 8, 32>}]} {
    %c0 = arith.constant 0 : index
    %c0_0 = arith.constant 0 : index
    %c0_1 = arith.constant 0 : index
    %0 = vector.load %arg2[%c0, %c0_0, %c0_1] : memref<1x1x24xf32, #tpu.memory_space<vmem>>, vector<1x1x24xf32>
    %1 = vector.shape_cast %0 : vector<1x1x24xf32> to vector<1x24xf32>
    %c0_i32 = arith.constant 0 : i32
    %2 = arith.cmpi eq, %arg1, %c0_i32 : i32
    %3 = arith.extui %2 : i1 to i32
    %c0_i32_2 = arith.constant 0 : i32
    %4 = arith.cmpi ne, %3, %c0_i32_2 : i32
    scf.if %4 {
      %c0_96 = arith.constant 0 : index
      %c0_97 = arith.constant 0 : index
      %c0_98 = arith.constant 0 : index
      %151 = vector.load %arg3[%c0_96, %c0_97, %c0_98] : memref<1x24x32xbf16, #tpu.memory_space<vmem>>, vector<1x24x32xbf16>
      %152 = vector.shape_cast %151 : vector<1x24x32xbf16> to vector<24x32xbf16>
      %c0_99 = arith.constant 0 : index
      %c0_100 = arith.constant 0 : index
      %c0_101 = arith.constant 0 : index
      %153 = vector.load %arg8[%c0_99, %c0_100, %c0_101] : memref<4x32x8xbf16, #tpu.memory_space<vmem>>, vector<1x32x8xbf16>
      %154 = vector.shape_cast %153 : vector<1x32x8xbf16> to vector<32x8xbf16>
      %cst_102 = arith.constant dense<0.000000e+00> : vector<24x8xf32>
      %155 = tpu.matmul %152, %154, %cst_102 {dimension_numbers = #tpu.dot_dimension_numbers<[1], [0], [0], [1], [0, 0, 1, 1], [], []>} : vector<24x32xbf16>, vector<32x8xbf16>, vector<24x8xf32> -> vector<24x8xf32>
      %c0_103 = arith.constant 0 : index
      %c0_104 = arith.constant 0 : index
      %c0_105 = arith.constant 0 : index
      %156 = vector.load %arg9[%c0_103, %c0_104, %c0_105] : memref<4x1x8xf32, #tpu.memory_space<vmem>>, vector<1x1x8xf32>
      %157 = vector.shape_cast %156 : vector<1x1x8xf32> to vector<1x8xf32>
      %158 = vector.broadcast %157 : vector<1x8xf32> to vector<24x8xf32>
      %159 = arith.addf %155, %158 : vector<24x8xf32>
      %160 = arith.truncf %159 : vector<24x8xf32> to vector<24x8xbf16>
      %c0_106 = arith.constant 0 : index
      %c0_107 = arith.constant 0 : index
      %c0_108 = arith.constant 0 : index
      %161 = vector.load %arg32[%c0_106, %c0_107, %c0_108] : memref<4x24x8xbf16, #tpu.memory_space<vmem>>, vector<1x24x8xbf16>
      %162 = vector.shape_cast %161 : vector<1x24x8xbf16> to vector<24x8xbf16>
      %163 = vector.shape_cast %160 : vector<24x8xbf16> to vector<1x24x8xbf16>
      tpu.vector_store %arg32[%c0_106, %c0_107, %c0_108], %163 {strides = array<i32>} : memref<4x24x8xbf16, #tpu.memory_space<vmem>>, vector<1x24x8xbf16>,
      %c0_109 = arith.constant 0 : index
      %c0_110 = arith.constant 0 : index
      %c0_111 = arith.constant 0 : index
      %164 = vector.load %arg10[%c0_109, %c0_110, %c0_111] : memref<4x32x8xbf16, #tpu.memory_space<vmem>>, vector<1x32x8xbf16>
      %165 = vector.shape_cast %164 : vector<1x32x8xbf16> to vector<32x8xbf16>
      %cst_112 = arith.constant dense<0.000000e+00> : vector<24x8xf32>
      %166 = tpu.matmul %152, %165, %cst_112 {dimension_numbers = #tpu.dot_dimension_numbers<[1], [0], [0], [1], [0, 0, 1, 1], [], []>} : vector<24x32xbf16>, vector<32x8xbf16>, vector<24x8xf32> -> vector<24x8xf32>
      %c0_113 = arith.constant 0 : index
      %c0_114 = arith.constant 0 : index
      %c0_115 = arith.constant 0 : index
      %167 = vector.load %arg11[%c0_113, %c0_114, %c0_115] : memref<4x1x8xf32, #tpu.memory_space<vmem>>, vector<1x1x8xf32>
      %168 = vector.shape_cast %167 : vector<1x1x8xf32> to vector<1x8xf32>
      %169 = vector.broadcast %168 : vector<1x8xf32> to vector<24x8xf32>
      %170 = arith.addf %166, %169 : vector<24x8xf32>
      %171 = arith.truncf %170 : vector<24x8xf32> to vector<24x8xbf16>
      %c0_116 = arith.constant 0 : index
      %c0_117 = arith.constant 0 : index
      %c0_118 = arith.constant 0 : index
      %172 = vector.load %arg33[%c0_116, %c0_117, %c0_118] : memref<4x24x8xbf16, #tpu.memory_space<vmem>>, vector<1x24x8xbf16>
      %173 = vector.shape_cast %172 : vector<1x24x8xbf16> to vector<24x8xbf16>
      %174 = vector.shape_cast %171 : vector<24x8xbf16> to vector<1x24x8xbf16>
      tpu.vector_store %arg33[%c0_116, %c0_117, %c0_118], %174 {strides = array<i32>} : memref<4x24x8xbf16, #tpu.memory_space<vmem>>, vector<1x24x8xbf16>,
      %c1_119 = arith.constant 1 : index
      %c0_120 = arith.constant 0 : index
      %c0_121 = arith.constant 0 : index
      %175 = vector.load %arg8[%c1_119, %c0_120, %c0_121] : memref<4x32x8xbf16, #tpu.memory_space<vmem>>, vector<1x32x8xbf16>
      %176 = vector.shape_cast %175 : vector<1x32x8xbf16> to vector<32x8xbf16>
      %cst_122 = arith.constant dense<0.000000e+00> : vector<24x8xf32>
      %177 = tpu.matmul %152, %176, %cst_122 {dimension_numbers = #tpu.dot_dimension_numbers<[1], [0], [0], [1], [0, 0, 1, 1], [], []>} : vector<24x32xbf16>, vector<32x8xbf16>, vector<24x8xf32> -> vector<24x8xf32>
      %c1_123 = arith.constant 1 : index
      %c0_124 = arith.constant 0 : index
      %c0_125 = arith.constant 0 : index
      %178 = vector.load %arg9[%c1_123, %c0_124, %c0_125] : memref<4x1x8xf32, #tpu.memory_space<vmem>>, vector<1x1x8xf32>
      %179 = vector.shape_cast %178 : vector<1x1x8xf32> to vector<1x8xf32>
      %180 = vector.broadcast %179 : vector<1x8xf32> to vector<24x8xf32>
      %181 = arith.addf %177, %180 : vector<24x8xf32>
      %182 = arith.truncf %181 : vector<24x8xf32> to vector<24x8xbf16>
      %c1_126 = arith.constant 1 : index
      %c0_127 = arith.constant 0 : index
      %c0_128 = arith.constant 0 : index
      %183 = vector.load %arg32[%c1_126, %c0_127, %c0_128] : memref<4x24x8xbf16, #tpu.memory_space<vmem>>, vector<1x24x8xbf16>
      %184 = vector.shape_cast %183 : vector<1x24x8xbf16> to vector<24x8xbf16>
      %185 = vector.shape_cast %182 : vector<24x8xbf16> to vector<1x24x8xbf16>
      tpu.vector_store %arg32[%c1_126, %c0_127, %c0_128], %185 {strides = array<i32>} : memref<4x24x8xbf16, #tpu.memory_space<vmem>>, vector<1x24x8xbf16>,
      %c1_129 = arith.constant 1 : index
      %c0_130 = arith.constant 0 : index
      %c0_131 = arith.constant 0 : index
      %186 = vector.load %arg10[%c1_129, %c0_130, %c0_131] : memref<4x32x8xbf16, #tpu.memory_space<vmem>>, vector<1x32x8xbf16>
      %187 = vector.shape_cast %186 : vector<1x32x8xbf16> to vector<32x8xbf16>
      %cst_132 = arith.constant dense<0.000000e+00> : vector<24x8xf32>
      %188 = tpu.matmul %152, %187, %cst_132 {dimension_numbers = #tpu.dot_dimension_numbers<[1], [0], [0], [1], [0, 0, 1, 1], [], []>} : vector<24x32xbf16>, vector<32x8xbf16>, vector<24x8xf32> -> vector<24x8xf32>
      %c1_133 = arith.constant 1 : index
      %c0_134 = arith.constant 0 : index
      %c0_135 = arith.constant 0 : index
      %189 = vector.load %arg11[%c1_133, %c0_134, %c0_135] : memref<4x1x8xf32, #tpu.memory_space<vmem>>, vector<1x1x8xf32>
      %190 = vector.shape_cast %189 : vector<1x1x8xf32> to vector<1x8xf32>
      %191 = vector.broadcast %190 : vector<1x8xf32> to vector<24x8xf32>
      %192 = arith.addf %188, %191 : vector<24x8xf32>
      %193 = arith.truncf %192 : vector<24x8xf32> to vector<24x8xbf16>
      %c1_136 = arith.constant 1 : index
      %c0_137 = arith.constant 0 : index
      %c0_138 = arith.constant 0 : index
      %194 = vector.load %arg33[%c1_136, %c0_137, %c0_138] : memref<4x24x8xbf16, #tpu.memory_space<vmem>>, vector<1x24x8xbf16>
      %195 = vector.shape_cast %194 : vector<1x24x8xbf16> to vector<24x8xbf16>
      %196 = vector.shape_cast %193 : vector<24x8xbf16> to vector<1x24x8xbf16>
      tpu.vector_store %arg33[%c1_136, %c0_137, %c0_138], %196 {strides = array<i32>} : memref<4x24x8xbf16, #tpu.memory_space<vmem>>, vector<1x24x8xbf16>,
      %c2_139 = arith.constant 2 : index
      %c0_140 = arith.constant 0 : index
      %c0_141 = arith.constant 0 : index
      %197 = vector.load %arg8[%c2_139, %c0_140, %c0_141] : memref<4x32x8xbf16, #tpu.memory_space<vmem>>, vector<1x32x8xbf16>
      %198 = vector.shape_cast %197 : vector<1x32x8xbf16> to vector<32x8xbf16>
      %cst_142 = arith.constant dense<0.000000e+00> : vector<24x8xf32>
      %199 = tpu.matmul %152, %198, %cst_142 {dimension_numbers = #tpu.dot_dimension_numbers<[1], [0], [0], [1], [0, 0, 1, 1], [], []>} : vector<24x32xbf16>, vector<32x8xbf16>, vector<24x8xf32> -> vector<24x8xf32>
      %c2_143 = arith.constant 2 : index
      %c0_144 = arith.constant 0 : index
      %c0_145 = arith.constant 0 : index
      %200 = vector.load %arg9[%c2_143, %c0_144, %c0_145] : memref<4x1x8xf32, #tpu.memory_space<vmem>>, vector<1x1x8xf32>
      %201 = vector.shape_cast %200 : vector<1x1x8xf32> to vector<1x8xf32>
      %202 = vector.broadcast %201 : vector<1x8xf32> to vector<24x8xf32>
      %203 = arith.addf %199, %202 : vector<24x8xf32>
      %204 = arith.truncf %203 : vector<24x8xf32> to vector<24x8xbf16>
      %c2_146 = arith.constant 2 : index
      %c0_147 = arith.constant 0 : index
      %c0_148 = arith.constant 0 : index
      %205 = vector.load %arg32[%c2_146, %c0_147, %c0_148] : memref<4x24x8xbf16, #tpu.memory_space<vmem>>, vector<1x24x8xbf16>
      %206 = vector.shape_cast %205 : vector<1x24x8xbf16> to vector<24x8xbf16>
      %207 = vector.shape_cast %204 : vector<24x8xbf16> to vector<1x24x8xbf16>
      tpu.vector_store %arg32[%c2_146, %c0_147, %c0_148], %207 {strides = array<i32>} : memref<4x24x8xbf16, #tpu.memory_space<vmem>>, vector<1x24x8xbf16>,
      %c2_149 = arith.constant 2 : index
      %c0_150 = arith.constant 0 : index
      %c0_151 = arith.constant 0 : index
      %208 = vector.load %arg10[%c2_149, %c0_150, %c0_151] : memref<4x32x8xbf16, #tpu.memory_space<vmem>>, vector<1x32x8xbf16>
      %209 = vector.shape_cast %208 : vector<1x32x8xbf16> to vector<32x8xbf16>
      %cst_152 = arith.constant dense<0.000000e+00> : vector<24x8xf32>
      %210 = tpu.matmul %152, %209, %cst_152 {dimension_numbers = #tpu.dot_dimension_numbers<[1], [0], [0], [1], [0, 0, 1, 1], [], []>} : vector<24x32xbf16>, vector<32x8xbf16>, vector<24x8xf32> -> vector<24x8xf32>
      %c2_153 = arith.constant 2 : index
      %c0_154 = arith.constant 0 : index
      %c0_155 = arith.constant 0 : index
      %211 = vector.load %arg11[%c2_153, %c0_154, %c0_155] : memref<4x1x8xf32, #tpu.memory_space<vmem>>, vector<1x1x8xf32>
      %212 = vector.shape_cast %211 : vector<1x1x8xf32> to vector<1x8xf32>
      %213 = vector.broadcast %212 : vector<1x8xf32> to vector<24x8xf32>
      %214 = arith.addf %210, %213 : vector<24x8xf32>
      %215 = arith.truncf %214 : vector<24x8xf32> to vector<24x8xbf16>
      %c2_156 = arith.constant 2 : index
      %c0_157 = arith.constant 0 : index
      %c0_158 = arith.constant 0 : index
      %216 = vector.load %arg33[%c2_156, %c0_157, %c0_158] : memref<4x24x8xbf16, #tpu.memory_space<vmem>>, vector<1x24x8xbf16>
      %217 = vector.shape_cast %216 : vector<1x24x8xbf16> to vector<24x8xbf16>
      %218 = vector.shape_cast %215 : vector<24x8xbf16> to vector<1x24x8xbf16>
      tpu.vector_store %arg33[%c2_156, %c0_157, %c0_158], %218 {strides = array<i32>} : memref<4x24x8xbf16, #tpu.memory_space<vmem>>, vector<1x24x8xbf16>,
      %c3_159 = arith.constant 3 : index
      %c0_160 = arith.constant 0 : index
      %c0_161 = arith.constant 0 : index
      %219 = vector.load %arg8[%c3_159, %c0_160, %c0_161] : memref<4x32x8xbf16, #tpu.memory_space<vmem>>, vector<1x32x8xbf16>
      %220 = vector.shape_cast %219 : vector<1x32x8xbf16> to vector<32x8xbf16>
      %cst_162 = arith.constant dense<0.000000e+00> : vector<24x8xf32>
      %221 = tpu.matmul %152, %220, %cst_162 {dimension_numbers = #tpu.dot_dimension_numbers<[1], [0], [0], [1], [0, 0, 1, 1], [], []>} : vector<24x32xbf16>, vector<32x8xbf16>, vector<24x8xf32> -> vector<24x8xf32>
      %c3_163 = arith.constant 3 : index
      %c0_164 = arith.constant 0 : index
      %c0_165 = arith.constant 0 : index
      %222 = vector.load %arg9[%c3_163, %c0_164, %c0_165] : memref<4x1x8xf32, #tpu.memory_space<vmem>>, vector<1x1x8xf32>
      %223 = vector.shape_cast %222 : vector<1x1x8xf32> to vector<1x8xf32>
      %224 = vector.broadcast %223 : vector<1x8xf32> to vector<24x8xf32>
      %225 = arith.addf %221, %224 : vector<24x8xf32>
      %226 = arith.truncf %225 : vector<24x8xf32> to vector<24x8xbf16>
      %c3_166 = arith.constant 3 : index
      %c0_167 = arith.constant 0 : index
      %c0_168 = arith.constant 0 : index
      %227 = vector.load %arg32[%c3_166, %c0_167, %c0_168] : memref<4x24x8xbf16, #tpu.memory_space<vmem>>, vector<1x24x8xbf16>
      %228 = vector.shape_cast %227 : vector<1x24x8xbf16> to vector<24x8xbf16>
      %229 = vector.shape_cast %226 : vector<24x8xbf16> to vector<1x24x8xbf16>
      tpu.vector_store %arg32[%c3_166, %c0_167, %c0_168], %229 {strides = array<i32>} : memref<4x24x8xbf16, #tpu.memory_space<vmem>>, vector<1x24x8xbf16>,
      %c3_169 = arith.constant 3 : index
      %c0_170 = arith.constant 0 : index
      %c0_171 = arith.constant 0 : index
      %230 = vector.load %arg10[%c3_169, %c0_170, %c0_171] : memref<4x32x8xbf16, #tpu.memory_space<vmem>>, vector<1x32x8xbf16>
      %231 = vector.shape_cast %230 : vector<1x32x8xbf16> to vector<32x8xbf16>
      %cst_172 = arith.constant dense<0.000000e+00> : vector<24x8xf32>
      %232 = tpu.matmul %152, %231, %cst_172 {dimension_numbers = #tpu.dot_dimension_numbers<[1], [0], [0], [1], [0, 0, 1, 1], [], []>} : vector<24x32xbf16>, vector<32x8xbf16>, vector<24x8xf32> -> vector<24x8xf32>
      %c3_173 = arith.constant 3 : index
      %c0_174 = arith.constant 0 : index
      %c0_175 = arith.constant 0 : index
      %233 = vector.load %arg11[%c3_173, %c0_174, %c0_175] : memref<4x1x8xf32, #tpu.memory_space<vmem>>, vector<1x1x8xf32>
      %234 = vector.shape_cast %233 : vector<1x1x8xf32> to vector<1x8xf32>
      %235 = vector.broadcast %234 : vector<1x8xf32> to vector<24x8xf32>
      %236 = arith.addf %232, %235 : vector<24x8xf32>
      %237 = arith.truncf %236 : vector<24x8xf32> to vector<24x8xbf16>
      %c3_176 = arith.constant 3 : index
      %c0_177 = arith.constant 0 : index
      %c0_178 = arith.constant 0 : index
      %238 = vector.load %arg33[%c3_176, %c0_177, %c0_178] : memref<4x24x8xbf16, #tpu.memory_space<vmem>>, vector<1x24x8xbf16>
      %239 = vector.shape_cast %238 : vector<1x24x8xbf16> to vector<24x8xbf16>
      %240 = vector.shape_cast %237 : vector<24x8xbf16> to vector<1x24x8xbf16>
      tpu.vector_store %arg33[%c3_176, %c0_177, %c0_178], %240 {strides = array<i32>} : memref<4x24x8xbf16, #tpu.memory_space<vmem>>, vector<1x24x8xbf16>,
      %241 = vector.extract_strided_slice %152 {offsets = [0, 0], sizes = [8, 32], strides = [1, 1]} : vector<24x32xbf16> to vector<8x32xbf16>
      %c0_179 = arith.constant 0 : index
      %c0_180 = arith.constant 0 : index
      %c0_181 = arith.constant 0 : index
      %242 = vector.load %arg6[%c0_179, %c0_180, %c0_181] : memref<4x32x8xbf16, #tpu.memory_space<vmem>>, vector<1x32x8xbf16>
      %243 = vector.shape_cast %242 : vector<1x32x8xbf16> to vector<32x8xbf16>
      %cst_182 = arith.constant dense<0.000000e+00> : vector<8x8xf32>
      %244 = tpu.matmul %241, %243, %cst_182 {dimension_numbers = #tpu.dot_dimension_numbers<[1], [0], [0], [1], [0, 0, 1, 1], [], []>} : vector<8x32xbf16>, vector<32x8xbf16>, vector<8x8xf32> -> vector<8x8xf32>
      %c0_183 = arith.constant 0 : index
      %c0_184 = arith.constant 0 : index
      %c0_185 = arith.constant 0 : index
      %245 = vector.load %arg7[%c0_183, %c0_184, %c0_185] : memref<4x1x8xf32, #tpu.memory_space<vmem>>, vector<1x1x8xf32>
      %246 = vector.shape_cast %245 : vector<1x1x8xf32> to vector<1x8xf32>
      %247 = vector.broadcast %246 : vector<1x8xf32> to vector<8x8xf32>
      %248 = arith.addf %244, %247 : vector<8x8xf32>
      %249 = arith.truncf %248 : vector<8x8xf32> to vector<8x8xbf16>
      %c0_186 = arith.constant 0 : index
      %c0_187 = arith.constant 0 : index
      %c0_188 = arith.constant 0 : index
      %250 = vector.load %arg35[%c0_186, %c0_187, %c0_188] : memref<4x8x8xbf16, #tpu.memory_space<vmem>>, vector<1x8x8xbf16>
      %251 = vector.shape_cast %250 : vector<1x8x8xbf16> to vector<8x8xbf16>
      %252 = vector.shape_cast %249 : vector<8x8xbf16> to vector<1x8x8xbf16>
      tpu.vector_store %arg35[%c0_186, %c0_187, %c0_188], %252 {strides = array<i32>} : memref<4x8x8xbf16, #tpu.memory_space<vmem>>, vector<1x8x8xbf16>,
      %c1_189 = arith.constant 1 : index
      %c0_190 = arith.constant 0 : index
      %c0_191 = arith.constant 0 : index
      %253 = vector.load %arg6[%c1_189, %c0_190, %c0_191] : memref<4x32x8xbf16, #tpu.memory_space<vmem>>, vector<1x32x8xbf16>
      %254 = vector.shape_cast %253 : vector<1x32x8xbf16> to vector<32x8xbf16>
      %cst_192 = arith.constant dense<0.000000e+00> : vector<8x8xf32>
      %255 = tpu.matmul %241, %254, %cst_192 {dimension_numbers = #tpu.dot_dimension_numbers<[1], [0], [0], [1], [0, 0, 1, 1], [], []>} : vector<8x32xbf16>, vector<32x8xbf16>, vector<8x8xf32> -> vector<8x8xf32>
      %c1_193 = arith.constant 1 : index
      %c0_194 = arith.constant 0 : index
      %c0_195 = arith.constant 0 : index
      %256 = vector.load %arg7[%c1_193, %c0_194, %c0_195] : memref<4x1x8xf32, #tpu.memory_space<vmem>>, vector<1x1x8xf32>
      %257 = vector.shape_cast %256 : vector<1x1x8xf32> to vector<1x8xf32>
      %258 = vector.broadcast %257 : vector<1x8xf32> to vector<8x8xf32>
      %259 = arith.addf %255, %258 : vector<8x8xf32>
      %260 = arith.truncf %259 : vector<8x8xf32> to vector<8x8xbf16>
      %c1_196 = arith.constant 1 : index
      %c0_197 = arith.constant 0 : index
      %c0_198 = arith.constant 0 : index
      %261 = vector.load %arg35[%c1_196, %c0_197, %c0_198] : memref<4x8x8xbf16, #tpu.memory_space<vmem>>, vector<1x8x8xbf16>
      %262 = vector.shape_cast %261 : vector<1x8x8xbf16> to vector<8x8xbf16>
      %263 = vector.shape_cast %260 : vector<8x8xbf16> to vector<1x8x8xbf16>
      tpu.vector_store %arg35[%c1_196, %c0_197, %c0_198], %263 {strides = array<i32>} : memref<4x8x8xbf16, #tpu.memory_space<vmem>>, vector<1x8x8xbf16>,
      %c2_199 = arith.constant 2 : index
      %c0_200 = arith.constant 0 : index
      %c0_201 = arith.constant 0 : index
      %264 = vector.load %arg6[%c2_199, %c0_200, %c0_201] : memref<4x32x8xbf16, #tpu.memory_space<vmem>>, vector<1x32x8xbf16>
      %265 = vector.shape_cast %264 : vector<1x32x8xbf16> to vector<32x8xbf16>
      %cst_202 = arith.constant dense<0.000000e+00> : vector<8x8xf32>
      %266 = tpu.matmul %241, %265, %cst_202 {dimension_numbers = #tpu.dot_dimension_numbers<[1], [0], [0], [1], [0, 0, 1, 1], [], []>} : vector<8x32xbf16>, vector<32x8xbf16>, vector<8x8xf32> -> vector<8x8xf32>
      %c2_203 = arith.constant 2 : index
      %c0_204 = arith.constant 0 : index
      %c0_205 = arith.constant 0 : index
      %267 = vector.load %arg7[%c2_203, %c0_204, %c0_205] : memref<4x1x8xf32, #tpu.memory_space<vmem>>, vector<1x1x8xf32>
      %268 = vector.shape_cast %267 : vector<1x1x8xf32> to vector<1x8xf32>
      %269 = vector.broadcast %268 : vector<1x8xf32> to vector<8x8xf32>
      %270 = arith.addf %266, %269 : vector<8x8xf32>
      %271 = arith.truncf %270 : vector<8x8xf32> to vector<8x8xbf16>
      %c2_206 = arith.constant 2 : index
      %c0_207 = arith.constant 0 : index
      %c0_208 = arith.constant 0 : index
      %272 = vector.load %arg35[%c2_206, %c0_207, %c0_208] : memref<4x8x8xbf16, #tpu.memory_space<vmem>>, vector<1x8x8xbf16>
      %273 = vector.shape_cast %272 : vector<1x8x8xbf16> to vector<8x8xbf16>
      %274 = vector.shape_cast %271 : vector<8x8xbf16> to vector<1x8x8xbf16>
      tpu.vector_store %arg35[%c2_206, %c0_207, %c0_208], %274 {strides = array<i32>} : memref<4x8x8xbf16, #tpu.memory_space<vmem>>, vector<1x8x8xbf16>,
      %c3_209 = arith.constant 3 : index
      %c0_210 = arith.constant 0 : index
      %c0_211 = arith.constant 0 : index
      %275 = vector.load %arg6[%c3_209, %c0_210, %c0_211] : memref<4x32x8xbf16, #tpu.memory_space<vmem>>, vector<1x32x8xbf16>
      %276 = vector.shape_cast %275 : vector<1x32x8xbf16> to vector<32x8xbf16>
      %cst_212 = arith.constant dense<0.000000e+00> : vector<8x8xf32>
      %277 = tpu.matmul %241, %276, %cst_212 {dimension_numbers = #tpu.dot_dimension_numbers<[1], [0], [0], [1], [0, 0, 1, 1], [], []>} : vector<8x32xbf16>, vector<32x8xbf16>, vector<8x8xf32> -> vector<8x8xf32>
      %c3_213 = arith.constant 3 : index
      %c0_214 = arith.constant 0 : index
      %c0_215 = arith.constant 0 : index
      %278 = vector.load %arg7[%c3_213, %c0_214, %c0_215] : memref<4x1x8xf32, #tpu.memory_space<vmem>>, vector<1x1x8xf32>
      %279 = vector.shape_cast %278 : vector<1x1x8xf32> to vector<1x8xf32>
      %280 = vector.broadcast %279 : vector<1x8xf32> to vector<8x8xf32>
      %281 = arith.addf %277, %280 : vector<8x8xf32>
      %282 = arith.truncf %281 : vector<8x8xf32> to vector<8x8xbf16>
      %c3_216 = arith.constant 3 : index
      %c0_217 = arith.constant 0 : index
      %c0_218 = arith.constant 0 : index
      %283 = vector.load %arg35[%c3_216, %c0_217, %c0_218] : memref<4x8x8xbf16, #tpu.memory_space<vmem>>, vector<1x8x8xbf16>
      %284 = vector.shape_cast %283 : vector<1x8x8xbf16> to vector<8x8xbf16>
      %285 = vector.shape_cast %282 : vector<8x8xbf16> to vector<1x8x8xbf16>
      tpu.vector_store %arg35[%c3_216, %c0_217, %c0_218], %285 {strides = array<i32>} : memref<4x8x8xbf16, #tpu.memory_space<vmem>>, vector<1x8x8xbf16>,
      %c0_219 = arith.constant 0 : index
      %c0_220 = arith.constant 0 : index
      %c0_221 = arith.constant 0 : index
      %286 = vector.load %arg35[%c0_219, %c0_220, %c0_221] : memref<4x8x8xbf16, #tpu.memory_space<vmem>>, vector<4x8x8xbf16>
      %c0_222 = arith.constant 0 : index
      %c0_223 = arith.constant 0 : index
      %c0_224 = arith.constant 0 : index
      %287 = vector.load %arg32[%c0_222, %c0_223, %c0_224] : memref<4x24x8xbf16, #tpu.memory_space<vmem>>, vector<4x24x8xbf16>
      "tpu.trace_start"() <{level = 10 : i32, message = "hqd,hkd->hqk"}> : () -> ()
      %cst_225 = arith.constant dense<0.000000e+00> : vector<4x8x24xf32>
      %288 = tpu.matmul %286, %287, %cst_225 {dimension_numbers = #tpu.dot_dimension_numbers<[2], [2], [1], [1], [0, 0, 0, 1, 1, 1], [0], [0]>} : vector<4x8x8xbf16>, vector<4x24x8xbf16>, vector<4x8x24xf32> -> vector<4x8x24xf32>
      "tpu.trace_stop"() : () -> ()
      %289 = vector.shape_cast %1 : vector<1x24xf32> to vector<1x1x24xf32>
      %290 = vector.broadcast %289 : vector<1x1x24xf32> to vector<4x8x24xf32>
      %291 = arith.addf %288, %290 : vector<4x8x24xf32>
      %cst_226 = arith.constant dense<0xFF800000> : vector<4x8xf32>
      %292 = vector.multi_reduction <maximumf>, %291, %cst_226 [2] : vector<4x8x24xf32> to vector<4x8xf32>
      %293 = vector.shape_cast %292 : vector<4x8xf32> to vector<4x8x1xf32>
      %294 = vector.broadcast %293 : vector<4x8x1xf32> to vector<4x8x24xf32>
      %295 = arith.subf %291, %294 : vector<4x8x24xf32>
      %296 = math.exp %295 : vector<4x8x24xf32>
      %cst_227 = arith.constant dense<0.000000e+00> : vector<4x8xf32>
      %297 = vector.multi_reduction <add>, %296, %cst_227 [2] : vector<4x8x24xf32> to vector<4x8xf32>
      %298 = vector.shape_cast %297 : vector<4x8xf32> to vector<4x8x1xf32>
      %299 = tpu.reciprocal %298 {approx = true} : vector<4x8x1xf32> -> vector<4x8x1xf32>
      %300 = vector.broadcast %299 : vector<4x8x1xf32> to vector<4x8x24xf32>
      %301 = arith.mulf %296, %300 : vector<4x8x24xf32>
      %302 = arith.truncf %301 : vector<4x8x24xf32> to vector<4x8x24xbf16>
      %c0_228 = arith.constant 0 : index
      %c0_229 = arith.constant 0 : index
      %c0_230 = arith.constant 0 : index
      %303 = vector.load %arg33[%c0_228, %c0_229, %c0_230] : memref<4x24x8xbf16, #tpu.memory_space<vmem>>, vector<4x24x8xbf16>
      "tpu.trace_start"() <{level = 10 : i32, message = "hqk,hkd->hqd"}> : () -> ()
      %cst_231 = arith.constant dense<0.000000e+00> : vector<4x8x8xf32>
      %304 = tpu.matmul %302, %303, %cst_231 {dimension_numbers = #tpu.dot_dimension_numbers<[2], [1], [1], [2], [0, 0, 0, 1, 1, 2], [0], [0]>} : vector<4x8x24xbf16>, vector<4x24x8xbf16>, vector<4x8x8xf32> -> vector<4x8x8xf32>
      "tpu.trace_stop"() : () -> ()
      %305 = arith.truncf %304 : vector<4x8x8xf32> to vector<4x8x8xbf16>
      %c0_232 = arith.constant 0 : index
      %c0_233 = arith.constant 0 : index
      %c0_234 = arith.constant 0 : index
      %306 = vector.load %arg12[%c0_232, %c0_233, %c0_234] : memref<4x8x32xbf16, #tpu.memory_space<vmem>>, vector<4x8x32xbf16>
      "tpu.trace_start"() <{level = 10 : i32, message = "hqd,hdo->hqo"}> : () -> ()
      %cst_235 = arith.constant dense<0.000000e+00> : vector<4x8x32xf32>
      %307 = tpu.matmul %305, %306, %cst_235 {dimension_numbers = #tpu.dot_dimension_numbers<[2], [1], [1], [2], [0, 0, 0, 1, 1, 2], [0], [0]>} : vector<4x8x8xbf16>, vector<4x8x32xbf16>, vector<4x8x32xf32> -> vector<4x8x32xf32>
      "tpu.trace_stop"() : () -> ()
      %cst_236 = arith.constant dense<0.000000e+00> : vector<8x32xf32>
      %308 = vector.multi_reduction <add>, %307, %cst_236 [0] : vector<4x8x32xf32> to vector<8x32xf32>
      %c0_237 = arith.constant 0 : index
      %c0_238 = arith.constant 0 : index
      %309 = vector.load %arg13[%c0_237, %c0_238] : memref<1x32xf32, #tpu.memory_space<vmem>>, vector<1x32xf32>
      %310 = vector.broadcast %309 : vector<1x32xf32> to vector<8x32xf32>
      %311 = arith.addf %308, %310 : vector<8x32xf32>
      %c0_239 = arith.constant 0 : index
      %c0_240 = arith.constant 0 : index
      %c0_241 = arith.constant 0 : index
      %312 = vector.load %arg4[%c0_239, %c0_240, %c0_241] : memref<1x8x32xf32, #tpu.memory_space<vmem>>, vector<1x8x32xf32>
      %313 = vector.shape_cast %312 : vector<1x8x32xf32> to vector<8x32xf32>
      %314 = arith.addf %313, %311 : vector<8x32xf32>
      %c0_242 = arith.constant 0 : index
      %c0_243 = arith.constant 0 : index
      %315 = vector.load %arg22[%c0_242, %c0_243] : memref<1x32xf32, #tpu.memory_space<vmem>>, vector<1x32xf32>
      %c0_244 = arith.constant 0 : index
      %c0_245 = arith.constant 0 : index
      %316 = vector.load %arg23[%c0_244, %c0_245] : memref<1x32xf32, #tpu.memory_space<vmem>>, vector<1x32xf32>
      %cst_246 = arith.constant dense<0.000000e+00> : vector<8xf32>
      %317 = vector.multi_reduction <add>, %314, %cst_246 [1] : vector<8x32xf32> to vector<8xf32>
      %318 = vector.shape_cast %317 : vector<8xf32> to vector<8x1xf32>
      %cst_247 = arith.constant 3.200000e+01 : f32
      %319 = vector.broadcast %cst_247 : f32 to vector<8x1xf32>
      %320 = arith.divf %318, %319 : vector<8x1xf32>
      %321 = vector.broadcast %320 : vector<8x1xf32> to vector<8x32xf32>
      %322 = arith.subf %314, %321 : vector<8x32xf32>
      %323 = arith.mulf %322, %322 : vector<8x32xf32>
      %cst_248 = arith.constant dense<0.000000e+00> : vector<8xf32>
      %324 = vector.multi_reduction <add>, %323, %cst_248 [1] : vector<8x32xf32> to vector<8xf32>
      %325 = vector.shape_cast %324 : vector<8xf32> to vector<8x1xf32>
      %cst_249 = arith.constant 3.200000e+01 : f32
      %326 = vector.broadcast %cst_249 : f32 to vector<8x1xf32>
      %327 = arith.divf %325, %326 : vector<8x1xf32>
      %328 = vector.broadcast %320 : vector<8x1xf32> to vector<8x32xf32>
      %329 = arith.subf %314, %328 : vector<8x32xf32>
      %cst_250 = arith.constant 9.99999974E-6 : f32
      %330 = vector.broadcast %cst_250 : f32 to vector<8x1xf32>
      %331 = arith.addf %327, %330 : vector<8x1xf32>
      %332 = math.rsqrt %331 : vector<8x1xf32>
      %333 = vector.broadcast %332 : vector<8x1xf32> to vector<8x32xf32>
      %334 = arith.mulf %329, %333 : vector<8x32xf32>
      %335 = vector.broadcast %315 : vector<1x32xf32> to vector<8x32xf32>
      %336 = arith.mulf %334, %335 : vector<8x32xf32>
      %337 = vector.broadcast %316 : vector<1x32xf32> to vector<8x32xf32>
      %338 = arith.addf %336, %337 : vector<8x32xf32>
      %339 = arith.truncf %338 : vector<8x32xf32> to vector<8x32xbf16>
      %c0_251 = arith.constant 0 : index
      %c0_252 = arith.constant 0 : index
      %340 = vector.load %arg24[%c0_251, %c0_252] : memref<32x64xbf16, #tpu.memory_space<vmem>>, vector<32x64xbf16>
      %cst_253 = arith.constant dense<0.000000e+00> : vector<8x64xf32>
      %341 = tpu.matmul %339, %340, %cst_253 {dimension_numbers = #tpu.dot_dimension_numbers<[1], [0], [0], [1], [0, 0, 1, 1], [], []>} : vector<8x32xbf16>, vector<32x64xbf16>, vector<8x64xf32> -> vector<8x64xf32>
      %c0_254 = arith.constant 0 : index
      %c0_255 = arith.constant 0 : index
      %342 = vector.load %arg25[%c0_254, %c0_255] : memref<1x64xf32, #tpu.memory_space<vmem>>, vector<1x64xf32>
      %343 = vector.broadcast %342 : vector<1x64xf32> to vector<8x64xf32>
      %344 = arith.addf %341, %343 : vector<8x64xf32>
      %cst_256 = arith.constant 5.000000e-01 : f32
      %345 = vector.broadcast %cst_256 : f32 to vector<8x64xf32>
      %346 = arith.mulf %345, %344 : vector<8x64xf32>
      %cst_257 = arith.constant 0.707106769 : f32
      %347 = vector.broadcast %cst_257 : f32 to vector<8x64xf32>
      %348 = arith.mulf %344, %347 : vector<8x64xf32>
      %349 = math.erf %348 : vector<8x64xf32>
      %cst_258 = arith.constant 1.000000e+00 : f32
      %350 = vector.broadcast %cst_258 : f32 to vector<8x64xf32>
      %351 = arith.addf %350, %349 : vector<8x64xf32>
      %352 = arith.mulf %346, %351 : vector<8x64xf32>
      %353 = arith.truncf %352 : vector<8x64xf32> to vector<8x64xbf16>
      %c0_259 = arith.constant 0 : index
      %c0_260 = arith.constant 0 : index
      %354 = vector.load %arg26[%c0_259, %c0_260] : memref<64x32xbf16, #tpu.memory_space<vmem>>, vector<64x32xbf16>
      %cst_261 = arith.constant dense<0.000000e+00> : vector<8x32xf32>
      %355 = tpu.matmul %353, %354, %cst_261 {dimension_numbers = #tpu.dot_dimension_numbers<[1], [0], [0], [1], [0, 0, 1, 1], [], []>} : vector<8x64xbf16>, vector<64x32xbf16>, vector<8x32xf32> -> vector<8x32xf32>
      %c0_262 = arith.constant 0 : index
      %c0_263 = arith.constant 0 : index
      %356 = vector.load %arg27[%c0_262, %c0_263] : memref<1x32xf32, #tpu.memory_space<vmem>>, vector<1x32xf32>
      %357 = vector.broadcast %356 : vector<1x32xf32> to vector<8x32xf32>
      %358 = arith.addf %355, %357 : vector<8x32xf32>
      %359 = arith.addf %338, %358 : vector<8x32xf32>
      %c0_264 = arith.constant 0 : index
      %c0_265 = arith.constant 0 : index
      %360 = vector.load %arg28[%c0_264, %c0_265] : memref<1x32xf32, #tpu.memory_space<vmem>>, vector<1x32xf32>
      %c0_266 = arith.constant 0 : index
      %c0_267 = arith.constant 0 : index
      %361 = vector.load %arg29[%c0_266, %c0_267] : memref<1x32xf32, #tpu.memory_space<vmem>>, vector<1x32xf32>
      %cst_268 = arith.constant dense<0.000000e+00> : vector<8xf32>
      %362 = vector.multi_reduction <add>, %359, %cst_268 [1] : vector<8x32xf32> to vector<8xf32>
      %363 = vector.shape_cast %362 : vector<8xf32> to vector<8x1xf32>
      %cst_269 = arith.constant 3.200000e+01 : f32
      %364 = vector.broadcast %cst_269 : f32 to vector<8x1xf32>
      %365 = arith.divf %363, %364 : vector<8x1xf32>
      %366 = vector.broadcast %365 : vector<8x1xf32> to vector<8x32xf32>
      %367 = arith.subf %359, %366 : vector<8x32xf32>
      %368 = arith.mulf %367, %367 : vector<8x32xf32>
      %cst_270 = arith.constant dense<0.000000e+00> : vector<8xf32>
      %369 = vector.multi_reduction <add>, %368, %cst_270 [1] : vector<8x32xf32> to vector<8xf32>
      %370 = vector.shape_cast %369 : vector<8xf32> to vector<8x1xf32>
      %cst_271 = arith.constant 3.200000e+01 : f32
      %371 = vector.broadcast %cst_271 : f32 to vector<8x1xf32>
      %372 = arith.divf %370, %371 : vector<8x1xf32>
      %373 = vector.broadcast %365 : vector<8x1xf32> to vector<8x32xf32>
      %374 = arith.subf %359, %373 : vector<8x32xf32>
      %cst_272 = arith.constant 9.99999974E-6 : f32
      %375 = vector.broadcast %cst_272 : f32 to vector<8x1xf32>
      %376 = arith.addf %372, %375 : vector<8x1xf32>
      %377 = math.rsqrt %376 : vector<8x1xf32>
      %378 = vector.broadcast %377 : vector<8x1xf32> to vector<8x32xf32>
      %379 = arith.mulf %374, %378 : vector<8x32xf32>
      %380 = vector.broadcast %360 : vector<1x32xf32> to vector<8x32xf32>
      %381 = arith.mulf %379, %380 : vector<8x32xf32>
      %382 = vector.broadcast %361 : vector<1x32xf32> to vector<8x32xf32>
      %383 = arith.addf %381, %382 : vector<8x32xf32>
      %c0_273 = arith.constant 0 : index
      %c0_274 = arith.constant 0 : index
      %c0_275 = arith.constant 0 : index
      %384 = vector.load %arg31[%c0_273, %c0_274, %c0_275] : memref<1x8x32xf32, #tpu.memory_space<vmem>>, vector<1x8x32xf32>
      %385 = vector.shape_cast %384 : vector<1x8x32xf32> to vector<8x32xf32>
      %386 = vector.shape_cast %383 : vector<8x32xf32> to vector<1x8x32xf32>
      tpu.vector_store %arg31[%c0_273, %c0_274, %c0_275], %386 {strides = array<i32>} : memref<1x8x32xf32, #tpu.memory_space<vmem>>, vector<1x8x32xf32>,
    } else {
    }
    %c0_3 = arith.constant 0 : index
    %c0_4 = arith.constant 0 : index
    %c0_5 = arith.constant 0 : index
    %5 = vector.load %arg5[%c0_3, %c0_4, %c0_5] : memref<1x8x32xf32, #tpu.memory_space<vmem>>, vector<1x8x32xf32>
    %6 = vector.shape_cast %5 : vector<1x8x32xf32> to vector<8x32xf32>
    %7 = arith.truncf %6 : vector<8x32xf32> to vector<8x32xbf16>
    %c0_6 = arith.constant 0 : index
    %c0_7 = arith.constant 0 : index
    %c0_8 = arith.constant 0 : index
    %8 = vector.load %arg6[%c0_6, %c0_7, %c0_8] : memref<4x32x8xbf16, #tpu.memory_space<vmem>>, vector<1x32x8xbf16>
    %9 = vector.shape_cast %8 : vector<1x32x8xbf16> to vector<32x8xbf16>
    %cst = arith.constant dense<0.000000e+00> : vector<8x8xf32>
    %10 = tpu.matmul %7, %9, %cst {dimension_numbers = #tpu.dot_dimension_numbers<[1], [0], [0], [1], [0, 0, 1, 1], [], []>} : vector<8x32xbf16>, vector<32x8xbf16>, vector<8x8xf32> -> vector<8x8xf32>
    %c0_9 = arith.constant 0 : index
    %c0_10 = arith.constant 0 : index
    %c0_11 = arith.constant 0 : index
    %11 = vector.load %arg7[%c0_9, %c0_10, %c0_11] : memref<4x1x8xf32, #tpu.memory_space<vmem>>, vector<1x1x8xf32>
    %12 = vector.shape_cast %11 : vector<1x1x8xf32> to vector<1x8xf32>
    %13 = vector.broadcast %12 : vector<1x8xf32> to vector<8x8xf32>
    %14 = arith.addf %10, %13 : vector<8x8xf32>
    %15 = arith.truncf %14 : vector<8x8xf32> to vector<8x8xbf16>
    %c0_12 = arith.constant 0 : index
    %c0_13 = arith.constant 0 : index
    %c0_14 = arith.constant 0 : index
    %16 = vector.load %arg34[%c0_12, %c0_13, %c0_14] : memref<4x8x8xbf16, #tpu.memory_space<vmem>>, vector<1x8x8xbf16>
    %17 = vector.shape_cast %16 : vector<1x8x8xbf16> to vector<8x8xbf16>
    %18 = vector.shape_cast %15 : vector<8x8xbf16> to vector<1x8x8xbf16>
    tpu.vector_store %arg34[%c0_12, %c0_13, %c0_14], %18 {strides = array<i32>} : memref<4x8x8xbf16, #tpu.memory_space<vmem>>, vector<1x8x8xbf16>,
    %c1 = arith.constant 1 : index
    %c0_15 = arith.constant 0 : index
    %c0_16 = arith.constant 0 : index
    %19 = vector.load %arg6[%c1, %c0_15, %c0_16] : memref<4x32x8xbf16, #tpu.memory_space<vmem>>, vector<1x32x8xbf16>
    %20 = vector.shape_cast %19 : vector<1x32x8xbf16> to vector<32x8xbf16>
    %cst_17 = arith.constant dense<0.000000e+00> : vector<8x8xf32>
    %21 = tpu.matmul %7, %20, %cst_17 {dimension_numbers = #tpu.dot_dimension_numbers<[1], [0], [0], [1], [0, 0, 1, 1], [], []>} : vector<8x32xbf16>, vector<32x8xbf16>, vector<8x8xf32> -> vector<8x8xf32>
    %c1_18 = arith.constant 1 : index
    %c0_19 = arith.constant 0 : index
    %c0_20 = arith.constant 0 : index
    %22 = vector.load %arg7[%c1_18, %c0_19, %c0_20] : memref<4x1x8xf32, #tpu.memory_space<vmem>>, vector<1x1x8xf32>
    %23 = vector.shape_cast %22 : vector<1x1x8xf32> to vector<1x8xf32>
    %24 = vector.broadcast %23 : vector<1x8xf32> to vector<8x8xf32>
    %25 = arith.addf %21, %24 : vector<8x8xf32>
    %26 = arith.truncf %25 : vector<8x8xf32> to vector<8x8xbf16>
    %c1_21 = arith.constant 1 : index
    %c0_22 = arith.constant 0 : index
    %c0_23 = arith.constant 0 : index
    %27 = vector.load %arg34[%c1_21, %c0_22, %c0_23] : memref<4x8x8xbf16, #tpu.memory_space<vmem>>, vector<1x8x8xbf16>
    %28 = vector.shape_cast %27 : vector<1x8x8xbf16> to vector<8x8xbf16>
    %29 = vector.shape_cast %26 : vector<8x8xbf16> to vector<1x8x8xbf16>
    tpu.vector_store %arg34[%c1_21, %c0_22, %c0_23], %29 {strides = array<i32>} : memref<4x8x8xbf16, #tpu.memory_space<vmem>>, vector<1x8x8xbf16>,
    %c2 = arith.constant 2 : index
    %c0_24 = arith.constant 0 : index
    %c0_25 = arith.constant 0 : index
    %30 = vector.load %arg6[%c2, %c0_24, %c0_25] : memref<4x32x8xbf16, #tpu.memory_space<vmem>>, vector<1x32x8xbf16>
    %31 = vector.shape_cast %30 : vector<1x32x8xbf16> to vector<32x8xbf16>
    %cst_26 = arith.constant dense<0.000000e+00> : vector<8x8xf32>
    %32 = tpu.matmul %7, %31, %cst_26 {dimension_numbers = #tpu.dot_dimension_numbers<[1], [0], [0], [1], [0, 0, 1, 1], [], []>} : vector<8x32xbf16>, vector<32x8xbf16>, vector<8x8xf32> -> vector<8x8xf32>
    %c2_27 = arith.constant 2 : index
    %c0_28 = arith.constant 0 : index
    %c0_29 = arith.constant 0 : index
    %33 = vector.load %arg7[%c2_27, %c0_28, %c0_29] : memref<4x1x8xf32, #tpu.memory_space<vmem>>, vector<1x1x8xf32>
    %34 = vector.shape_cast %33 : vector<1x1x8xf32> to vector<1x8xf32>
    %35 = vector.broadcast %34 : vector<1x8xf32> to vector<8x8xf32>
    %36 = arith.addf %32, %35 : vector<8x8xf32>
    %37 = arith.truncf %36 : vector<8x8xf32> to vector<8x8xbf16>
    %c2_30 = arith.constant 2 : index
    %c0_31 = arith.constant 0 : index
    %c0_32 = arith.constant 0 : index
    %38 = vector.load %arg34[%c2_30, %c0_31, %c0_32] : memref<4x8x8xbf16, #tpu.memory_space<vmem>>, vector<1x8x8xbf16>
    %39 = vector.shape_cast %38 : vector<1x8x8xbf16> to vector<8x8xbf16>
    %40 = vector.shape_cast %37 : vector<8x8xbf16> to vector<1x8x8xbf16>
    tpu.vector_store %arg34[%c2_30, %c0_31, %c0_32], %40 {strides = array<i32>} : memref<4x8x8xbf16, #tpu.memory_space<vmem>>, vector<1x8x8xbf16>,
    %c3 = arith.constant 3 : index
    %c0_33 = arith.constant 0 : index
    %c0_34 = arith.constant 0 : index
    %41 = vector.load %arg6[%c3, %c0_33, %c0_34] : memref<4x32x8xbf16, #tpu.memory_space<vmem>>, vector<1x32x8xbf16>
    %42 = vector.shape_cast %41 : vector<1x32x8xbf16> to vector<32x8xbf16>
    %cst_35 = arith.constant dense<0.000000e+00> : vector<8x8xf32>
    %43 = tpu.matmul %7, %42, %cst_35 {dimension_numbers = #tpu.dot_dimension_numbers<[1], [0], [0], [1], [0, 0, 1, 1], [], []>} : vector<8x32xbf16>, vector<32x8xbf16>, vector<8x8xf32> -> vector<8x8xf32>
    %c3_36 = arith.constant 3 : index
    %c0_37 = arith.constant 0 : index
    %c0_38 = arith.constant 0 : index
    %44 = vector.load %arg7[%c3_36, %c0_37, %c0_38] : memref<4x1x8xf32, #tpu.memory_space<vmem>>, vector<1x1x8xf32>
    %45 = vector.shape_cast %44 : vector<1x1x8xf32> to vector<1x8xf32>
    %46 = vector.broadcast %45 : vector<1x8xf32> to vector<8x8xf32>
    %47 = arith.addf %43, %46 : vector<8x8xf32>
    %48 = arith.truncf %47 : vector<8x8xf32> to vector<8x8xbf16>
    %c3_39 = arith.constant 3 : index
    %c0_40 = arith.constant 0 : index
    %c0_41 = arith.constant 0 : index
    %49 = vector.load %arg34[%c3_39, %c0_40, %c0_41] : memref<4x8x8xbf16, #tpu.memory_space<vmem>>, vector<1x8x8xbf16>
    %50 = vector.shape_cast %49 : vector<1x8x8xbf16> to vector<8x8xbf16>
    %51 = vector.shape_cast %48 : vector<8x8xbf16> to vector<1x8x8xbf16>
    tpu.vector_store %arg34[%c3_39, %c0_40, %c0_41], %51 {strides = array<i32>} : memref<4x8x8xbf16, #tpu.memory_space<vmem>>, vector<1x8x8xbf16>,
    %c0_42 = arith.constant 0 : index
    %c0_43 = arith.constant 0 : index
    %c0_44 = arith.constant 0 : index
    %52 = vector.load %arg34[%c0_42, %c0_43, %c0_44] : memref<4x8x8xbf16, #tpu.memory_space<vmem>>, vector<4x8x8xbf16>
    %c0_45 = arith.constant 0 : index
    %c0_46 = arith.constant 0 : index
    %c0_47 = arith.constant 0 : index
    %53 = vector.load %arg32[%c0_45, %c0_46, %c0_47] : memref<4x24x8xbf16, #tpu.memory_space<vmem>>, vector<4x24x8xbf16>
    "tpu.trace_start"() <{level = 10 : i32, message = "hqd,hkd->hqk"}> : () -> ()
    %cst_48 = arith.constant dense<0.000000e+00> : vector<4x8x24xf32>
    %54 = tpu.matmul %52, %53, %cst_48 {dimension_numbers = #tpu.dot_dimension_numbers<[2], [2], [1], [1], [0, 0, 0, 1, 1, 1], [0], [0]>} : vector<4x8x8xbf16>, vector<4x24x8xbf16>, vector<4x8x24xf32> -> vector<4x8x24xf32>
    "tpu.trace_stop"() : () -> ()
    %55 = vector.shape_cast %1 : vector<1x24xf32> to vector<1x1x24xf32>
    %56 = vector.broadcast %55 : vector<1x1x24xf32> to vector<4x8x24xf32>
    %57 = arith.addf %54, %56 : vector<4x8x24xf32>
    %cst_49 = arith.constant dense<0xFF800000> : vector<4x8xf32>
    %58 = vector.multi_reduction <maximumf>, %57, %cst_49 [2] : vector<4x8x24xf32> to vector<4x8xf32>
    %59 = vector.shape_cast %58 : vector<4x8xf32> to vector<4x8x1xf32>
    %60 = vector.broadcast %59 : vector<4x8x1xf32> to vector<4x8x24xf32>
    %61 = arith.subf %57, %60 : vector<4x8x24xf32>
    %62 = math.exp %61 : vector<4x8x24xf32>
    %cst_50 = arith.constant dense<0.000000e+00> : vector<4x8xf32>
    %63 = vector.multi_reduction <add>, %62, %cst_50 [2] : vector<4x8x24xf32> to vector<4x8xf32>
    %64 = vector.shape_cast %63 : vector<4x8xf32> to vector<4x8x1xf32>
    %65 = tpu.reciprocal %64 {approx = true} : vector<4x8x1xf32> -> vector<4x8x1xf32>
    %66 = vector.broadcast %65 : vector<4x8x1xf32> to vector<4x8x24xf32>
    %67 = arith.mulf %62, %66 : vector<4x8x24xf32>
    %68 = arith.truncf %67 : vector<4x8x24xf32> to vector<4x8x24xbf16>
    %c0_51 = arith.constant 0 : index
    %c0_52 = arith.constant 0 : index
    %c0_53 = arith.constant 0 : index
    %69 = vector.load %arg33[%c0_51, %c0_52, %c0_53] : memref<4x24x8xbf16, #tpu.memory_space<vmem>>, vector<4x24x8xbf16>
    "tpu.trace_start"() <{level = 10 : i32, message = "hqk,hkd->hqd"}> : () -> ()
    %cst_54 = arith.constant dense<0.000000e+00> : vector<4x8x8xf32>
    %70 = tpu.matmul %68, %69, %cst_54 {dimension_numbers = #tpu.dot_dimension_numbers<[2], [1], [1], [2], [0, 0, 0, 1, 1, 2], [0], [0]>} : vector<4x8x24xbf16>, vector<4x24x8xbf16>, vector<4x8x8xf32> -> vector<4x8x8xf32>
    "tpu.trace_stop"() : () -> ()
    %71 = arith.truncf %70 : vector<4x8x8xf32> to vector<4x8x8xbf16>
    %c0_55 = arith.constant 0 : index
    %c0_56 = arith.constant 0 : index
    %c0_57 = arith.constant 0 : index
    %72 = vector.load %arg12[%c0_55, %c0_56, %c0_57] : memref<4x8x32xbf16, #tpu.memory_space<vmem>>, vector<4x8x32xbf16>
    "tpu.trace_start"() <{level = 10 : i32, message = "hqd,hdo->hqo"}> : () -> ()
    %cst_58 = arith.constant dense<0.000000e+00> : vector<4x8x32xf32>
    %73 = tpu.matmul %71, %72, %cst_58 {dimension_numbers = #tpu.dot_dimension_numbers<[2], [1], [1], [2], [0, 0, 0, 1, 1, 2], [0], [0]>} : vector<4x8x8xbf16>, vector<4x8x32xbf16>, vector<4x8x32xf32> -> vector<4x8x32xf32>
    "tpu.trace_stop"() : () -> ()
    %cst_59 = arith.constant dense<0.000000e+00> : vector<8x32xf32>
    %74 = vector.multi_reduction <add>, %73, %cst_59 [0] : vector<4x8x32xf32> to vector<8x32xf32>
    %c0_60 = arith.constant 0 : index
    %c0_61 = arith.constant 0 : index
    %75 = vector.load %arg13[%c0_60, %c0_61] : memref<1x32xf32, #tpu.memory_space<vmem>>, vector<1x32xf32>
    %76 = vector.broadcast %75 : vector<1x32xf32> to vector<8x32xf32>
    %77 = arith.addf %74, %76 : vector<8x32xf32>
    %78 = arith.addf %6, %77 : vector<8x32xf32>
    %c0_62 = arith.constant 0 : index
    %c0_63 = arith.constant 0 : index
    %79 = vector.load %arg14[%c0_62, %c0_63] : memref<1x32xf32, #tpu.memory_space<vmem>>, vector<1x32xf32>
    %c0_64 = arith.constant 0 : index
    %c0_65 = arith.constant 0 : index
    %80 = vector.load %arg15[%c0_64, %c0_65] : memref<1x32xf32, #tpu.memory_space<vmem>>, vector<1x32xf32>
    %cst_66 = arith.constant dense<0.000000e+00> : vector<8xf32>
    %81 = vector.multi_reduction <add>, %78, %cst_66 [1] : vector<8x32xf32> to vector<8xf32>
    %82 = vector.shape_cast %81 : vector<8xf32> to vector<8x1xf32>
    %cst_67 = arith.constant 3.200000e+01 : f32
    %83 = vector.broadcast %cst_67 : f32 to vector<8x1xf32>
    %84 = arith.divf %82, %83 : vector<8x1xf32>
    %85 = vector.broadcast %84 : vector<8x1xf32> to vector<8x32xf32>
    %86 = arith.subf %78, %85 : vector<8x32xf32>
    %87 = arith.mulf %86, %86 : vector<8x32xf32>
    %cst_68 = arith.constant dense<0.000000e+00> : vector<8xf32>
    %88 = vector.multi_reduction <add>, %87, %cst_68 [1] : vector<8x32xf32> to vector<8xf32>
    %89 = vector.shape_cast %88 : vector<8xf32> to vector<8x1xf32>
    %cst_69 = arith.constant 3.200000e+01 : f32
    %90 = vector.broadcast %cst_69 : f32 to vector<8x1xf32>
    %91 = arith.divf %89, %90 : vector<8x1xf32>
    %92 = vector.broadcast %84 : vector<8x1xf32> to vector<8x32xf32>
    %93 = arith.subf %78, %92 : vector<8x32xf32>
    %cst_70 = arith.constant 9.99999974E-6 : f32
    %94 = vector.broadcast %cst_70 : f32 to vector<8x1xf32>
    %95 = arith.addf %91, %94 : vector<8x1xf32>
    %96 = math.rsqrt %95 : vector<8x1xf32>
    %97 = vector.broadcast %96 : vector<8x1xf32> to vector<8x32xf32>
    %98 = arith.mulf %93, %97 : vector<8x32xf32>
    %99 = vector.broadcast %79 : vector<1x32xf32> to vector<8x32xf32>
    %100 = arith.mulf %98, %99 : vector<8x32xf32>
    %101 = vector.broadcast %80 : vector<1x32xf32> to vector<8x32xf32>
    %102 = arith.addf %100, %101 : vector<8x32xf32>
    %103 = arith.truncf %102 : vector<8x32xf32> to vector<8x32xbf16>
    %c0_71 = arith.constant 0 : index
    %c0_72 = arith.constant 0 : index
    %104 = vector.load %arg16[%c0_71, %c0_72] : memref<32x64xbf16, #tpu.memory_space<vmem>>, vector<32x64xbf16>
    %cst_73 = arith.constant dense<0.000000e+00> : vector<8x64xf32>
    %105 = tpu.matmul %103, %104, %cst_73 {dimension_numbers = #tpu.dot_dimension_numbers<[1], [0], [0], [1], [0, 0, 1, 1], [], []>} : vector<8x32xbf16>, vector<32x64xbf16>, vector<8x64xf32> -> vector<8x64xf32>
    %c0_74 = arith.constant 0 : index
    %c0_75 = arith.constant 0 : index
    %106 = vector.load %arg17[%c0_74, %c0_75] : memref<1x64xf32, #tpu.memory_space<vmem>>, vector<1x64xf32>
    %107 = vector.broadcast %106 : vector<1x64xf32> to vector<8x64xf32>
    %108 = arith.addf %105, %107 : vector<8x64xf32>
    %cst_76 = arith.constant 5.000000e-01 : f32
    %109 = vector.broadcast %cst_76 : f32 to vector<8x64xf32>
    %110 = arith.mulf %109, %108 : vector<8x64xf32>
    %cst_77 = arith.constant 0.707106769 : f32
    %111 = vector.broadcast %cst_77 : f32 to vector<8x64xf32>
    %112 = arith.mulf %108, %111 : vector<8x64xf32>
    %113 = math.erf %112 : vector<8x64xf32>
    %cst_78 = arith.constant 1.000000e+00 : f32
    %114 = vector.broadcast %cst_78 : f32 to vector<8x64xf32>
    %115 = arith.addf %114, %113 : vector<8x64xf32>
    %116 = arith.mulf %110, %115 : vector<8x64xf32>
    %117 = arith.truncf %116 : vector<8x64xf32> to vector<8x64xbf16>
    %c0_79 = arith.constant 0 : index
    %c0_80 = arith.constant 0 : index
    %118 = vector.load %arg18[%c0_79, %c0_80] : memref<64x32xbf16, #tpu.memory_space<vmem>>, vector<64x32xbf16>
    %cst_81 = arith.constant dense<0.000000e+00> : vector<8x32xf32>
    %119 = tpu.matmul %117, %118, %cst_81 {dimension_numbers = #tpu.dot_dimension_numbers<[1], [0], [0], [1], [0, 0, 1, 1], [], []>} : vector<8x64xbf16>, vector<64x32xbf16>, vector<8x32xf32> -> vector<8x32xf32>
    %c0_82 = arith.constant 0 : index
    %c0_83 = arith.constant 0 : index
    %120 = vector.load %arg19[%c0_82, %c0_83] : memref<1x32xf32, #tpu.memory_space<vmem>>, vector<1x32xf32>
    %121 = vector.broadcast %120 : vector<1x32xf32> to vector<8x32xf32>
    %122 = arith.addf %119, %121 : vector<8x32xf32>
    %123 = arith.addf %102, %122 : vector<8x32xf32>
    %c0_84 = arith.constant 0 : index
    %c0_85 = arith.constant 0 : index
    %124 = vector.load %arg20[%c0_84, %c0_85] : memref<1x32xf32, #tpu.memory_space<vmem>>, vector<1x32xf32>
    %c0_86 = arith.constant 0 : index
    %c0_87 = arith.constant 0 : index
    %125 = vector.load %arg21[%c0_86, %c0_87] : memref<1x32xf32, #tpu.memory_space<vmem>>, vector<1x32xf32>
    %cst_88 = arith.constant dense<0.000000e+00> : vector<8xf32>
    %126 = vector.multi_reduction <add>, %123, %cst_88 [1] : vector<8x32xf32> to vector<8xf32>
    %127 = vector.shape_cast %126 : vector<8xf32> to vector<8x1xf32>
    %cst_89 = arith.constant 3.200000e+01 : f32
    %128 = vector.broadcast %cst_89 : f32 to vector<8x1xf32>
    %129 = arith.divf %127, %128 : vector<8x1xf32>
    %130 = vector.broadcast %129 : vector<8x1xf32> to vector<8x32xf32>
    %131 = arith.subf %123, %130 : vector<8x32xf32>
    %132 = arith.mulf %131, %131 : vector<8x32xf32>
    %cst_90 = arith.constant dense<0.000000e+00> : vector<8xf32>
    %133 = vector.multi_reduction <add>, %132, %cst_90 [1] : vector<8x32xf32> to vector<8xf32>
    %134 = vector.shape_cast %133 : vector<8xf32> to vector<8x1xf32>
    %cst_91 = arith.constant 3.200000e+01 : f32
    %135 = vector.broadcast %cst_91 : f32 to vector<8x1xf32>
    %136 = arith.divf %134, %135 : vector<8x1xf32>
    %137 = vector.broadcast %129 : vector<8x1xf32> to vector<8x32xf32>
    %138 = arith.subf %123, %137 : vector<8x32xf32>
    %cst_92 = arith.constant 9.99999974E-6 : f32
    %139 = vector.broadcast %cst_92 : f32 to vector<8x1xf32>
    %140 = arith.addf %136, %139 : vector<8x1xf32>
    %141 = math.rsqrt %140 : vector<8x1xf32>
    %142 = vector.broadcast %141 : vector<8x1xf32> to vector<8x32xf32>
    %143 = arith.mulf %138, %142 : vector<8x32xf32>
    %144 = vector.broadcast %124 : vector<1x32xf32> to vector<8x32xf32>
    %145 = arith.mulf %143, %144 : vector<8x32xf32>
    %146 = vector.broadcast %125 : vector<1x32xf32> to vector<8x32xf32>
    %147 = arith.addf %145, %146 : vector<8x32xf32>
    %c0_93 = arith.constant 0 : index
    %c0_94 = arith.constant 0 : index
    %c0_95 = arith.constant 0 : index
    %148 = vector.load %arg30[%c0_93, %c0_94, %c0_95] : memref<1x8x32xf32, #tpu.memory_space<vmem>>, vector<1x8x32xf32>
    %149 = vector.shape_cast %148 : vector<1x8x32xf32> to vector<8x32xf32>
    %150 = vector.shape_cast %147 : vector<8x32xf32> to vector<1x8x32xf32>
    tpu.vector_store %arg30[%c0_93, %c0_94, %c0_95], %150 {strides = array<i32>} : memref<1x8x32xf32, #tpu.memory_space<vmem>>, vector<1x8x32xf32>,
    return
  }
  func.func @transform_0(%arg0: i32, %arg1: i32) -> (i32, i32, i32) {
    %c0_i32 = arith.constant 0 : i32
    %c0_i32_0 = arith.constant 0 : i32
    %c0_i32_1 = arith.constant 0 : i32
    return %arg0, %c0_i32, %c0_i32_0 : i32, i32, i32
  }
  func.func @transform_1(%arg0: i32, %arg1: i32) -> (i32, i32, i32) {
    %c0_i32 = arith.constant 0 : i32
    %c0_i32_0 = arith.constant 0 : i32
    %c0_i32_1 = arith.constant 0 : i32
    return %arg0, %c0_i32, %c0_i32_0 : i32, i32, i32
  }
  func.func @transform_2(%arg0: i32, %arg1: i32) -> (i32, i32, i32) {
    %c0_i32 = arith.constant 0 : i32
    %c0_i32_0 = arith.constant 0 : i32
    %c0_i32_1 = arith.constant 0 : i32
    return %arg0, %c0_i32, %c0_i32_0 : i32, i32, i32
  }
  func.func @transform_3(%arg0: i32, %arg1: i32) -> (i32, i32, i32) {
    %c0_i32 = arith.constant 0 : i32
    %c0_i32_0 = arith.constant 0 : i32
    return %arg0, %arg1, %c0_i32 : i32, i32, i32
  }
  func.func @transform_4(%arg0: i32, %arg1: i32) -> (i32, i32, i32) {
    %c0_i32 = arith.constant 0 : i32
    %c0_i32_0 = arith.constant 0 : i32
    %c0_i32_1 = arith.constant 0 : i32
    %c0_i32_2 = arith.constant 0 : i32
    return %c0_i32, %c0_i32_0, %c0_i32_1 : i32, i32, i32
  }
  func.func @transform_5(%arg0: i32, %arg1: i32) -> (i32, i32, i32) {
    %c0_i32 = arith.constant 0 : i32
    %c0_i32_0 = arith.constant 0 : i32
    %c0_i32_1 = arith.constant 0 : i32
    %c0_i32_2 = arith.constant 0 : i32
    return %c0_i32, %c0_i32_0, %c0_i32_1 : i32, i32, i32
  }
  func.func @transform_6(%arg0: i32, %arg1: i32) -> (i32, i32, i32) {
    %c0_i32 = arith.constant 0 : i32
    %c0_i32_0 = arith.constant 0 : i32
    %c0_i32_1 = arith.constant 0 : i32
    %c0_i32_2 = arith.constant 0 : i32
    return %c0_i32, %c0_i32_0, %c0_i32_1 : i32, i32, i32
  }
  func.func @transform_7(%arg0: i32, %arg1: i32) -> (i32, i32, i32) {
    %c0_i32 = arith.constant 0 : i32
    %c0_i32_0 = arith.constant 0 : i32
    %c0_i32_1 = arith.constant 0 : i32
    %c0_i32_2 = arith.constant 0 : i32
    return %c0_i32, %c0_i32_0, %c0_i32_1 : i32, i32, i32
  }
  func.func @transform_8(%arg0: i32, %arg1: i32) -> (i32, i32, i32) {
    %c0_i32 = arith.constant 0 : i32
    %c0_i32_0 = arith.constant 0 : i32
    %c0_i32_1 = arith.constant 0 : i32
    %c0_i32_2 = arith.constant 0 : i32
    return %c0_i32, %c0_i32_0, %c0_i32_1 : i32, i32, i32
  }
  func.func @transform_9(%arg0: i32, %arg1: i32) -> (i32, i32, i32) {
    %c0_i32 = arith.constant 0 : i32
    %c0_i32_0 = arith.constant 0 : i32
    %c0_i32_1 = arith.constant 0 : i32
    %c0_i32_2 = arith.constant 0 : i32
    return %c0_i32, %c0_i32_0, %c0_i32_1 : i32, i32, i32
  }
  func.func @transform_10(%arg0: i32, %arg1: i32) -> (i32, i32, i32) {
    %c0_i32 = arith.constant 0 : i32
    %c0_i32_0 = arith.constant 0 : i32
    %c0_i32_1 = arith.constant 0 : i32
    %c0_i32_2 = arith.constant 0 : i32
    return %c0_i32, %c0_i32_0, %c0_i32_1 : i32, i32, i32
  }
  func.func @transform_11(%arg0: i32, %arg1: i32) -> (i32, i32) {
    %c0_i32 = arith.constant 0 : i32
    %c0_i32_0 = arith.constant 0 : i32
    %c0_i32_1 = arith.constant 0 : i32
    return %c0_i32, %c0_i32_0 : i32, i32
  }
  func.func @transform_12(%arg0: i32, %arg1: i32) -> (i32, i32) {
    %c0_i32 = arith.constant 0 : i32
    %c0_i32_0 = arith.constant 0 : i32
    %c0_i32_1 = arith.constant 0 : i32
    return %c0_i32, %c0_i32_0 : i32, i32
  }
  func.func @transform_13(%arg0: i32, %arg1: i32) -> (i32, i32) {
    %c0_i32 = arith.constant 0 : i32
    %c0_i32_0 = arith.constant 0 : i32
    %c0_i32_1 = arith.constant 0 : i32
    return %c0_i32, %c0_i32_0 : i32, i32
  }
  func.func @transform_14(%arg0: i32, %arg1: i32) -> (i32, i32) {
    %c0_i32 = arith.constant 0 : i32
    %c0_i32_0 = arith.constant 0 : i32
    %c0_i32_1 = arith.constant 0 : i32
    return %c0_i32, %c0_i32_0 : i32, i32
  }
  func.func @transform_15(%arg0: i32, %arg1: i32) -> (i32, i32) {
    %c0_i32 = arith.constant 0 : i32
    %c0_i32_0 = arith.constant 0 : i32
    %c0_i32_1 = arith.constant 0 : i32
    return %c0_i32, %c0_i32_0 : i32, i32
  }
  func.func @transform_16(%arg0: i32, %arg1: i32) -> (i32, i32) {
    %c0_i32 = arith.constant 0 : i32
    %c0_i32_0 = arith.constant 0 : i32
    %c0_i32_1 = arith.constant 0 : i32
    return %c0_i32, %c0_i32_0 : i32, i32
  }
  func.func @transform_17(%arg0: i32, %arg1: i32) -> (i32, i32) {
    %c0_i32 = arith.constant 0 : i32
    %c0_i32_0 = arith.constant 0 : i32
    %c0_i32_1 = arith.constant 0 : i32
    return %c0_i32, %c0_i32_0 : i32, i32
  }
  func.func @transform_18(%arg0: i32, %arg1: i32) -> (i32, i32) {
    %c0_i32 = arith.constant 0 : i32
    %c0_i32_0 = arith.constant 0 : i32
    %c0_i32_1 = arith.constant 0 : i32
    return %c0_i32, %c0_i32_0 : i32, i32
  }
  func.func @transform_19(%arg0: i32, %arg1: i32) -> (i32, i32) {
    %c0_i32 = arith.constant 0 : i32
    %c0_i32_0 = arith.constant 0 : i32
    %c0_i32_1 = arith.constant 0 : i32
    return %c0_i32, %c0_i32_0 : i32, i32
  }
  func.func @transform_20(%arg0: i32, %arg1: i32) -> (i32, i32) {
    %c0_i32 = arith.constant 0 : i32
    %c0_i32_0 = arith.constant 0 : i32
    %c0_i32_1 = arith.constant 0 : i32
    return %c0_i32, %c0_i32_0 : i32, i32
  }
  func.func @transform_21(%arg0: i32, %arg1: i32) -> (i32, i32) {
    %c0_i32 = arith.constant 0 : i32
    %c0_i32_0 = arith.constant 0 : i32
    %c0_i32_1 = arith.constant 0 : i32
    return %c0_i32, %c0_i32_0 : i32, i32
  }
  func.func @transform_22(%arg0: i32, %arg1: i32) -> (i32, i32) {
    %c0_i32 = arith.constant 0 : i32
    %c0_i32_0 = arith.constant 0 : i32
    %c0_i32_1 = arith.constant 0 : i32
    return %c0_i32, %c0_i32_0 : i32, i32
  }
  func.func @transform_23(%arg0: i32, %arg1: i32) -> (i32, i32) {
    %c0_i32 = arith.constant 0 : i32
    %c0_i32_0 = arith.constant 0 : i32
    %c0_i32_1 = arith.constant 0 : i32
    return %c0_i32, %c0_i32_0 : i32, i32
  }
  func.func @transform_24(%arg0: i32, %arg1: i32) -> (i32, i32) {
    %c0_i32 = arith.constant 0 : i32
    %c0_i32_0 = arith.constant 0 : i32
    %c0_i32_1 = arith.constant 0 : i32
    return %c0_i32, %c0_i32_0 : i32, i32
  }
  func.func @transform_25(%arg0: i32, %arg1: i32) -> (i32, i32) {
    %c0_i32 = arith.constant 0 : i32
    %c0_i32_0 = arith.constant 0 : i32
    %c0_i32_1 = arith.constant 0 : i32
    return %c0_i32, %c0_i32_0 : i32, i32
  }
  func.func @transform_26(%arg0: i32, %arg1: i32) -> (i32, i32) {
    %c0_i32 = arith.constant 0 : i32
    %c0_i32_0 = arith.constant 0 : i32
    %c0_i32_1 = arith.constant 0 : i32
    return %c0_i32, %c0_i32_0 : i32, i32
  }
  func.func @transform_27(%arg0: i32, %arg1: i32) -> (i32, i32) {
    %c0_i32 = arith.constant 0 : i32
    %c0_i32_0 = arith.constant 0 : i32
    %c0_i32_1 = arith.constant 0 : i32
    return %c0_i32, %c0_i32_0 : i32, i32
  }
  func.func @transform_28(%arg0: i32, %arg1: i32) -> (i32, i32, i32) {
    %c0_i32 = arith.constant 0 : i32
    %c0_i32_0 = arith.constant 0 : i32
    return %arg0, %arg1, %c0_i32 : i32, i32, i32
  }
  func.func @transform_29(%arg0: i32, %arg1: i32) -> (i32, i32, i32) {
    %c0_i32 = arith.constant 0 : i32
    %c0_i32_0 = arith.constant 0 : i32
    %c0_i32_1 = arith.constant 0 : i32
    return %arg0, %c0_i32, %c0_i32_0 : i32, i32, i32
  }
}

</mosaic_0001>

<llo_original>
// kernel: tpu_custom_call.1
$region0: #{tpu_custom_call.1}
  #allocation0 [shape = 'u32[]', space=smem, size = 0x4, offset = 0x4, fixed_abs, tag = 'smem constant byte address 0x4 - core index']
  #allocation1 [shape = 'u32[144,128]{1,0:T(1,128)}', space=vmem, size = 0x12000, scoped, tag = 'internal scratch']
  #allocation2 [shape = 'bf16[4,24,8]{2,1,0:T(8,128)(2,1)}', space=vmem, size = 0x6000, scoped, tag = 'scratch operand']
  #allocation3 [shape = 'bf16[4,24,8]{2,1,0:T(8,128)(2,1)}', space=vmem, size = 0x6000, scoped, tag = 'scratch operand']
  #allocation4 [shape = 'bf16[4,8,8]{2,1,0:T(8,128)(2,1)}', space=vmem, size = 0x2000, scoped, tag = 'scratch operand']
  #allocation5 [shape = 'bf16[4,8,8]{2,1,0:T(8,128)(2,1)}', space=vmem, size = 0x2000, scoped, tag = 'scratch operand']
  %s0 = inlined_call_operand.smem [shape: u32[30], index: -1, kind: input, shape index: {}]
  %s1 = sld [smem:[%s0]]
  %s2 = scalar_lea.smem %s0, 1
  %s3 = sld [smem:[%s2]]
  %s4 = scalar_lea.smem %s0, 2
  %s5 = sld [smem:[%s4]]
  %s6 = scalar_lea.smem %s0, 3
  %s7 = sld [smem:[%s6]]
  %s8 = scalar_lea.smem %s0, 4
  %s9 = sld [smem:[%s8]]
  %s10 = scalar_lea.smem %s0, 5
  %s11 = sld [smem:[%s10]]
  %s12 = scalar_lea.smem %s0, 6
  %s13 = sld [smem:[%s12]]
  %s14 = scalar_lea.smem %s0, 7
  %s15 = sld [smem:[%s14]]
  %s16 = scalar_lea.smem %s0, 8
  %s17 = sld [smem:[%s16]]
  %s18 = scalar_lea.smem %s0, 9
  %s19 = sld [smem:[%s18]]
  %s20 = scalar_lea.smem %s0, 10
  %s21 = sld [smem:[%s20]]
  %s22 = scalar_lea.smem %s0, 11
  %s23 = sld [smem:[%s22]]
  %s24 = scalar_lea.smem %s0, 12
  %s25 = sld [smem:[%s24]]
  %s26 = scalar_lea.smem %s0, 13
  %s27 = sld [smem:[%s26]]
  %s28 = scalar_lea.smem %s0, 14
  %s29 = sld [smem:[%s28]]
  %s30 = scalar_lea.smem %s0, 15
  %s31 = sld [smem:[%s30]]
  %s32 = scalar_lea.smem %s0, 16
  %s33 = sld [smem:[%s32]]
  %s34 = scalar_lea.smem %s0, 17
  %s35 = sld [smem:[%s34]]
  %s36 = scalar_lea.smem %s0, 18
  %s37 = sld [smem:[%s36]]
  %s38 = scalar_lea.smem %s0, 19
  %s39 = sld [smem:[%s38]]
  %s40 = scalar_lea.smem %s0, 20
  %s41 = sld [smem:[%s40]]
  %s42 = scalar_lea.smem %s0, 21
  %s43 = sld [smem:[%s42]]
  %s44 = scalar_lea.smem %s0, 22
  %s45 = sld [smem:[%s44]]
  %s46 = scalar_lea.smem %s0, 23
  %s47 = sld [smem:[%s46]]
  %s48 = scalar_lea.smem %s0, 24
  %s49 = sld [smem:[%s48]]
  %s50 = scalar_lea.smem %s0, 25
  %s51 = sld [smem:[%s50]]
  %s52 = scalar_lea.smem %s0, 26
  %s53 = sld [smem:[%s52]]
  %s54 = scalar_lea.smem %s0, 27
  %s55 = sld [smem:[%s54]]
  %s56 = scalar_lea.smem %s0, 28
  %s57 = sld [smem:[%s56]]
  %s58 = scalar_lea.smem %s0, 29
  %s59 = sld [smem:[%s58]]
  %60 = xla_tuple %s57, %s59
  %s61 = sld [smem:[#allocation0]]
  $region157: #{tpu_custom_call.1} parent=0
    _
  %s63 = ssub.s32 1, %s61
  %s64 = scalar_select 0, %s63, %s61
  $region1: #{tpu_custom_call.1} parent=0
    #allocation6 [shape = 'u8[8192]{0}', space=vmem, size = 0x2000, scoped, tag = 'output window, operand 0']
    #allocation7 [shape = 's32[2]{0}', space=sflag, size = 0x8, scoped, tag = 'scoped memory for tpu_custom_call.1']
    #allocation8 [shape = 'u8[8192]{0}', space=vmem, size = 0x2000, scoped, tag = 'output window, operand 1']
    #allocation9 [shape = 's32[2]{0}', space=sflag, size = 0x8, scoped, tag = 'scoped memory for tpu_custom_call.1']
    %65 = vsyncpa [#allocation7], 0
    %s66 = scalar_lea.sflag [#allocation7], 1
    %67 = vsyncpa %s66, 0
    %68 = vsyncpa [#allocation9], 0
    %s69 = scalar_lea.sflag [#allocation9], 1
    %70 = vsyncpa %s69, 0
    loop: start=0, step=1, limit=6
    $region2: #{tpu_custom_call.1} parent=1 // loop_pre_header
      _
    $region3: #{tpu_custom_call.1} parent=1 // loop_header
      %s72 = sphi 0, %s76
      %p73 = scmp.ge.s32.totalorder %s72, 6
      %s79 = sphi 0, %s91
      %s80 = sphi 0, %s87
      %s81 = sphi 0, %s79
      %s82 = sphi 0, %s80
      %s83 = sphi 0, %s81
      %s84 = sphi 0, %s82
      %s94 = sphi 0, %s96
      %s97 = sphi 0, %s94
      %s98 = sphi 0, %s97
      %s114 = sphi 0, %s98
      %s120 = sphi 0, %s122
      %s123 = sphi 0, %s120
      %s124 = sphi 0, %s123
      %s140 = sphi 0, %s124
      %s146 = sphi 0, %s148
      %s149 = sphi 0, %s146
      %s150 = sphi 0, %s149
      %s166 = sphi 0, %s150
      %s174 = sphi 0, %s176
      %s177 = sphi 0, %s174
      %s178 = sphi 0, %s177
      %s194 = sphi 0, %s178
      %s198 = sphi 0, %s198
      %s200 = sphi 0, %s198
      %s201 = sphi 0, %s200
      %s215 = sphi 0, %s201
      %s219 = sphi 0, %s219
      %s221 = sphi 0, %s219
      %s222 = sphi 0, %s221
      %s236 = sphi 0, %s222
      %s240 = sphi 0, %s240
      %s242 = sphi 0, %s240
      %s243 = sphi 0, %s242
      %s257 = sphi 0, %s243
      %s261 = sphi 0, %s261
      %s263 = sphi 0, %s261
      %s264 = sphi 0, %s263
      %s278 = sphi 0, %s264
      %s282 = sphi 0, %s282
      %s284 = sphi 0, %s282
      %s285 = sphi 0, %s284
      %s299 = sphi 0, %s285
      %s303 = sphi 0, %s303
      %s305 = sphi 0, %s303
      %s306 = sphi 0, %s305
      %s320 = sphi 0, %s306
      %s324 = sphi 0, %s324
      %s326 = sphi 0, %s324
      %s327 = sphi 0, %s326
      %s341 = sphi 0, %s327
      %s345 = sphi 0, %s345
      %s347 = sphi 0, %s345
      %s348 = sphi 0, %s347
      %s362 = sphi 0, %s348
      %s366 = sphi 0, %s366
      %s368 = sphi 0, %s366
      %s369 = sphi 0, %s368
      %s383 = sphi 0, %s369
      %s387 = sphi 0, %s387
      %s389 = sphi 0, %s387
      %s390 = sphi 0, %s389
      %s404 = sphi 0, %s390
      %s408 = sphi 0, %s408
      %s410 = sphi 0, %s408
      %s411 = sphi 0, %s410
      %s425 = sphi 0, %s411
      %s429 = sphi 0, %s429
      %s431 = sphi 0, %s429
      %s432 = sphi 0, %s431
      %s446 = sphi 0, %s432
      %s450 = sphi 0, %s450
      %s452 = sphi 0, %s450
      %s453 = sphi 0, %s452
      %s467 = sphi 0, %s453
      %s471 = sphi 0, %s471
      %s473 = sphi 0, %s471
      %s474 = sphi 0, %s473
      %s488 = sphi 0, %s474
      %s492 = sphi 0, %s492
      %s494 = sphi 0, %s492
      %s495 = sphi 0, %s494
      %s509 = sphi 0, %s495
      %s513 = sphi 0, %s513
      %s515 = sphi 0, %s513
      %s516 = sphi 0, %s515
      %s530 = sphi 0, %s516
      %s534 = sphi 0, %s534
      %s536 = sphi 0, %s534
      %s537 = sphi 0, %s536
      %s551 = sphi 0, %s537
      %s555 = sphi 0, %s555
      %s557 = sphi 0, %s555
      %s558 = sphi 0, %s557
      %s572 = sphi 0, %s558
      %s576 = sphi 0, %s576
      %s578 = sphi 0, %s576
      %s579 = sphi 0, %s578
      %s593 = sphi 0, %s579
      %s597 = sphi 0, %s597
      %s599 = sphi 0, %s597
      %s600 = sphi 0, %s599
      %s614 = sphi 0, %s600
      %s618 = sphi 0, %s618
      %s620 = sphi 0, %s618
      %s621 = sphi 0, %s620
      %s635 = sphi 0, %s621
      %s639 = sphi 0, %s639
      %s641 = sphi 0, %s639
      %s642 = sphi 0, %s641
      %s656 = sphi 0, %s642
      %s660 = sphi 0, %s660
      %s662 = sphi 0, %s660
      %s663 = sphi 0, %s662
      %s677 = sphi 0, %s663
      %s681 = sphi 0, %s681
      %s683 = sphi 0, %s681
      %s684 = sphi 0, %s683
      %s698 = sphi 0, %s684
      %s706 = sphi 0, %s708
      %s709 = sphi 0, %s706
      %s710 = sphi 0, %s709
      %s726 = sphi 0, %s710
      %s732 = sphi 0, %s734
      %s735 = sphi 0, %s732
      %s736 = sphi 0, %s735
      %s752 = sphi 0, %s736
    $region4: #{tpu_custom_call.1} parent=1 // loop_header_branch
      %75 = sbr.rel (%p73) target = $region8
    $region5: #{tpu_custom_call.1} parent=1 // loop_body
      %s77 = ssub.s32 %s72, 1
      %s78 = ssub.s32 %s72, 2
      %s85 = sadd.s32 1, %s80
      %p86 = scmp.ge.s32.totalorder %s85, 2
      %s87 = scalar_select %p86, 0, %s85
      %s88 = sadd.s32 1, %s79
      %s89 = scalar_select %p86, %s88, %s79
      %p90 = scmp.ge.s32.totalorder %s89, 2
      %s91 = scalar_select %p90, 0, %s89
      %s92 = ssub.s32 %s79, %s91
      %p93 = scmp.eq.s32.totalorder %s92, 0
      %s95 = sadd.s32 %s94, 1
      %s96 = scalar_select %p93, %s94, %s95
      %p99 = pneg %p93
      %p100 = scmp.eq.s32.totalorder %s72, 3
      %p101 = por %p99, %p100
      %p102 = scmp.ne.s32.totalorder %s94, %s97
      %p103 = scmp.eq.s32.totalorder %s72, 0
      %p104 = por %p102, %p103
      %p105 = scmp.ne.s32.totalorder %s94, %s97
      %p106 = scmp.eq.s32.totalorder %s77, 3
      %p107 = por %p105, %p106
      %p108 = scmp.ne.s32.totalorder %s97, %s98
      %p109 = scmp.eq.s32.totalorder %s77, 0
      %p110 = por %p108, %p109
      %p111 = scmp.ne.s32.totalorder %s97, %s98
      %p112 = scmp.eq.s32.totalorder %s78, 3
      %p113 = por %p111, %p112
      %p115 = scmp.ne.s32.totalorder %s98, %s114
      %p116 = scmp.eq.s32.totalorder %s78, 0
      %p117 = por %p115, %p116
      %s118 = ssub.s32 %s79, %s91
      %p119 = scmp.eq.s32.totalorder %s118, 0
      %s121 = sadd.s32 %s120, 1
      %s122 = scalar_select %p119, %s120, %s121
      %p125 = pneg %p119
      %p126 = scmp.eq.s32.totalorder %s72, 3
      %p127 = por %p125, %p126
      %p128 = scmp.ne.s32.totalorder %s120, %s123
      %p129 = scmp.eq.s32.totalorder %s72, 0
      %p130 = por %p128, %p129
      %p131 = scmp.ne.s32.totalorder %s120, %s123
      %p132 = scmp.eq.s32.totalorder %s77, 3
      %p133 = por %p131, %p132
      %p134 = scmp.ne.s32.totalorder %s123, %s124
      %p135 = scmp.eq.s32.totalorder %s77, 0
      %p136 = por %p134, %p135
      %p137 = scmp.ne.s32.totalorder %s123, %s124
      %p138 = scmp.eq.s32.totalorder %s78, 3
      %p139 = por %p137, %p138
      %p141 = scmp.ne.s32.totalorder %s124, %s140
      %p142 = scmp.eq.s32.totalorder %s78, 0
      %p143 = por %p141, %p142
      %s144 = ssub.s32 %s79, %s91
      %p145 = scmp.eq.s32.totalorder %s144, 0
      %s147 = sadd.s32 %s146, 1
      %s148 = scalar_select %p145, %s146, %s147
      %p151 = pneg %p145
      %p152 = scmp.eq.s32.totalorder %s72, 3
      %p153 = por %p151, %p152
      %p154 = scmp.ne.s32.totalorder %s146, %s149
      %p155 = scmp.eq.s32.totalorder %s72, 0
      %p156 = por %p154, %p155
      %p157 = scmp.ne.s32.totalorder %s146, %s149
      %p158 = scmp.eq.s32.totalorder %s77, 3
      %p159 = por %p157, %p158
      %p160 = scmp.ne.s32.totalorder %s149, %s150
      %p161 = scmp.eq.s32.totalorder %s77, 0
      %p162 = por %p160, %p161
      %p163 = scmp.ne.s32.totalorder %s149, %s150
      %p164 = scmp.eq.s32.totalorder %s78, 3
      %p165 = por %p163, %p164
      %p167 = scmp.ne.s32.totalorder %s150, %s166
      %p168 = scmp.eq.s32.totalorder %s78, 0
      %p169 = por %p167, %p168
      %s170 = ssub.s32 %s79, %s91
      %s171 = ssub.s32 %s80, %s87
      %s172 = sor.u32 %s170, %s171
      %p173 = scmp.eq.s32.totalorder %s172, 0
      %s175 = sadd.s32 %s174, 1
      %s176 = scalar_select %p173, %s174, %s175
      %p179 = pneg %p173
      %p180 = scmp.eq.s32.totalorder %s72, 3
      %p181 = por %p179, %p180
      %p182 = scmp.ne.s32.totalorder %s174, %s177
      %p183 = scmp.eq.s32.totalorder %s72, 0
      %p184 = por %p182, %p183
      %p185 = scmp.ne.s32.totalorder %s174, %s177
      %p186 = scmp.eq.s32.totalorder %s77, 3
      %p187 = por %p185, %p186
      %p188 = scmp.ne.s32.totalorder %s177, %s178
      %p189 = scmp.eq.s32.totalorder %s77, 0
      %p190 = por %p188, %p189
      %p191 = scmp.ne.s32.totalorder %s177, %s178
      %p192 = scmp.eq.s32.totalorder %s78, 3
      %p193 = por %p191, %p192
      %p195 = scmp.ne.s32.totalorder %s178, %s194
      %p196 = scmp.eq.s32.totalorder %s78, 0
      %p197 = por %p195, %p196
      %s199 = sadd.s32 %s198, 1
      %p202 = scmp.eq.s32.totalorder %s72, 3
      %p203 = scmp.ne.s32.totalorder %s198, %s200
      %p204 = scmp.eq.s32.totalorder %s72, 0
      %p205 = por %p203, %p204
      %p206 = scmp.ne.s32.totalorder %s198, %s200
      %p207 = scmp.eq.s32.totalorder %s77, 3
      %p208 = por %p206, %p207
      %p209 = scmp.ne.s32.totalorder %s200, %s201
      %p210 = scmp.eq.s32.totalorder %s77, 0
      %p211 = por %p209, %p210
      %p212 = scmp.ne.s32.totalorder %s200, %s201
      %p213 = scmp.eq.s32.totalorder %s78, 3
      %p214 = por %p212, %p213
      %p216 = scmp.ne.s32.totalorder %s201, %s215
      %p217 = scmp.eq.s32.totalorder %s78, 0
      %p218 = por %p216, %p217
      %s220 = sadd.s32 %s219, 1
      %p223 = scmp.eq.s32.totalorder %s72, 3
      %p224 = scmp.ne.s32.totalorder %s219, %s221
      %p225 = scmp.eq.s32.totalorder %s72, 0
      %p226 = por %p224, %p225
      %p227 = scmp.ne.s32.totalorder %s219, %s221
      %p228 = scmp.eq.s32.totalorder %s77, 3
      %p229 = por %p227, %p228
      %p230 = scmp.ne.s32.totalorder %s221, %s222
      %p231 = scmp.eq.s32.totalorder %s77, 0
      %p232 = por %p230, %p231
      %p233 = scmp.ne.s32.totalorder %s221, %s222
      %p234 = scmp.eq.s32.totalorder %s78, 3
      %p235 = por %p233, %p234
      %p237 = scmp.ne.s32.totalorder %s222, %s236
      %p238 = scmp.eq.s32.totalorder %s78, 0
      %p239 = por %p237, %p238
      %s241 = sadd.s32 %s240, 1
      %p244 = scmp.eq.s32.totalorder %s72, 3
      %p245 = scmp.ne.s32.totalorder %s240, %s242
      %p246 = scmp.eq.s32.totalorder %s72, 0
      %p247 = por %p245, %p246
      %p248 = scmp.ne.s32.totalorder %s240, %s242
      %p249 = scmp.eq.s32.totalorder %s77, 3
      %p250 = por %p248, %p249
      %p251 = scmp.ne.s32.totalorder %s242, %s243
      %p252 = scmp.eq.s32.totalorder %s77, 0
      %p253 = por %p251, %p252
      %p254 = scmp.ne.s32.totalorder %s242, %s243
      %p255 = scmp.eq.s32.totalorder %s78, 3
      %p256 = por %p254, %p255
      %p258 = scmp.ne.s32.totalorder %s243, %s257
      %p259 = scmp.eq.s32.totalorder %s78, 0
      %p260 = por %p258, %p259
      %s262 = sadd.s32 %s261, 1
      %p265 = scmp.eq.s32.totalorder %s72, 3
      %p266 = scmp.ne.s32.totalorder %s261, %s263
      %p267 = scmp.eq.s32.totalorder %s72, 0
      %p268 = por %p266, %p267
      %p269 = scmp.ne.s32.totalorder %s261, %s263
      %p270 = scmp.eq.s32.totalorder %s77, 3
      %p271 = por %p269, %p270
      %p272 = scmp.ne.s32.totalorder %s263, %s264
      %p273 = scmp.eq.s32.totalorder %s77, 0
      %p274 = por %p272, %p273
      %p275 = scmp.ne.s32.totalorder %s263, %s264
      %p276 = scmp.eq.s32.totalorder %s78, 3
      %p277 = por %p275, %p276
      %p279 = scmp.ne.s32.totalorder %s264, %s278
      %p280 = scmp.eq.s32.totalorder %s78, 0
      %p281 = por %p279, %p280
      %s283 = sadd.s32 %s282, 1
      %p286 = scmp.eq.s32.totalorder %s72, 3
      %p287 = scmp.ne.s32.totalorder %s282, %s284
      %p288 = scmp.eq.s32.totalorder %s72, 0
      %p289 = por %p287, %p288
      %p290 = scmp.ne.s32.totalorder %s282, %s284
      %p291 = scmp.eq.s32.totalorder %s77, 3
      %p292 = por %p290, %p291
      %p293 = scmp.ne.s32.totalorder %s284, %s285
      %p294 = scmp.eq.s32.totalorder %s77, 0
      %p295 = por %p293, %p294
      %p296 = scmp.ne.s32.totalorder %s284, %s285
      %p297 = scmp.eq.s32.totalorder %s78, 3
      %p298 = por %p296, %p297
      %p300 = scmp.ne.s32.totalorder %s285, %s299
      %p301 = scmp.eq.s32.totalorder %s78, 0
      %p302 = por %p300, %p301
      %s304 = sadd.s32 %s303, 1
      %p307 = scmp.eq.s32.totalorder %s72, 3
      %p308 = scmp.ne.s32.totalorder %s303, %s305
      %p309 = scmp.eq.s32.totalorder %s72, 0
      %p310 = por %p308, %p309
      %p311 = scmp.ne.s32.totalorder %s303, %s305
      %p312 = scmp.eq.s32.totalorder %s77, 3
      %p313 = por %p311, %p312
      %p314 = scmp.ne.s32.totalorder %s305, %s306
      %p315 = scmp.eq.s32.totalorder %s77, 0
      %p316 = por %p314, %p315
      %p317 = scmp.ne.s32.totalorder %s305, %s306
      %p318 = scmp.eq.s32.totalorder %s78, 3
      %p319 = por %p317, %p318
      %p321 = scmp.ne.s32.totalorder %s306, %s320
      %p322 = scmp.eq.s32.totalorder %s78, 0
      %p323 = por %p321, %p322
      %s325 = sadd.s32 %s324, 1
      %p328 = scmp.eq.s32.totalorder %s72, 3
      %p329 = scmp.ne.s32.totalorder %s324, %s326
      %p330 = scmp.eq.s32.totalorder %s72, 0
      %p331 = por %p329, %p330
      %p332 = scmp.ne.s32.totalorder %s324, %s326
      %p333 = scmp.eq.s32.totalorder %s77, 3
      %p334 = por %p332, %p333
      %p335 = scmp.ne.s32.totalorder %s326, %s327
      %p336 = scmp.eq.s32.totalorder %s77, 0
      %p337 = por %p335, %p336
      %p338 = scmp.ne.s32.totalorder %s326, %s327
      %p339 = scmp.eq.s32.totalorder %s78, 3
      %p340 = por %p338, %p339
      %p342 = scmp.ne.s32.totalorder %s327, %s341
      %p343 = scmp.eq.s32.totalorder %s78, 0
      %p344 = por %p342, %p343
      %s346 = sadd.s32 %s345, 1
      %p349 = scmp.eq.s32.totalorder %s72, 3
      %p350 = scmp.ne.s32.totalorder %s345, %s347
      %p351 = scmp.eq.s32.totalorder %s72, 0
      %p352 = por %p350, %p351
      %p353 = scmp.ne.s32.totalorder %s345, %s347
      %p354 = scmp.eq.s32.totalorder %s77, 3
      %p355 = por %p353, %p354
      %p356 = scmp.ne.s32.totalorder %s347, %s348
      %p357 = scmp.eq.s32.totalorder %s77, 0
      %p358 = por %p356, %p357
      %p359 = scmp.ne.s32.totalorder %s347, %s348
      %p360 = scmp.eq.s32.totalorder %s78, 3
      %p361 = por %p359, %p360
      %p363 = scmp.ne.s32.totalorder %s348, %s362
      %p364 = scmp.eq.s32.totalorder %s78, 0
      %p365 = por %p363, %p364
      %s367 = sadd.s32 %s366, 1
      %p370 = scmp.eq.s32.totalorder %s72, 3
      %p371 = scmp.ne.s32.totalorder %s366, %s368
      %p372 = scmp.eq.s32.totalorder %s72, 0
      %p373 = por %p371, %p372
      %p374 = scmp.ne.s32.totalorder %s366, %s368
      %p375 = scmp.eq.s32.totalorder %s77, 3
      %p376 = por %p374, %p375
      %p377 = scmp.ne.s32.totalorder %s368, %s369
      %p378 = scmp.eq.s32.totalorder %s77, 0
      %p379 = por %p377, %p378
      %p380 = scmp.ne.s32.totalorder %s368, %s369
      %p381 = scmp.eq.s32.totalorder %s78, 3
      %p382 = por %p380, %p381
      %p384 = scmp.ne.s32.totalorder %s369, %s383
      %p385 = scmp.eq.s32.totalorder %s78, 0
      %p386 = por %p384, %p385
      %s388 = sadd.s32 %s387, 1
      %p391 = scmp.eq.s32.totalorder %s72, 3
      %p392 = scmp.ne.s32.totalorder %s387, %s389
      %p393 = scmp.eq.s32.totalorder %s72, 0
      %p394 = por %p392, %p393
      %p395 = scmp.ne.s32.totalorder %s387, %s389
      %p396 = scmp.eq.s32.totalorder %s77, 3
      %p397 = por %p395, %p396
      %p398 = scmp.ne.s32.totalorder %s389, %s390
      %p399 = scmp.eq.s32.totalorder %s77, 0
      %p400 = por %p398, %p399
      %p401 = scmp.ne.s32.totalorder %s389, %s390
      %p402 = scmp.eq.s32.totalorder %s78, 3
      %p403 = por %p401, %p402
      %p405 = scmp.ne.s32.totalorder %s390, %s404
      %p406 = scmp.eq.s32.totalorder %s78, 0
      %p407 = por %p405, %p406
      %s409 = sadd.s32 %s408, 1
      %p412 = scmp.eq.s32.totalorder %s72, 3
      %p413 = scmp.ne.s32.totalorder %s408, %s410
      %p414 = scmp.eq.s32.totalorder %s72, 0
      %p415 = por %p413, %p414
      %p416 = scmp.ne.s32.totalorder %s408, %s410
      %p417 = scmp.eq.s32.totalorder %s77, 3
      %p418 = por %p416, %p417
      %p419 = scmp.ne.s32.totalorder %s410, %s411
      %p420 = scmp.eq.s32.totalorder %s77, 0
      %p421 = por %p419, %p420
      %p422 = scmp.ne.s32.totalorder %s410, %s411
      %p423 = scmp.eq.s32.totalorder %s78, 3
      %p424 = por %p422, %p423
      %p426 = scmp.ne.s32.totalorder %s411, %s425
      %p427 = scmp.eq.s32.totalorder %s78, 0
      %p428 = por %p426, %p427
      %s430 = sadd.s32 %s429, 1
      %p433 = scmp.eq.s32.totalorder %s72, 3
      %p434 = scmp.ne.s32.totalorder %s429, %s431
      %p435 = scmp.eq.s32.totalorder %s72, 0
      %p436 = por %p434, %p435
      %p437 = scmp.ne.s32.totalorder %s429, %s431
      %p438 = scmp.eq.s32.totalorder %s77, 3
      %p439 = por %p437, %p438
      %p440 = scmp.ne.s32.totalorder %s431, %s432
      %p441 = scmp.eq.s32.totalorder %s77, 0
      %p442 = por %p440, %p441
      %p443 = scmp.ne.s32.totalorder %s431, %s432
      %p444 = scmp.eq.s32.totalorder %s78, 3
      %p445 = por %p443, %p444
      %p447 = scmp.ne.s32.totalorder %s432, %s446
      %p448 = scmp.eq.s32.totalorder %s78, 0
      %p449 = por %p447, %p448
      %s451 = sadd.s32 %s450, 1
      %p454 = scmp.eq.s32.totalorder %s72, 3
      %p455 = scmp.ne.s32.totalorder %s450, %s452
      %p456 = scmp.eq.s32.totalorder %s72, 0
      %p457 = por %p455, %p456
      %p458 = scmp.ne.s32.totalorder %s450, %s452
      %p459 = scmp.eq.s32.totalorder %s77, 3
      %p460 = por %p458, %p459
      %p461 = scmp.ne.s32.totalorder %s452, %s453
      %p462 = scmp.eq.s32.totalorder %s77, 0
      %p463 = por %p461, %p462
      %p464 = scmp.ne.s32.totalorder %s452, %s453
      %p465 = scmp.eq.s32.totalorder %s78, 3
      %p466 = por %p464, %p465
      %p468 = scmp.ne.s32.totalorder %s453, %s467
      %p469 = scmp.eq.s32.totalorder %s78, 0
      %p470 = por %p468, %p469
      %s472 = sadd.s32 %s471, 1
      %p475 = scmp.eq.s32.totalorder %s72, 3
      %p476 = scmp.ne.s32.totalorder %s471, %s473
      %p477 = scmp.eq.s32.totalorder %s72, 0
      %p478 = por %p476, %p477
      %p479 = scmp.ne.s32.totalorder %s471, %s473
      %p480 = scmp.eq.s32.totalorder %s77, 3
      %p481 = por %p479, %p480
      %p482 = scmp.ne.s32.totalorder %s473, %s474
      %p483 = scmp.eq.s32.totalorder %s77, 0
      %p484 = por %p482, %p483
      %p485 = scmp.ne.s32.totalorder %s473, %s474
      %p486 = scmp.eq.s32.totalorder %s78, 3
      %p487 = por %p485, %p486
      %p489 = scmp.ne.s32.totalorder %s474, %s488
      %p490 = scmp.eq.s32.totalorder %s78, 0
      %p491 = por %p489, %p490
      %s493 = sadd.s32 %s492, 1
      %p496 = scmp.eq.s32.totalorder %s72, 3
      %p497 = scmp.ne.s32.totalorder %s492, %s494
      %p498 = scmp.eq.s32.totalorder %s72, 0
      %p499 = por %p497, %p498
      %p500 = scmp.ne.s32.totalorder %s492, %s494
      %p501 = scmp.eq.s32.totalorder %s77, 3
      %p502 = por %p500, %p501
      %p503 = scmp.ne.s32.totalorder %s494, %s495
      %p504 = scmp.eq.s32.totalorder %s77, 0
      %p505 = por %p503, %p504
      %p506 = scmp.ne.s32.totalorder %s494, %s495
      %p507 = scmp.eq.s32.totalorder %s78, 3
      %p508 = por %p506, %p507
      %p510 = scmp.ne.s32.totalorder %s495, %s509
      %p511 = scmp.eq.s32.totalorder %s78, 0
      %p512 = por %p510, %p511
      %s514 = sadd.s32 %s513, 1
      %p517 = scmp.eq.s32.totalorder %s72, 3
      %p518 = scmp.ne.s32.totalorder %s513, %s515
      %p519 = scmp.eq.s32.totalorder %s72, 0
      %p520 = por %p518, %p519
      %p521 = scmp.ne.s32.totalorder %s513, %s515
      %p522 = scmp.eq.s32.totalorder %s77, 3
      %p523 = por %p521, %p522
      %p524 = scmp.ne.s32.totalorder %s515, %s516
      %p525 = scmp.eq.s32.totalorder %s77, 0
      %p526 = por %p524, %p525
      %p527 = scmp.ne.s32.totalorder %s515, %s516
      %p528 = scmp.eq.s32.totalorder %s78, 3
      %p529 = por %p527, %p528
      %p531 = scmp.ne.s32.totalorder %s516, %s530
      %p532 = scmp.eq.s32.totalorder %s78, 0
      %p533 = por %p531, %p532
      %s535 = sadd.s32 %s534, 1
      %p538 = scmp.eq.s32.totalorder %s72, 3
      %p539 = scmp.ne.s32.totalorder %s534, %s536
      %p540 = scmp.eq.s32.totalorder %s72, 0
      %p541 = por %p539, %p540
      %p542 = scmp.ne.s32.totalorder %s534, %s536
      %p543 = scmp.eq.s32.totalorder %s77, 3
      %p544 = por %p542, %p543
      %p545 = scmp.ne.s32.totalorder %s536, %s537
      %p546 = scmp.eq.s32.totalorder %s77, 0
      %p547 = por %p545, %p546
      %p548 = scmp.ne.s32.totalorder %s536, %s537
      %p549 = scmp.eq.s32.totalorder %s78, 3
      %p550 = por %p548, %p549
      %p552 = scmp.ne.s32.totalorder %s537, %s551
      %p553 = scmp.eq.s32.totalorder %s78, 0
      %p554 = por %p552, %p553
      %s556 = sadd.s32 %s555, 1
      %p559 = scmp.eq.s32.totalorder %s72, 3
      %p560 = scmp.ne.s32.totalorder %s555, %s557
      %p561 = scmp.eq.s32.totalorder %s72, 0
      %p562 = por %p560, %p561
      %p563 = scmp.ne.s32.totalorder %s555, %s557
      %p564 = scmp.eq.s32.totalorder %s77, 3
      %p565 = por %p563, %p564
      %p566 = scmp.ne.s32.totalorder %s557, %s558
      %p567 = scmp.eq.s32.totalorder %s77, 0
      %p568 = por %p566, %p567
      %p569 = scmp.ne.s32.totalorder %s557, %s558
      %p570 = scmp.eq.s32.totalorder %s78, 3
      %p571 = por %p569, %p570
      %p573 = scmp.ne.s32.totalorder %s558, %s572
      %p574 = scmp.eq.s32.totalorder %s78, 0
      %p575 = por %p573, %p574
      %s577 = sadd.s32 %s576, 1
      %p580 = scmp.eq.s32.totalorder %s72, 3
      %p581 = scmp.ne.s32.totalorder %s576, %s578
      %p582 = scmp.eq.s32.totalorder %s72, 0
      %p583 = por %p581, %p582
      %p584 = scmp.ne.s32.totalorder %s576, %s578
      %p585 = scmp.eq.s32.totalorder %s77, 3
      %p586 = por %p584, %p585
      %p587 = scmp.ne.s32.totalorder %s578, %s579
      %p588 = scmp.eq.s32.totalorder %s77, 0
      %p589 = por %p587, %p588
      %p590 = scmp.ne.s32.totalorder %s578, %s579
      %p591 = scmp.eq.s32.totalorder %s78, 3
      %p592 = por %p590, %p591
      %p594 = scmp.ne.s32.totalorder %s579, %s593
      %p595 = scmp.eq.s32.totalorder %s78, 0
      %p596 = por %p594, %p595
      %s598 = sadd.s32 %s597, 1
      %p601 = scmp.eq.s32.totalorder %s72, 3
      %p602 = scmp.ne.s32.totalorder %s597, %s599
      %p603 = scmp.eq.s32.totalorder %s72, 0
      %p604 = por %p602, %p603
      %p605 = scmp.ne.s32.totalorder %s597, %s599
      %p606 = scmp.eq.s32.totalorder %s77, 3
      %p607 = por %p605, %p606
      %p608 = scmp.ne.s32.totalorder %s599, %s600
      %p609 = scmp.eq.s32.totalorder %s77, 0
      %p610 = por %p608, %p609
      %p611 = scmp.ne.s32.totalorder %s599, %s600
      %p612 = scmp.eq.s32.totalorder %s78, 3
      %p613 = por %p611, %p612
      %p615 = scmp.ne.s32.totalorder %s600, %s614
      %p616 = scmp.eq.s32.totalorder %s78, 0
      %p617 = por %p615, %p616
      %s619 = sadd.s32 %s618, 1
      %p622 = scmp.eq.s32.totalorder %s72, 3
      %p623 = scmp.ne.s32.totalorder %s618, %s620
      %p624 = scmp.eq.s32.totalorder %s72, 0
      %p625 = por %p623, %p624
      %p626 = scmp.ne.s32.totalorder %s618, %s620
      %p627 = scmp.eq.s32.totalorder %s77, 3
      %p628 = por %p626, %p627
      %p629 = scmp.ne.s32.totalorder %s620, %s621
      %p630 = scmp.eq.s32.totalorder %s77, 0
      %p631 = por %p629, %p630
      %p632 = scmp.ne.s32.totalorder %s620, %s621
      %p633 = scmp.eq.s32.totalorder %s78, 3
      %p634 = por %p632, %p633
      %p636 = scmp.ne.s32.totalorder %s621, %s635
      %p637 = scmp.eq.s32.totalorder %s78, 0
      %p638 = por %p636, %p637
      %s640 = sadd.s32 %s639, 1
      %p643 = scmp.eq.s32.totalorder %s72, 3
      %p644 = scmp.ne.s32.totalorder %s639, %s641
      %p645 = scmp.eq.s32.totalorder %s72, 0
      %p646 = por %p644, %p645
      %p647 = scmp.ne.s32.totalorder %s639, %s641
      %p648 = scmp.eq.s32.totalorder %s77, 3
      %p649 = por %p647, %p648
      %p650 = scmp.ne.s32.totalorder %s641, %s642
      %p651 = scmp.eq.s32.totalorder %s77, 0
      %p652 = por %p650, %p651
      %p653 = scmp.ne.s32.totalorder %s641, %s642
      %p654 = scmp.eq.s32.totalorder %s78, 3
      %p655 = por %p653, %p654
      %p657 = scmp.ne.s32.totalorder %s642, %s656
      %p658 = scmp.eq.s32.totalorder %s78, 0
      %p659 = por %p657, %p658
      %s661 = sadd.s32 %s660, 1
      %p664 = scmp.eq.s32.totalorder %s72, 3
      %p665 = scmp.ne.s32.totalorder %s660, %s662
      %p666 = scmp.eq.s32.totalorder %s72, 0
      %p667 = por %p665, %p666
      %p668 = scmp.ne.s32.totalorder %s660, %s662
      %p669 = scmp.eq.s32.totalorder %s77, 3
      %p670 = por %p668, %p669
      %p671 = scmp.ne.s32.totalorder %s662, %s663
      %p672 = scmp.eq.s32.totalorder %s77, 0
      %p673 = por %p671, %p672
      %p674 = scmp.ne.s32.totalorder %s662, %s663
      %p675 = scmp.eq.s32.totalorder %s78, 3
      %p676 = por %p674, %p675
      %p678 = scmp.ne.s32.totalorder %s663, %s677
      %p679 = scmp.eq.s32.totalorder %s78, 0
      %p680 = por %p678, %p679
      %s682 = sadd.s32 %s681, 1
      %p685 = scmp.eq.s32.totalorder %s72, 3
      %p686 = scmp.ne.s32.totalorder %s681, %s683
      %p687 = scmp.eq.s32.totalorder %s72, 0
      %p688 = por %p686, %p687
      %p689 = scmp.ne.s32.totalorder %s681, %s683
      %p690 = scmp.eq.s32.totalorder %s77, 3
      %p691 = por %p689, %p690
      %p692 = scmp.ne.s32.totalorder %s683, %s684
      %p693 = scmp.eq.s32.totalorder %s77, 0
      %p694 = por %p692, %p693
      %p695 = scmp.ne.s32.totalorder %s683, %s684
      %p696 = scmp.eq.s32.totalorder %s78, 3
      %p697 = por %p695, %p696
      %p699 = scmp.ne.s32.totalorder %s684, %s698
      %p700 = scmp.eq.s32.totalorder %s78, 0
      %p701 = por %p699, %p700
      %s702 = ssub.s32 %s79, %s91
      %s703 = ssub.s32 %s80, %s87
      %s704 = sor.u32 %s702, %s703
      %p705 = scmp.eq.s32.totalorder %s704, 0
      %s707 = sadd.s32 %s706, 1
      %s708 = scalar_select %p705, %s706, %s707
      %p711 = pneg %p705
      %p712 = scmp.eq.s32.totalorder %s72, 3
      %p713 = por %p711, %p712
      %p714 = scmp.ne.s32.totalorder %s706, %s709
      %p715 = scmp.eq.s32.totalorder %s72, 0
      %p716 = por %p714, %p715
      %p717 = scmp.ne.s32.totalorder %s706, %s709
      %p718 = scmp.eq.s32.totalorder %s77, 3
      %p719 = por %p717, %p718
      %p720 = scmp.ne.s32.totalorder %s709, %s710
      %p721 = scmp.eq.s32.totalorder %s77, 0
      %p722 = por %p720, %p721
      %p723 = scmp.ne.s32.totalorder %s709, %s710
      %p724 = scmp.eq.s32.totalorder %s78, 3
      %p725 = por %p723, %p724
      %p727 = scmp.ne.s32.totalorder %s710, %s726
      %p728 = scmp.eq.s32.totalorder %s78, 0
      %p729 = por %p727, %p728
      %s730 = ssub.s32 %s79, %s91
      %p731 = scmp.eq.s32.totalorder %s730, 0
      %s733 = sadd.s32 %s732, 1
      %s734 = scalar_select %p731, %s732, %s733
      %p737 = pneg %p731
      %p738 = scmp.eq.s32.totalorder %s72, 3
      %p739 = por %p737, %p738
      %p740 = scmp.ne.s32.totalorder %s732, %s735
      %p741 = scmp.eq.s32.totalorder %s72, 0
      %p742 = por %p740, %p741
      %p743 = scmp.ne.s32.totalorder %s732, %s735
      %p744 = scmp.eq.s32.totalorder %s77, 3
      %p745 = por %p743, %p744
      %p746 = scmp.ne.s32.totalorder %s735, %s736
      %p747 = scmp.eq.s32.totalorder %s77, 0
      %p748 = por %p746, %p747
      %p749 = scmp.ne.s32.totalorder %s735, %s736
      %p750 = scmp.eq.s32.totalorder %s78, 3
      %p751 = por %p749, %p750
      %p753 = scmp.ne.s32.totalorder %s736, %s752
      %p754 = scmp.eq.s32.totalorder %s78, 0
      %p755 = por %p753, %p754
      %p756 = scmp.le.s32.totalorder 1, %s72
      %p757 = scmp.lt.s32.totalorder %s72, 5
      %p758 = pnand %p756, %p757
      %p759 = pneg %p758
      // Predicated region
      $region9: #{tpu_custom_call.1} parent=5 // pred_check
        _
      $region10: #{tpu_custom_call.1} parent=5 // pred_check_branch
        %761 = sbr.rel (%p758) target = $region12
      $region11: #{tpu_custom_call.1} parent=5 // pred_region
        %s762 = ssub.s32 %s72, 1
        // Predicated region
        $region13: #{tpu_custom_call.1} parent=11 // pred_check
          %p763 = pneg %p211
        $region14: #{tpu_custom_call.1} parent=11 // pred_check_branch
          %765 = sbr.rel (%p763) target = $region16
        $region15: #{tpu_custom_call.1} parent=11 // pred_region
          _
        $region16: #{tpu_custom_call.1} parent=11 // pred_fallthru
          _
        // Predicated region
        $region17: #{tpu_custom_call.1} parent=11 // pred_check
          %p766 = pneg %p232
        $region18: #{tpu_custom_call.1} parent=11 // pred_check_branch
          %768 = sbr.rel (%p766) target = $region20
        $region19: #{tpu_custom_call.1} parent=11 // pred_region
          _
        $region20: #{tpu_custom_call.1} parent=11 // pred_fallthru
          _
        // Predicated region
        $region21: #{tpu_custom_call.1} parent=11 // pred_check
          %p769 = pneg %p253
        $region22: #{tpu_custom_call.1} parent=11 // pred_check_branch
          %771 = sbr.rel (%p769) target = $region24
        $region23: #{tpu_custom_call.1} parent=11 // pred_region
          _
        $region24: #{tpu_custom_call.1} parent=11 // pred_fallthru
          _
        // Predicated region
        $region25: #{tpu_custom_call.1} parent=11 // pred_check
          %p772 = pneg %p274
        $region26: #{tpu_custom_call.1} parent=11 // pred_check_branch
          %774 = sbr.rel (%p772) target = $region28
        $region27: #{tpu_custom_call.1} parent=11 // pred_region
          _
        $region28: #{tpu_custom_call.1} parent=11 // pred_fallthru
          _
        // Predicated region
        $region29: #{tpu_custom_call.1} parent=11 // pred_check
          %p775 = pneg %p295
        $region30: #{tpu_custom_call.1} parent=11 // pred_check_branch
          %777 = sbr.rel (%p775) target = $region32
        $region31: #{tpu_custom_call.1} parent=11 // pred_region
          _
        $region32: #{tpu_custom_call.1} parent=11 // pred_fallthru
          _
        // Predicated region
        $region33: #{tpu_custom_call.1} parent=11 // pred_check
          %p778 = pneg %p316
        $region34: #{tpu_custom_call.1} parent=11 // pred_check_branch
          %780 = sbr.rel (%p778) target = $region36
        $region35: #{tpu_custom_call.1} parent=11 // pred_region
          _
        $region36: #{tpu_custom_call.1} parent=11 // pred_fallthru
          _
        // Predicated region
        $region37: #{tpu_custom_call.1} parent=11 // pred_check
          %p781 = pneg %p337
        $region38: #{tpu_custom_call.1} parent=11 // pred_check_branch
          %783 = sbr.rel (%p781) target = $region40
        $region39: #{tpu_custom_call.1} parent=11 // pred_region
          _
        $region40: #{tpu_custom_call.1} parent=11 // pred_fallthru
          _
        // Predicated region
        $region41: #{tpu_custom_call.1} parent=11 // pred_check
          %p784 = pneg %p358
        $region42: #{tpu_custom_call.1} parent=11 // pred_check_branch
          %786 = sbr.rel (%p784) target = $region44
        $region43: #{tpu_custom_call.1} parent=11 // pred_region
          _
        $region44: #{tpu_custom_call.1} parent=11 // pred_fallthru
          _
        // Predicated region
        $region45: #{tpu_custom_call.1} parent=11 // pred_check
          %p787 = pneg %p379
        $region46: #{tpu_custom_call.1} parent=11 // pred_check_branch
          %789 = sbr.rel (%p787) target = $region48
        $region47: #{tpu_custom_call.1} parent=11 // pred_region
          _
        $region48: #{tpu_custom_call.1} parent=11 // pred_fallthru
          _
        // Predicated region
        $region49: #{tpu_custom_call.1} parent=11 // pred_check
          %p790 = pneg %p400
        $region50: #{tpu_custom_call.1} parent=11 // pred_check_branch
          %792 = sbr.rel (%p790) target = $region52
        $region51: #{tpu_custom_call.1} parent=11 // pred_region
          _
        $region52: #{tpu_custom_call.1} parent=11 // pred_fallthru
          _
        // Predicated region
        $region53: #{tpu_custom_call.1} parent=11 // pred_check
          %p793 = pneg %p421
        $region54: #{tpu_custom_call.1} parent=11 // pred_check_branch
          %795 = sbr.rel (%p793) target = $region56
        $region55: #{tpu_custom_call.1} parent=11 // pred_region
          _
        $region56: #{tpu_custom_call.1} parent=11 // pred_fallthru
          _
        // Predicated region
        $region57: #{tpu_custom_call.1} parent=11 // pred_check
          %p796 = pneg %p442
        $region58: #{tpu_custom_call.1} parent=11 // pred_check_branch
          %798 = sbr.rel (%p796) target = $region60
        $region59: #{tpu_custom_call.1} parent=11 // pred_region
          _
        $region60: #{tpu_custom_call.1} parent=11 // pred_fallthru
          _
        // Predicated region
        $region61: #{tpu_custom_call.1} parent=11 // pred_check
          %p799 = pneg %p463
        $region62: #{tpu_custom_call.1} parent=11 // pred_check_branch
          %801 = sbr.rel (%p799) target = $region64
        $region63: #{tpu_custom_call.1} parent=11 // pred_region
          _
        $region64: #{tpu_custom_call.1} parent=11 // pred_fallthru
          _
        // Predicated region
        $region65: #{tpu_custom_call.1} parent=11 // pred_check
          %p802 = pneg %p484
        $region66: #{tpu_custom_call.1} parent=11 // pred_check_branch
          %804 = sbr.rel (%p802) target = $region68
        $region67: #{tpu_custom_call.1} parent=11 // pred_region
          _
        $region68: #{tpu_custom_call.1} parent=11 // pred_fallthru
          _
        // Predicated region
        $region69: #{tpu_custom_call.1} parent=11 // pred_check
          %p805 = pneg %p505
        $region70: #{tpu_custom_call.1} parent=11 // pred_check_branch
          %807 = sbr.rel (%p805) target = $region72
        $region71: #{tpu_custom_call.1} parent=11 // pred_region
          _
        $region72: #{tpu_custom_call.1} parent=11 // pred_fallthru
          _
        // Predicated region
        $region73: #{tpu_custom_call.1} parent=11 // pred_check
          %p808 = pneg %p526
        $region74: #{tpu_custom_call.1} parent=11 // pred_check_branch
          %810 = sbr.rel (%p808) target = $region76
        $region75: #{tpu_custom_call.1} parent=11 // pred_region
          _
        $region76: #{tpu_custom_call.1} parent=11 // pred_fallthru
          _
        // Predicated region
        $region77: #{tpu_custom_call.1} parent=11 // pred_check
          %p811 = pneg %p547
        $region78: #{tpu_custom_call.1} parent=11 // pred_check_branch
          %813 = sbr.rel (%p811) target = $region80
        $region79: #{tpu_custom_call.1} parent=11 // pred_region
          _
        $region80: #{tpu_custom_call.1} parent=11 // pred_fallthru
          _
        // Predicated region
        $region81: #{tpu_custom_call.1} parent=11 // pred_check
          %p814 = pneg %p568
        $region82: #{tpu_custom_call.1} parent=11 // pred_check_branch
          %816 = sbr.rel (%p814) target = $region84
        $region83: #{tpu_custom_call.1} parent=11 // pred_region
          _
        $region84: #{tpu_custom_call.1} parent=11 // pred_fallthru
          _
        // Predicated region
        $region85: #{tpu_custom_call.1} parent=11 // pred_check
          %p817 = pneg %p589
        $region86: #{tpu_custom_call.1} parent=11 // pred_check_branch
          %819 = sbr.rel (%p817) target = $region88
        $region87: #{tpu_custom_call.1} parent=11 // pred_region
          _
        $region88: #{tpu_custom_call.1} parent=11 // pred_fallthru
          _
        // Predicated region
        $region89: #{tpu_custom_call.1} parent=11 // pred_check
          %p820 = pneg %p610
        $region90: #{tpu_custom_call.1} parent=11 // pred_check_branch
          %822 = sbr.rel (%p820) target = $region92
        $region91: #{tpu_custom_call.1} parent=11 // pred_region
          _
        $region92: #{tpu_custom_call.1} parent=11 // pred_fallthru
          _
        // Predicated region
        $region93: #{tpu_custom_call.1} parent=11 // pred_check
          %p823 = pneg %p631
        $region94: #{tpu_custom_call.1} parent=11 // pred_check_branch
          %825 = sbr.rel (%p823) target = $region96
        $region95: #{tpu_custom_call.1} parent=11 // pred_region
          _
        $region96: #{tpu_custom_call.1} parent=11 // pred_fallthru
          _
        // Predicated region
        $region97: #{tpu_custom_call.1} parent=11 // pred_check
          %p826 = pneg %p652
        $region98: #{tpu_custom_call.1} parent=11 // pred_check_branch
          %828 = sbr.rel (%p826) target = $region100
        $region99: #{tpu_custom_call.1} parent=11 // pred_region
          _
        $region100: #{tpu_custom_call.1} parent=11 // pred_fallthru
          _
        // Predicated region
        $region101: #{tpu_custom_call.1} parent=11 // pred_check
          %p829 = pneg %p673
        $region102: #{tpu_custom_call.1} parent=11 // pred_check_branch
          %831 = sbr.rel (%p829) target = $region104
        $region103: #{tpu_custom_call.1} parent=11 // pred_region
          _
        $region104: #{tpu_custom_call.1} parent=11 // pred_fallthru
          _
        // Predicated region
        $region105: #{tpu_custom_call.1} parent=11 // pred_check
          %p832 = pneg %p694
        $region106: #{tpu_custom_call.1} parent=11 // pred_check_branch
          %834 = sbr.rel (%p832) target = $region108
        $region107: #{tpu_custom_call.1} parent=11 // pred_region
          _
        $region108: #{tpu_custom_call.1} parent=11 // pred_fallthru
          _
      $region12: #{tpu_custom_call.1} parent=5 // pred_fallthru
        _
      %p835 = scmp.lt.s32.totalorder %s72, 4
      // Predicated region
      $region109: #{tpu_custom_call.1} parent=5 // pred_check
        %p836 = pneg %p835
      $region110: #{tpu_custom_call.1} parent=5 // pred_check_branch
        %838 = sbr.rel (%p836) target = $region112
      $region111: #{tpu_custom_call.1} parent=5 // pred_region
        // Predicated region
        $region113: #{tpu_custom_call.1} parent=111 // pred_check
          %p839 = pneg %p104
        $region114: #{tpu_custom_call.1} parent=111 // pred_check_branch
          %841 = sbr.rel (%p839) target = $region116
        $region115: #{tpu_custom_call.1} parent=111 // pred_region
          %p842 = scmp.lt.s32.totalorder %s79, 1
          %s843 = scalar_select %p842, %s79, 1
          %s844 = scalar_lea.vmem %s1, %s843
        $region116: #{tpu_custom_call.1} parent=111 // pred_fallthru
          _
        // Predicated region
        $region117: #{tpu_custom_call.1} parent=111 // pred_check
          %p845 = pneg %p130
        $region118: #{tpu_custom_call.1} parent=111 // pred_check_branch
          %847 = sbr.rel (%p845) target = $region120
        $region119: #{tpu_custom_call.1} parent=111 // pred_region
          %p848 = scmp.lt.s32.totalorder %s79, 1
          %s849 = scalar_select %p848, %s79, 1
          %s850 = smul.addr %s849, 3
          %s851 = smul.addr %s850, 4
          %s852 = scalar_lea.vmem %s3, %s851
        $region120: #{tpu_custom_call.1} parent=111 // pred_fallthru
          _
        // Predicated region
        $region121: #{tpu_custom_call.1} parent=111 // pred_check
          %p853 = pneg %p156
        $region122: #{tpu_custom_call.1} parent=111 // pred_check_branch
          %855 = sbr.rel (%p853) target = $region124
        $region123: #{tpu_custom_call.1} parent=111 // pred_region
          %p856 = scmp.lt.s32.totalorder %s79, 1
          %s857 = scalar_select %p856, %s79, 1
          %s858 = smul.addr %s857, 8
          %s859 = scalar_lea.vmem %s5, %s858
        $region124: #{tpu_custom_call.1} parent=111 // pred_fallthru
          _
        // Predicated region
        $region125: #{tpu_custom_call.1} parent=111 // pred_check
          %p860 = pneg %p184
        $region126: #{tpu_custom_call.1} parent=111 // pred_check_branch
          %862 = sbr.rel (%p860) target = $region128
        $region127: #{tpu_custom_call.1} parent=111 // pred_region
          %p863 = scmp.lt.s32.totalorder %s79, 1
          %s864 = scalar_select %p863, %s79, 1
          %p865 = scmp.lt.s32.totalorder %s80, 1
          %s866 = scalar_select %p865, %s80, 1
          %s867 = smul.addr %s864, 2
          %s868 = sadd.s32 %s866, %s867
          %s869 = smul.addr %s868, 8
          %s870 = scalar_lea.vmem %s7, %s869
        $region128: #{tpu_custom_call.1} parent=111 // pred_fallthru
          _
      $region112: #{tpu_custom_call.1} parent=5 // pred_fallthru
        _
      %p871 = scmp.le.s32.totalorder 1, %s72
      %p872 = scmp.lt.s32.totalorder %s72, 5
      %p873 = pnand %p871, %p872
      %p874 = pneg %p873
      // Predicated region
      $region129: #{tpu_custom_call.1} parent=5 // pred_check
        _
      $region130: #{tpu_custom_call.1} parent=5 // pred_check_branch
        %876 = sbr.rel (%p873) target = $region132
      $region131: #{tpu_custom_call.1} parent=5 // pred_region
        %s877 = ssub.s32 %s72, 1
        %p878 = scmp.lt.s32.totalorder %s81, 1
        %s879 = scalar_select %p878, %s81, 1
        %s880 = scalar_lea.vmem %s1, %s879
        %p881 = pneg %p110
        %p882 = pneg %p107
        %p883 = scmp.lt.s32.totalorder %s81, 1
        %s884 = scalar_select %p883, %s81, 1
        %s885 = smul.addr %s884, 3
        %s886 = smul.addr %s885, 4
        %s887 = scalar_lea.vmem %s3, %s886
        %p888 = pneg %p136
        %p889 = pneg %p133
        %p890 = scmp.lt.s32.totalorder %s81, 1
        %s891 = scalar_select %p890, %s81, 1
        %s892 = smul.addr %s891, 8
        %s893 = scalar_lea.vmem %s5, %s892
        %p894 = pneg %p162
        %p895 = pneg %p159
        %p896 = scmp.lt.s32.totalorder %s81, 1
        %s897 = scalar_select %p896, %s81, 1
        %p898 = scmp.lt.s32.totalorder %s82, 1
        %s899 = scalar_select %p898, %s82, 1
        %s900 = smul.addr %s897, 2
        %s901 = sadd.s32 %s899, %s900
        %s902 = smul.addr %s901, 8
        %s903 = scalar_lea.vmem %s7, %s902
        %p904 = pneg %p190
        %p905 = pneg %p187
        %p906 = pneg %p211
        %p907 = pneg %p208
        %p908 = pneg %p232
        %p909 = pneg %p229
        %p910 = pneg %p253
        %p911 = pneg %p250
        %p912 = pneg %p274
        %p913 = pneg %p271
        %p914 = pneg %p295
        %p915 = pneg %p292
        %p916 = pneg %p316
        %p917 = pneg %p313
        %p918 = pneg %p337
        %p919 = pneg %p334
        %p920 = pneg %p358
        %p921 = pneg %p355
        %p922 = pneg %p379
        %p923 = pneg %p376
        %p924 = pneg %p400
        %p925 = pneg %p397
        %p926 = pneg %p421
        %p927 = pneg %p418
        %p928 = pneg %p442
        %p929 = pneg %p439
        %p930 = pneg %p463
        %p931 = pneg %p460
        %p932 = pneg %p484
        %p933 = pneg %p481
        %p934 = pneg %p505
        %p935 = pneg %p502
        %p936 = pneg %p526
        %p937 = pneg %p523
        %p938 = pneg %p547
        %p939 = pneg %p544
        %p940 = pneg %p568
        %p941 = pneg %p565
        %p942 = pneg %p589
        %p943 = pneg %p586
        %p944 = pneg %p610
        %p945 = pneg %p607
        %p946 = pneg %p631
        %p947 = pneg %p628
        %p948 = pneg %p652
        %p949 = pneg %p649
        %p950 = pneg %p673
        %p951 = pneg %p670
        %p952 = pneg %p694
        %p953 = pneg %p691
        %p954 = pneg %p722
        %p955 = pneg %p719
        %s956 = sand.u32 %s709, 1
        %s957 = scalar_lea.sflag [#allocation7], %s956
        %s958 = sand.u32 %s709, 1
        %s959 = smul.addr %s958, 8
        %s960 = scalar_lea.vmem [#allocation6], %s959
        %p961 = pneg %p748
        %p962 = pneg %p745
        %s963 = sand.u32 %s735, 1
        %s964 = scalar_lea.sflag [#allocation9], %s963
        %s965 = sand.u32 %s735, 1
        %s966 = smul.addr %s965, 8
        %s967 = scalar_lea.vmem [#allocation8], %s966
        %p968 = scmp.lt.s32.totalorder %s81, 1
        %s969 = scalar_select %p968, %s81, 1
        %s970 = scalar_lea.vmem %s1, %s969
        %p971 = scmp.lt.s32.totalorder %s81, 1
        %s972 = scalar_select %p971, %s81, 1
        %s973 = smul.addr %s972, 3
        %s974 = smul.addr %s973, 4
        %s975 = scalar_lea.vmem %s3, %s974
        %p976 = scmp.lt.s32.totalorder %s81, 1
        %s977 = scalar_select %p976, %s81, 1
        %s978 = smul.addr %s977, 8
        %s979 = scalar_lea.vmem %s5, %s978
        %p980 = scmp.lt.s32.totalorder %s81, 1
        %s981 = scalar_select %p980, %s81, 1
        %p982 = scmp.lt.s32.totalorder %s82, 1
        %s983 = scalar_select %p982, %s82, 1
        %s984 = smul.addr %s981, 2
        %s985 = sadd.s32 %s983, %s984
        %s986 = smul.addr %s985, 8
        %s987 = scalar_lea.vmem %s7, %s986
        %v989 = vld [vmem:[%s970] sm:$0x1]
        %p990 = scmp.eq.s32.totalorder %s82, 0
        // Predicated region
        $region133: #{tpu_custom_call.1} parent=131 // pred_check
          %p991 = pneg %p990
        $region134: #{tpu_custom_call.1} parent=131 // pred_check_branch
          %993 = sbr.rel (%p991) target = $region136
        $region135: #{tpu_custom_call.1} parent=131 // pred_region
          %v994 = vld [vmem:[%s975] sm:$0xf]
          %v995 = vld [vmem:[%s975 + $0x4] sm:$0xf]
          %v996 = vld [vmem:[%s975 + $0x8] sm:$0xf]
          %v997 = vld [vmem:[%s13] sm:$0xf]
          %v998 = vld [vmem:[%s13 + $0x4] sm:$0xf]
          %v999 = vld [vmem:[%s13 + $0x8] sm:$0xf]
          %v1000 = vld [vmem:[%s13 + $0xc] sm:$0xf]
          %v1001 = vld [vmem:[%s15] sm:$0x1]
          %v1003 = vlaneseq
          %v1004 = vshrl.u32 %v1003, 7
          %v1005 = vsub.s32 0, %v1004
          %v1006 = vrot.slane %v1001, %v1005
          %v1011 = vunpack.c.l.b16 %v994
          %v1012 = vunpack.c.l.b16 %v995
          %v1013 = vunpack.c.l.b16 %v996
          %v1014 = vpack.c.b16 %v1012, %v1011
          %v1015 = vpack.c.b16 %v1013, %v1013
          %v1020 = vunpack.c.l.b16 %v997
          %v1021 = vunpack.c.l.b16 %v998
          %v1022 = vunpack.c.l.b16 %v999
          %v1023 = vunpack.c.l.b16 %v1000
          %v1024 = vpack.c.b16 %v1021, %v1020
          %v1025 = vpack.c.b16 %v1023, %v1022
          %vm1028 = vcmask 261120
          %v1030 = vsel %vm1028, %v1014, 0
          %v1033 = vsel %vm1028, %v1015, 0
          %1035 = vmatprep.subr.bf16.mxu0 0
          %1036 = vmatpush1.bf16.msra.mxu0 0
          %1037 = vmatprep.subr.bf16.mxu0 0
          %1038 = vmatpush1.bf16.msra.mxu0 0
          %1039 = vmatprep.subr.bf16.mxu0 0
          %1040 = vmatpush1.bf16.msra.mxu0 0
          %1041 = vmatprep.subr.bf16.mxu0 0
          %1042 = vmatpush1.bf16.msra.mxu0 0
          %1043 = vmatprep.subr.bf16.mxu0 0
          %1044 = vmatpush1.bf16.msra.mxu0 0
          %1045 = vmatprep.subr.bf16.mxu0 0
          %1046 = vmatpush1.bf16.msra.mxu0 0
          %1047 = vmatprep.subr.bf16.mxu0 0
          %1048 = vmatpush1.bf16.msra.mxu0 %v1025
          %1049 = vmatprep.subr.bf16.mxu0 0
          %1050 = vmatpush1.bf16.msra.mxu0 %v1024
          %1051 = vmatprep.subr.bf16.mxu0 0
          %1052 = vmatpush2.bf16.msra.mxu0 0
          %1053 = vmatprep.subr.bf16.mxu0 0
          %1054 = vmatpush2.bf16.msra.mxu0 0
          %1055 = vmatprep.subr.bf16.mxu0 0
          %1056 = vmatpush2.bf16.msra.mxu0 0
          %1057 = vmatprep.subr.bf16.mxu0 0
          %1058 = vmatpush2.bf16.msra.mxu0 0
          %1059 = vmatprep.subr.bf16.mxu0 0
          %1060 = vmatpush2.bf16.msra.mxu0 0
          %1061 = vmatprep.subr.bf16.mxu0 0
          %1062 = vmatpush2.bf16.msra.mxu0 0
          %1063 = vmatprep.subr.bf16.mxu0 0
          %1064 = vmatpush2.bf16.msra.mxu0 0
          %1065 = vmatprep.subr.bf16.mxu0 0
          %1066 = vmatpush2.bf16.msra.mxu0 0
          %1067 = vmatprep.mubr.bf16.mxu0 0
          %1068 = vmatmul.mubr.bf16.gmra.mxu0 %v1030
          %v1069 = vpop.f32.mrf.mxu0
          %v1070 = vadd.f32 %v1006, %v1069
          %v1071 = vpop.f32.mrf.mxu0
          %v1072 = vpop.f32.mrf.mxu0
          %v1073 = vadd.f32 %v1006, %v1072
          %v1074 = vpop.f32.mrf.mxu0
          %1075 = vmatprep.mubr.bf16.mxu0 0
          %1076 = vmatmul.mubr.bf16.gmra.mxu0 %v1033
          %v1077 = vpop.f32.mrf.mxu0
          %v1078 = vadd.f32 %v1006, %v1077
          %v1079 = vpop.f32.mrf.mxu0
          %v1080 = vpop.f32.mrf.mxu0
          %v1081 = vpop.f32.mrf.mxu0
          %1082 = vdwg.mxu0
          %v1083 = vpack.c.bf16 %v1073, %v1070
          %v1084 = vpack.c.bf16 %v1078, %v1078
          %v1087 = vunpack.c.l.b16 %v1083
          %v1088 = vunpack.c.h.b16 %v1083
          %v1089 = vunpack.c.l.b16 %v1084
          %v1090 = vpack.c.b16 %v1087, %v1087
          %v1091 = vpack.c.b16 %v1088, %v1088
          %v1092 = vpack.c.b16 %v1089, %v1089
          %vm1096 = vcmask 60416
          %1097 = vst.msk [vmem:[#allocation2] sm:$0xf] %vm1096, %v1090
          %1098 = vst.msk [vmem:[#allocation2 + $0x4] sm:$0xf] %vm1096, %v1091
          %1099 = vst.msk [vmem:[#allocation2 + $0x8] sm:$0xf] %vm1096, %v1092
          %v1100 = vld [vmem:[%s17] sm:$0xf]
          %v1101 = vld [vmem:[%s17 + $0x4] sm:$0xf]
          %v1102 = vld [vmem:[%s17 + $0x8] sm:$0xf]
          %v1103 = vld [vmem:[%s17 + $0xc] sm:$0xf]
          %v1104 = vld [vmem:[%s19] sm:$0x1]
          %v1106 = vlaneseq
          %v1107 = vshrl.u32 %v1106, 7
          %v1108 = vsub.s32 0, %v1107
          %v1109 = vrot.slane %v1104, %v1108
          %v1115 = vunpack.c.l.b16 %v1100
          %v1116 = vunpack.c.l.b16 %v1101
          %v1117 = vunpack.c.l.b16 %v1102
          %v1118 = vunpack.c.l.b16 %v1103
          %v1119 = vpack.c.b16 %v1116, %v1115
          %v1120 = vpack.c.b16 %v1118, %v1117
          %1123 = vmatprep.subr.bf16.mxu0 0
          %1124 = vmatpush1.bf16.msra.mxu0 0
          %1125 = vmatprep.subr.bf16.mxu0 0
          %1126 = vmatpush1.bf16.msra.mxu0 0
          %1127 = vmatprep.subr.bf16.mxu0 0
          %1128 = vmatpush1.bf16.msra.mxu0 0
          %1129 = vmatprep.subr.bf16.mxu0 0
          %1130 = vmatpush1.bf16.msra.mxu0 0
          %1131 = vmatprep.subr.bf16.mxu0 0
          %1132 = vmatpush1.bf16.msra.mxu0 0
          %1133 = vmatprep.subr.bf16.mxu0 0
          %1134 = vmatpush1.bf16.msra.mxu0 0
          %1135 = vmatprep.subr.bf16.mxu0 0
          %1136 = vmatpush1.bf16.msra.mxu0 %v1120
          %1137 = vmatprep.subr.bf16.mxu0 0
          %1138 = vmatpush1.bf16.msra.mxu0 %v1119
          %1139 = vmatprep.subr.bf16.mxu0 0
          %1140 = vmatpush2.bf16.msra.mxu0 0
          %1141 = vmatprep.subr.bf16.mxu0 0
          %1142 = vmatpush2.bf16.msra.mxu0 0
          %1143 = vmatprep.subr.bf16.mxu0 0
          %1144 = vmatpush2.bf16.msra.mxu0 0
          %1145 = vmatprep.subr.bf16.mxu0 0
          %1146 = vmatpush2.bf16.msra.mxu0 0
          %1147 = vmatprep.subr.bf16.mxu0 0
          %1148 = vmatpush2.bf16.msra.mxu0 0
          %1149 = vmatprep.subr.bf16.mxu0 0
          %1150 = vmatpush2.bf16.msra.mxu0 0
          %1151 = vmatprep.subr.bf16.mxu0 0
          %1152 = vmatpush2.bf16.msra.mxu0 0
          %1153 = vmatprep.subr.bf16.mxu0 0
          %1154 = vmatpush2.bf16.msra.mxu0 0
          %1155 = vmatprep.mubr.bf16.mxu0 0
          %1156 = vmatmul.mubr.bf16.gmra.mxu0 %v1030
          %v1157 = vpop.f32.mrf.mxu0
          %v1158 = vadd.f32 %v1109, %v1157
          %v1159 = vpop.f32.mrf.mxu0
          %v1160 = vpop.f32.mrf.mxu0
          %v1161 = vadd.f32 %v1109, %v1160
          %v1162 = vpop.f32.mrf.mxu0
          %1163 = vmatprep.mubr.bf16.mxu0 0
          %1164 = vmatmul.mubr.bf16.gmra.mxu0 %v1033
          %v1165 = vpop.f32.mrf.mxu0
          %v1166 = vadd.f32 %v1109, %v1165
          %v1167 = vpop.f32.mrf.mxu0
          %v1168 = vpop.f32.mrf.mxu0
          %v1169 = vpop.f32.mrf.mxu0
          %1170 = vdwg.mxu0
          %v1171 = vpack.c.bf16 %v1161, %v1158
          %v1172 = vpack.c.bf16 %v1166, %v1166
          %v1175 = vunpack.c.l.b16 %v1171
          %v1176 = vunpack.c.h.b16 %v1171
          %v1177 = vunpack.c.l.b16 %v1172
          %v1178 = vpack.c.b16 %v1175, %v1175
          %v1179 = vpack.c.b16 %v1176, %v1176
          %v1180 = vpack.c.b16 %v1177, %v1177
          %1184 = vst.msk [vmem:[#allocation3] sm:$0xf] %vm1096, %v1178
          %1185 = vst.msk [vmem:[#allocation3 + $0x4] sm:$0xf] %vm1096, %v1179
          %1186 = vst.msk [vmem:[#allocation3 + $0x8] sm:$0xf] %vm1096, %v1180
          %s1187 = scalar_lea.vmem %s13, 16
          %v1188 = vld [vmem:[%s1187] sm:$0xf]
          %v1189 = vld [vmem:[%s1187 + $0x4] sm:$0xf]
          %v1190 = vld [vmem:[%s1187 + $0x8] sm:$0xf]
          %v1191 = vld [vmem:[%s1187 + $0xc] sm:$0xf]
          %s1192 = scalar_lea.vmem %s15, 1
          %v1193 = vld [vmem:[%s1192] sm:$0x1]
          %v1195 = vlaneseq
          %v1196 = vshrl.u32 %v1195, 7
          %v1197 = vsub.s32 0, %v1196
          %v1198 = vrot.slane %v1193, %v1197
          %v1204 = vunpack.c.l.b16 %v1188
          %v1205 = vunpack.c.l.b16 %v1189
          %v1206 = vunpack.c.l.b16 %v1190
          %v1207 = vunpack.c.l.b16 %v1191
          %v1208 = vpack.c.b16 %v1205, %v1204
          %v1209 = vpack.c.b16 %v1207, %v1206
          %1212 = vmatprep.subr.bf16.mxu0 0
          %1213 = vmatpush1.bf16.msra.mxu0 0
          %1214 = vmatprep.subr.bf16.mxu0 0
          %1215 = vmatpush1.bf16.msra.mxu0 0
          %1216 = vmatprep.subr.bf16.mxu0 0
          %1217 = vmatpush1.bf16.msra.mxu0 0
          %1218 = vmatprep.subr.bf16.mxu0 0
          %1219 = vmatpush1.bf16.msra.mxu0 0
          %1220 = vmatprep.subr.bf16.mxu0 0
          %1221 = vmatpush1.bf16.msra.mxu0 0
          %1222 = vmatprep.subr.bf16.mxu0 0
          %1223 = vmatpush1.bf16.msra.mxu0 0
          %1224 = vmatprep.subr.bf16.mxu0 0
          %1225 = vmatpush1.bf16.msra.mxu0 %v1209
          %1226 = vmatprep.subr.bf16.mxu0 0
          %1227 = vmatpush1.bf16.msra.mxu0 %v1208
          %1228 = vmatprep.subr.bf16.mxu0 0
          %1229 = vmatpush2.bf16.msra.mxu0 0
          %1230 = vmatprep.subr.bf16.mxu0 0
          %1231 = vmatpush2.bf16.msra.mxu0 0
          %1232 = vmatprep.subr.bf16.mxu0 0
          %1233 = vmatpush2.bf16.msra.mxu0 0
          %1234 = vmatprep.subr.bf16.mxu0 0
          %1235 = vmatpush2.bf16.msra.mxu0 0
          %1236 = vmatprep.subr.bf16.mxu0 0
          %1237 = vmatpush2.bf16.msra.mxu0 0
          %1238 = vmatprep.subr.bf16.mxu0 0
          %1239 = vmatpush2.bf16.msra.mxu0 0
          %1240 = vmatprep.subr.bf16.mxu0 0
          %1241 = vmatpush2.bf16.msra.mxu0 0
          %1242 = vmatprep.subr.bf16.mxu0 0
          %1243 = vmatpush2.bf16.msra.mxu0 0
          %1244 = vmatprep.mubr.bf16.mxu0 0
          %1245 = vmatmul.mubr.bf16.gmra.mxu0 %v1030
          %v1246 = vpop.f32.mrf.mxu0
          %v1247 = vadd.f32 %v1198, %v1246
          %v1248 = vpop.f32.mrf.mxu0
          %v1249 = vpop.f32.mrf.mxu0
          %v1250 = vadd.f32 %v1198, %v1249
          %v1251 = vpop.f32.mrf.mxu0
          %1252 = vmatprep.mubr.bf16.mxu0 0
          %1253 = vmatmul.mubr.bf16.gmra.mxu0 %v1033
          %v1254 = vpop.f32.mrf.mxu0
          %v1255 = vadd.f32 %v1198, %v1254
          %v1256 = vpop.f32.mrf.mxu0
          %v1257 = vpop.f32.mrf.mxu0
          %v1258 = vpop.f32.mrf.mxu0
          %1259 = vdwg.mxu0
          %v1260 = vpack.c.bf16 %v1250, %v1247
          %v1261 = vpack.c.bf16 %v1255, %v1255
          %v1264 = vunpack.c.l.b16 %v1260
          %v1265 = vunpack.c.h.b16 %v1260
          %v1266 = vunpack.c.l.b16 %v1261
          %v1267 = vpack.c.b16 %v1264, %v1264
          %v1268 = vpack.c.b16 %v1265, %v1265
          %v1269 = vpack.c.b16 %v1266, %v1266
          %s1273 = scalar_lea.vmem [#allocation2], 12
          %1274 = vst.msk [vmem:[%s1273] sm:$0xf] %vm1096, %v1267
          %1275 = vst.msk [vmem:[%s1273 + $0x4] sm:$0xf] %vm1096, %v1268
          %1276 = vst.msk [vmem:[%s1273 + $0x8] sm:$0xf] %vm1096, %v1269
          %s1277 = scalar_lea.vmem %s17, 16
          %v1278 = vld [vmem:[%s1277] sm:$0xf]
          %v1279 = vld [vmem:[%s1277 + $0x4] sm:$0xf]
          %v1280 = vld [vmem:[%s1277 + $0x8] sm:$0xf]
          %v1281 = vld [vmem:[%s1277 + $0xc] sm:$0xf]
          %s1282 = scalar_lea.vmem %s19, 1
          %v1283 = vld [vmem:[%s1282] sm:$0x1]
          %v1285 = vlaneseq
          %v1286 = vshrl.u32 %v1285, 7
          %v1287 = vsub.s32 0, %v1286
          %v1288 = vrot.slane %v1283, %v1287
          %v1294 = vunpack.c.l.b16 %v1278
          %v1295 = vunpack.c.l.b16 %v1279
          %v1296 = vunpack.c.l.b16 %v1280
          %v1297 = vunpack.c.l.b16 %v1281
          %v1298 = vpack.c.b16 %v1295, %v1294
          %v1299 = vpack.c.b16 %v1297, %v1296
          %1302 = vmatprep.subr.bf16.mxu0 0
          %1303 = vmatpush1.bf16.msra.mxu0 0
          %1304 = vmatprep.subr.bf16.mxu0 0
          %1305 = vmatpush1.bf16.msra.mxu0 0
          %1306 = vmatprep.subr.bf16.mxu0 0
          %1307 = vmatpush1.bf16.msra.mxu0 0
          %1308 = vmatprep.subr.bf16.mxu0 0
          %1309 = vmatpush1.bf16.msra.mxu0 0
          %1310 = vmatprep.subr.bf16.mxu0 0
          %1311 = vmatpush1.bf16.msra.mxu0 0
          %1312 = vmatprep.subr.bf16.mxu0 0
          %1313 = vmatpush1.bf16.msra.mxu0 0
          %1314 = vmatprep.subr.bf16.mxu0 0
          %1315 = vmatpush1.bf16.msra.mxu0 %v1299
          %1316 = vmatprep.subr.bf16.mxu0 0
          %1317 = vmatpush1.bf16.msra.mxu0 %v1298
          %1318 = vmatprep.subr.bf16.mxu0 0
          %1319 = vmatpush2.bf16.msra.mxu0 0
          %1320 = vmatprep.subr.bf16.mxu0 0
          %1321 = vmatpush2.bf16.msra.mxu0 0
          %1322 = vmatprep.subr.bf16.mxu0 0
          %1323 = vmatpush2.bf16.msra.mxu0 0
          %1324 = vmatprep.subr.bf16.mxu0 0
          %1325 = vmatpush2.bf16.msra.mxu0 0
          %1326 = vmatprep.subr.bf16.mxu0 0
          %1327 = vmatpush2.bf16.msra.mxu0 0
          %1328 = vmatprep.subr.bf16.mxu0 0
          %1329 = vmatpush2.bf16.msra.mxu0 0
          %1330 = vmatprep.subr.bf16.mxu0 0
          %1331 = vmatpush2.bf16.msra.mxu0 0
          %1332 = vmatprep.subr.bf16.mxu0 0
          %1333 = vmatpush2.bf16.msra.mxu0 0
          %1334 = vmatprep.mubr.bf16.mxu0 0
          %1335 = vmatmul.mubr.bf16.gmra.mxu0 %v1030
          %v1336 = vpop.f32.mrf.mxu0
          %v1337 = vadd.f32 %v1288, %v1336
          %v1338 = vpop.f32.mrf.mxu0
          %v1339 = vpop.f32.mrf.mxu0
          %v1340 = vadd.f32 %v1288, %v1339
          %v1341 = vpop.f32.mrf.mxu0
          %1342 = vmatprep.mubr.bf16.mxu0 0
          %1343 = vmatmul.mubr.bf16.gmra.mxu0 %v1033
          %v1344 = vpop.f32.mrf.mxu0
          %v1345 = vadd.f32 %v1288, %v1344
          %v1346 = vpop.f32.mrf.mxu0
          %v1347 = vpop.f32.mrf.mxu0
          %v1348 = vpop.f32.mrf.mxu0
          %1349 = vdwg.mxu0
          %v1350 = vpack.c.bf16 %v1340, %v1337
          %v1351 = vpack.c.bf16 %v1345, %v1345
          %v1354 = vunpack.c.l.b16 %v1350
          %v1355 = vunpack.c.h.b16 %v1350
          %v1356 = vunpack.c.l.b16 %v1351
          %v1357 = vpack.c.b16 %v1354, %v1354
          %v1358 = vpack.c.b16 %v1355, %v1355
          %v1359 = vpack.c.b16 %v1356, %v1356
          %s1363 = scalar_lea.vmem [#allocation3], 12
          %1364 = vst.msk [vmem:[%s1363] sm:$0xf] %vm1096, %v1357
          %1365 = vst.msk [vmem:[%s1363 + $0x4] sm:$0xf] %vm1096, %v1358
          %1366 = vst.msk [vmem:[%s1363 + $0x8] sm:$0xf] %vm1096, %v1359
          %s1367 = scalar_lea.vmem %s13, 32
          %v1368 = vld [vmem:[%s1367] sm:$0xf]
          %v1369 = vld [vmem:[%s1367 + $0x4] sm:$0xf]
          %v1370 = vld [vmem:[%s1367 + $0x8] sm:$0xf]
          %v1371 = vld [vmem:[%s1367 + $0xc] sm:$0xf]
          %s1372 = scalar_lea.vmem %s15, 2
          %v1373 = vld [vmem:[%s1372] sm:$0x1]
          %v1375 = vlaneseq
          %v1376 = vshrl.u32 %v1375, 7
          %v1377 = vsub.s32 0, %v1376
          %v1378 = vrot.slane %v1373, %v1377
          %v1384 = vunpack.c.l.b16 %v1368
          %v1385 = vunpack.c.l.b16 %v1369
          %v1386 = vunpack.c.l.b16 %v1370
          %v1387 = vunpack.c.l.b16 %v1371
          %v1388 = vpack.c.b16 %v1385, %v1384
          %v1389 = vpack.c.b16 %v1387, %v1386
          %1392 = vmatprep.subr.bf16.mxu0 0
          %1393 = vmatpush1.bf16.msra.mxu0 0
          %1394 = vmatprep.subr.bf16.mxu0 0
          %1395 = vmatpush1.bf16.msra.mxu0 0
          %1396 = vmatprep.subr.bf16.mxu0 0
          %1397 = vmatpush1.bf16.msra.mxu0 0
          %1398 = vmatprep.subr.bf16.mxu0 0
          %1399 = vmatpush1.bf16.msra.mxu0 0
          %1400 = vmatprep.subr.bf16.mxu0 0
          %1401 = vmatpush1.bf16.msra.mxu0 0
          %1402 = vmatprep.subr.bf16.mxu0 0
          %1403 = vmatpush1.bf16.msra.mxu0 0
          %1404 = vmatprep.subr.bf16.mxu0 0
          %1405 = vmatpush1.bf16.msra.mxu0 %v1389
          %1406 = vmatprep.subr.bf16.mxu0 0
          %1407 = vmatpush1.bf16.msra.mxu0 %v1388
          %1408 = vmatprep.subr.bf16.mxu0 0
          %1409 = vmatpush2.bf16.msra.mxu0 0
          %1410 = vmatprep.subr.bf16.mxu0 0
          %1411 = vmatpush2.bf16.msra.mxu0 0
          %1412 = vmatprep.subr.bf16.mxu0 0
          %1413 = vmatpush2.bf16.msra.mxu0 0
          %1414 = vmatprep.subr.bf16.mxu0 0
          %1415 = vmatpush2.bf16.msra.mxu0 0
          %1416 = vmatprep.subr.bf16.mxu0 0
          %1417 = vmatpush2.bf16.msra.mxu0 0
          %1418 = vmatprep.subr.bf16.mxu0 0
          %1419 = vmatpush2.bf16.msra.mxu0 0
          %1420 = vmatprep.subr.bf16.mxu0 0
          %1421 = vmatpush2.bf16.msra.mxu0 0
          %1422 = vmatprep.subr.bf16.mxu0 0
          %1423 = vmatpush2.bf16.msra.mxu0 0
          %1424 = vmatprep.mubr.bf16.mxu0 0
          %1425 = vmatmul.mubr.bf16.gmra.mxu0 %v1030
          %v1426 = vpop.f32.mrf.mxu0
          %v1427 = vadd.f32 %v1378, %v1426
          %v1428 = vpop.f32.mrf.mxu0
          %v1429 = vpop.f32.mrf.mxu0
          %v1430 = vadd.f32 %v1378, %v1429
          %v1431 = vpop.f32.mrf.mxu0
          %1432 = vmatprep.mubr.bf16.mxu0 0
          %1433 = vmatmul.mubr.bf16.gmra.mxu0 %v1033
          %v1434 = vpop.f32.mrf.mxu0
          %v1435 = vadd.f32 %v1378, %v1434
          %v1436 = vpop.f32.mrf.mxu0
          %v1437 = vpop.f32.mrf.mxu0
          %v1438 = vpop.f32.mrf.mxu0
          %1439 = vdwg.mxu0
          %v1440 = vpack.c.bf16 %v1430, %v1427
          %v1441 = vpack.c.bf16 %v1435, %v1435
          %v1444 = vunpack.c.l.b16 %v1440
          %v1445 = vunpack.c.h.b16 %v1440
          %v1446 = vunpack.c.l.b16 %v1441
          %v1447 = vpack.c.b16 %v1444, %v1444
          %v1448 = vpack.c.b16 %v1445, %v1445
          %v1449 = vpack.c.b16 %v1446, %v1446
          %s1453 = scalar_lea.vmem [#allocation2], 24
          %1454 = vst.msk [vmem:[%s1453] sm:$0xf] %vm1096, %v1447
          %1455 = vst.msk [vmem:[%s1453 + $0x4] sm:$0xf] %vm1096, %v1448
          %1456 = vst.msk [vmem:[%s1453 + $0x8] sm:$0xf] %vm1096, %v1449
          %s1457 = scalar_lea.vmem %s17, 32
          %v1458 = vld [vmem:[%s1457] sm:$0xf]
          %v1459 = vld [vmem:[%s1457 + $0x4] sm:$0xf]
          %v1460 = vld [vmem:[%s1457 + $0x8] sm:$0xf]
          %v1461 = vld [vmem:[%s1457 + $0xc] sm:$0xf]
          %s1462 = scalar_lea.vmem %s19, 2
          %v1463 = vld [vmem:[%s1462] sm:$0x1]
          %v1465 = vlaneseq
          %v1466 = vshrl.u32 %v1465, 7
          %v1467 = vsub.s32 0, %v1466
          %v1468 = vrot.slane %v1463, %v1467
          %v1474 = vunpack.c.l.b16 %v1458
          %v1475 = vunpack.c.l.b16 %v1459
          %v1476 = vunpack.c.l.b16 %v1460
          %v1477 = vunpack.c.l.b16 %v1461
          %v1478 = vpack.c.b16 %v1475, %v1474
          %v1479 = vpack.c.b16 %v1477, %v1476
          %1482 = vmatprep.subr.bf16.mxu0 0
          %1483 = vmatpush1.bf16.msra.mxu0 0
          %1484 = vmatprep.subr.bf16.mxu0 0
          %1485 = vmatpush1.bf16.msra.mxu0 0
          %1486 = vmatprep.subr.bf16.mxu0 0
          %1487 = vmatpush1.bf16.msra.mxu0 0
          %1488 = vmatprep.subr.bf16.mxu0 0
          %1489 = vmatpush1.bf16.msra.mxu0 0
          %1490 = vmatprep.subr.bf16.mxu0 0
          %1491 = vmatpush1.bf16.msra.mxu0 0
          %1492 = vmatprep.subr.bf16.mxu0 0
          %1493 = vmatpush1.bf16.msra.mxu0 0
          %1494 = vmatprep.subr.bf16.mxu0 0
          %1495 = vmatpush1.bf16.msra.mxu0 %v1479
          %1496 = vmatprep.subr.bf16.mxu0 0
          %1497 = vmatpush1.bf16.msra.mxu0 %v1478
          %1498 = vmatprep.subr.bf16.mxu0 0
          %1499 = vmatpush2.bf16.msra.mxu0 0
          %1500 = vmatprep.subr.bf16.mxu0 0
          %1501 = vmatpush2.bf16.msra.mxu0 0
          %1502 = vmatprep.subr.bf16.mxu0 0
          %1503 = vmatpush2.bf16.msra.mxu0 0
          %1504 = vmatprep.subr.bf16.mxu0 0
          %1505 = vmatpush2.bf16.msra.mxu0 0
          %1506 = vmatprep.subr.bf16.mxu0 0
          %1507 = vmatpush2.bf16.msra.mxu0 0
          %1508 = vmatprep.subr.bf16.mxu0 0
          %1509 = vmatpush2.bf16.msra.mxu0 0
          %1510 = vmatprep.subr.bf16.mxu0 0
          %1511 = vmatpush2.bf16.msra.mxu0 0
          %1512 = vmatprep.subr.bf16.mxu0 0
          %1513 = vmatpush2.bf16.msra.mxu0 0
          %1514 = vmatprep.mubr.bf16.mxu0 0
          %1515 = vmatmul.mubr.bf16.gmra.mxu0 %v1030
          %v1516 = vpop.f32.mrf.mxu0
          %v1517 = vadd.f32 %v1468, %v1516
          %v1518 = vpop.f32.mrf.mxu0
          %v1519 = vpop.f32.mrf.mxu0
          %v1520 = vadd.f32 %v1468, %v1519
          %v1521 = vpop.f32.mrf.mxu0
          %1522 = vmatprep.mubr.bf16.mxu0 0
          %1523 = vmatmul.mubr.bf16.gmra.mxu0 %v1033
          %v1524 = vpop.f32.mrf.mxu0
          %v1525 = vadd.f32 %v1468, %v1524
          %v1526 = vpop.f32.mrf.mxu0
          %v1527 = vpop.f32.mrf.mxu0
          %v1528 = vpop.f32.mrf.mxu0
          %1529 = vdwg.mxu0
          %v1530 = vpack.c.bf16 %v1520, %v1517
          %v1531 = vpack.c.bf16 %v1525, %v1525
          %v1534 = vunpack.c.l.b16 %v1530
          %v1535 = vunpack.c.h.b16 %v1530
          %v1536 = vunpack.c.l.b16 %v1531
          %v1537 = vpack.c.b16 %v1534, %v1534
          %v1538 = vpack.c.b16 %v1535, %v1535
          %v1539 = vpack.c.b16 %v1536, %v1536
          %s1543 = scalar_lea.vmem [#allocation3], 24
          %1544 = vst.msk [vmem:[%s1543] sm:$0xf] %vm1096, %v1537
          %1545 = vst.msk [vmem:[%s1543 + $0x4] sm:$0xf] %vm1096, %v1538
          %1546 = vst.msk [vmem:[%s1543 + $0x8] sm:$0xf] %vm1096, %v1539
          %s1547 = scalar_lea.vmem %s13, 48
          %v1548 = vld [vmem:[%s1547] sm:$0xf]
          %v1549 = vld [vmem:[%s1547 + $0x4] sm:$0xf]
          %v1550 = vld [vmem:[%s1547 + $0x8] sm:$0xf]
          %v1551 = vld [vmem:[%s1547 + $0xc] sm:$0xf]
          %s1552 = scalar_lea.vmem %s15, 3
          %v1553 = vld [vmem:[%s1552] sm:$0x1]
          %v1555 = vlaneseq
          %v1556 = vshrl.u32 %v1555, 7
          %v1557 = vsub.s32 0, %v1556
          %v1558 = vrot.slane %v1553, %v1557
          %v1564 = vunpack.c.l.b16 %v1548
          %v1565 = vunpack.c.l.b16 %v1549
          %v1566 = vunpack.c.l.b16 %v1550
          %v1567 = vunpack.c.l.b16 %v1551
          %v1568 = vpack.c.b16 %v1565, %v1564
          %v1569 = vpack.c.b16 %v1567, %v1566
          %1572 = vmatprep.subr.bf16.mxu0 0
          %1573 = vmatpush1.bf16.msra.mxu0 0
          %1574 = vmatprep.subr.bf16.mxu0 0
          %1575 = vmatpush1.bf16.msra.mxu0 0
          %1576 = vmatprep.subr.bf16.mxu0 0
          %1577 = vmatpush1.bf16.msra.mxu0 0
          %1578 = vmatprep.subr.bf16.mxu0 0
          %1579 = vmatpush1.bf16.msra.mxu0 0
          %1580 = vmatprep.subr.bf16.mxu0 0
          %1581 = vmatpush1.bf16.msra.mxu0 0
          %1582 = vmatprep.subr.bf16.mxu0 0
          %1583 = vmatpush1.bf16.msra.mxu0 0
          %1584 = vmatprep.subr.bf16.mxu0 0
          %1585 = vmatpush1.bf16.msra.mxu0 %v1569
          %1586 = vmatprep.subr.bf16.mxu0 0
          %1587 = vmatpush1.bf16.msra.mxu0 %v1568
          %1588 = vmatprep.subr.bf16.mxu0 0
          %1589 = vmatpush2.bf16.msra.mxu0 0
          %1590 = vmatprep.subr.bf16.mxu0 0
          %1591 = vmatpush2.bf16.msra.mxu0 0
          %1592 = vmatprep.subr.bf16.mxu0 0
          %1593 = vmatpush2.bf16.msra.mxu0 0
          %1594 = vmatprep.subr.bf16.mxu0 0
          %1595 = vmatpush2.bf16.msra.mxu0 0
          %1596 = vmatprep.subr.bf16.mxu0 0
          %1597 = vmatpush2.bf16.msra.mxu0 0
          %1598 = vmatprep.subr.bf16.mxu0 0
          %1599 = vmatpush2.bf16.msra.mxu0 0
          %1600 = vmatprep.subr.bf16.mxu0 0
          %1601 = vmatpush2.bf16.msra.mxu0 0
          %1602 = vmatprep.subr.bf16.mxu0 0
          %1603 = vmatpush2.bf16.msra.mxu0 0
          %1604 = vmatprep.mubr.bf16.mxu0 0
          %1605 = vmatmul.mubr.bf16.gmra.mxu0 %v1030
          %v1606 = vpop.f32.mrf.mxu0
          %v1607 = vadd.f32 %v1558, %v1606
          %v1608 = vpop.f32.mrf.mxu0
          %v1609 = vpop.f32.mrf.mxu0
          %v1610 = vadd.f32 %v1558, %v1609
          %v1611 = vpop.f32.mrf.mxu0
          %1612 = vmatprep.mubr.bf16.mxu0 0
          %1613 = vmatmul.mubr.bf16.gmra.mxu0 %v1033
          %v1614 = vpop.f32.mrf.mxu0
          %v1615 = vadd.f32 %v1558, %v1614
          %v1616 = vpop.f32.mrf.mxu0
          %v1617 = vpop.f32.mrf.mxu0
          %v1618 = vpop.f32.mrf.mxu0
          %1619 = vdwg.mxu0
          %v1620 = vpack.c.bf16 %v1610, %v1607
          %v1621 = vpack.c.bf16 %v1615, %v1615
          %v1624 = vunpack.c.l.b16 %v1620
          %v1625 = vunpack.c.h.b16 %v1620
          %v1626 = vunpack.c.l.b16 %v1621
          %v1627 = vpack.c.b16 %v1624, %v1624
          %v1628 = vpack.c.b16 %v1625, %v1625
          %v1629 = vpack.c.b16 %v1626, %v1626
          %s1633 = scalar_lea.vmem [#allocation2], 36
          %1634 = vst.msk [vmem:[%s1633] sm:$0xf] %vm1096, %v1627
          %1635 = vst.msk [vmem:[%s1633 + $0x4] sm:$0xf] %vm1096, %v1628
          %1636 = vst.msk [vmem:[%s1633 + $0x8] sm:$0xf] %vm1096, %v1629
          %s1637 = scalar_lea.vmem %s17, 48
          %v1638 = vld [vmem:[%s1637] sm:$0xf]
          %v1639 = vld [vmem:[%s1637 + $0x4] sm:$0xf]
          %v1640 = vld [vmem:[%s1637 + $0x8] sm:$0xf]
          %v1641 = vld [vmem:[%s1637 + $0xc] sm:$0xf]
          %s1642 = scalar_lea.vmem %s19, 3
          %v1643 = vld [vmem:[%s1642] sm:$0x1]
          %v1645 = vlaneseq
          %v1646 = vshrl.u32 %v1645, 7
          %v1647 = vsub.s32 0, %v1646
          %v1648 = vrot.slane %v1643, %v1647
          %v1654 = vunpack.c.l.b16 %v1638
          %v1655 = vunpack.c.l.b16 %v1639
          %v1656 = vunpack.c.l.b16 %v1640
          %v1657 = vunpack.c.l.b16 %v1641
          %v1658 = vpack.c.b16 %v1655, %v1654
          %v1659 = vpack.c.b16 %v1657, %v1656
          %1662 = vmatprep.subr.bf16.mxu0 0
          %1663 = vmatpush1.bf16.msra.mxu0 0
          %1664 = vmatprep.subr.bf16.mxu0 0
          %1665 = vmatpush1.bf16.msra.mxu0 0
          %1666 = vmatprep.subr.bf16.mxu0 0
          %1667 = vmatpush1.bf16.msra.mxu0 0
          %1668 = vmatprep.subr.bf16.mxu0 0
          %1669 = vmatpush1.bf16.msra.mxu0 0
          %1670 = vmatprep.subr.bf16.mxu0 0
          %1671 = vmatpush1.bf16.msra.mxu0 0
          %1672 = vmatprep.subr.bf16.mxu0 0
          %1673 = vmatpush1.bf16.msra.mxu0 0
          %1674 = vmatprep.subr.bf16.mxu0 0
          %1675 = vmatpush1.bf16.msra.mxu0 %v1659
          %1676 = vmatprep.subr.bf16.mxu0 0
          %1677 = vmatpush1.bf16.msra.mxu0 %v1658
          %1678 = vmatprep.subr.bf16.mxu0 0
          %1679 = vmatpush2.bf16.msra.mxu0 0
          %1680 = vmatprep.subr.bf16.mxu0 0
          %1681 = vmatpush2.bf16.msra.mxu0 0
          %1682 = vmatprep.subr.bf16.mxu0 0
          %1683 = vmatpush2.bf16.msra.mxu0 0
          %1684 = vmatprep.subr.bf16.mxu0 0
          %1685 = vmatpush2.bf16.msra.mxu0 0
          %1686 = vmatprep.subr.bf16.mxu0 0
          %1687 = vmatpush2.bf16.msra.mxu0 0
          %1688 = vmatprep.subr.bf16.mxu0 0
          %1689 = vmatpush2.bf16.msra.mxu0 0
          %1690 = vmatprep.subr.bf16.mxu0 0
          %1691 = vmatpush2.bf16.msra.mxu0 0
          %1692 = vmatprep.subr.bf16.mxu0 0
          %1693 = vmatpush2.bf16.msra.mxu0 0
          %1694 = vmatprep.mubr.bf16.mxu0 0
          %1695 = vmatmul.mubr.bf16.gmra.mxu0 %v1030
          %v1696 = vpop.f32.mrf.mxu0
          %v1697 = vadd.f32 %v1648, %v1696
          %v1698 = vpop.f32.mrf.mxu0
          %v1699 = vpop.f32.mrf.mxu0
          %v1700 = vadd.f32 %v1648, %v1699
          %v1701 = vpop.f32.mrf.mxu0
          %1702 = vmatprep.mubr.bf16.mxu0 0
          %1703 = vmatmul.mubr.bf16.gmra.mxu0 %v1033
          %v1704 = vpop.f32.mrf.mxu0
          %v1705 = vadd.f32 %v1648, %v1704
          %v1706 = vpop.f32.mrf.mxu0
          %v1707 = vpop.f32.mrf.mxu0
          %v1708 = vpop.f32.mrf.mxu0
          %1709 = vdwg.mxu0
          %v1710 = vpack.c.bf16 %v1700, %v1697
          %v1711 = vpack.c.bf16 %v1705, %v1705
          %v1714 = vunpack.c.l.b16 %v1710
          %v1715 = vunpack.c.h.b16 %v1710
          %v1716 = vunpack.c.l.b16 %v1711
          %v1717 = vpack.c.b16 %v1714, %v1714
          %v1718 = vpack.c.b16 %v1715, %v1715
          %v1719 = vpack.c.b16 %v1716, %v1716
          %s1723 = scalar_lea.vmem [#allocation3], 36
          %1724 = vst.msk [vmem:[%s1723] sm:$0xf] %vm1096, %v1717
          %1725 = vst.msk [vmem:[%s1723 + $0x4] sm:$0xf] %vm1096, %v1718
          %1726 = vst.msk [vmem:[%s1723 + $0x8] sm:$0xf] %vm1096, %v1719
          %v1727 = vld [vmem:[%s9] sm:$0xf]
          %v1728 = vld [vmem:[%s9 + $0x4] sm:$0xf]
          %v1729 = vld [vmem:[%s9 + $0x8] sm:$0xf]
          %v1730 = vld [vmem:[%s9 + $0xc] sm:$0xf]
          %v1731 = vld [vmem:[%s11] sm:$0x1]
          %v1733 = vlaneseq
          %v1734 = vshrl.u32 %v1733, 7
          %v1735 = vsub.s32 0, %v1734
          %v1736 = vrot.slane %v1731, %v1735
          %v1742 = vunpack.c.l.b16 %v1727
          %v1743 = vunpack.c.l.b16 %v1728
          %v1744 = vunpack.c.l.b16 %v1729
          %v1745 = vunpack.c.l.b16 %v1730
          %v1746 = vpack.c.b16 %v1743, %v1742
          %v1747 = vpack.c.b16 %v1745, %v1744
          %v1751 = vsel %vm1028, %v994, 0
          %1753 = vmatprep.subr.bf16.mxu0 0
          %1754 = vmatpush1.bf16.msra.mxu0 0
          %1755 = vmatprep.subr.bf16.mxu0 0
          %1756 = vmatpush1.bf16.msra.mxu0 0
          %1757 = vmatprep.subr.bf16.mxu0 0
          %1758 = vmatpush1.bf16.msra.mxu0 0
          %1759 = vmatprep.subr.bf16.mxu0 0
          %1760 = vmatpush1.bf16.msra.mxu0 0
          %1761 = vmatprep.subr.bf16.mxu0 0
          %1762 = vmatpush1.bf16.msra.mxu0 0
          %1763 = vmatprep.subr.bf16.mxu0 0
          %1764 = vmatpush1.bf16.msra.mxu0 0
          %1765 = vmatprep.subr.bf16.mxu0 0
          %1766 = vmatpush1.bf16.msra.mxu0 %v1747
          %1767 = vmatprep.subr.bf16.mxu0 0
          %1768 = vmatpush1.bf16.msra.mxu0 %v1746
          %1769 = vmatprep.subr.bf16.mxu0 0
          %1770 = vmatpush2.bf16.msra.mxu0 0
          %1771 = vmatprep.subr.bf16.mxu0 0
          %1772 = vmatpush2.bf16.msra.mxu0 0
          %1773 = vmatprep.subr.bf16.mxu0 0
          %1774 = vmatpush2.bf16.msra.mxu0 0
          %1775 = vmatprep.subr.bf16.mxu0 0
          %1776 = vmatpush2.bf16.msra.mxu0 0
          %1777 = vmatprep.subr.bf16.mxu0 0
          %1778 = vmatpush2.bf16.msra.mxu0 0
          %1779 = vmatprep.subr.bf16.mxu0 0
          %1780 = vmatpush2.bf16.msra.mxu0 0
          %1781 = vmatprep.subr.bf16.mxu0 0
          %1782 = vmatpush2.bf16.msra.mxu0 0
          %1783 = vmatprep.subr.bf16.mxu0 0
          %1784 = vmatpush2.bf16.msra.mxu0 0
          %1785 = vmatprep.mubr.bf16.mxu0 0
          %1786 = vmatmul.mubr.bf16.gmra.mxu0 %v1751
          %v1787 = vpop.f32.mrf.mxu0
          %v1788 = vadd.f32 %v1736, %v1787
          %v1789 = vpop.f32.mrf.mxu0
          %v1790 = vpop.f32.mrf.mxu0
          %v1791 = vpop.f32.mrf.mxu0
          %1792 = vdwg.mxu0
          %v1793 = vpack.c.bf16 %v1788, %v1788
          %1794 = vst.msk [vmem:[#allocation5] sm:$0xf] %vm1096, %v1793
          %s1795 = scalar_lea.vmem %s9, 16
          %v1796 = vld [vmem:[%s1795] sm:$0xf]
          %v1797 = vld [vmem:[%s1795 + $0x4] sm:$0xf]
          %v1798 = vld [vmem:[%s1795 + $0x8] sm:$0xf]
          %v1799 = vld [vmem:[%s1795 + $0xc] sm:$0xf]
          %s1800 = scalar_lea.vmem %s11, 1
          %v1801 = vld [vmem:[%s1800] sm:$0x1]
          %v1803 = vlaneseq
          %v1804 = vshrl.u32 %v1803, 7
          %v1805 = vsub.s32 0, %v1804
          %v1806 = vrot.slane %v1801, %v1805
          %v1812 = vunpack.c.l.b16 %v1796
          %v1813 = vunpack.c.l.b16 %v1797
          %v1814 = vunpack.c.l.b16 %v1798
          %v1815 = vunpack.c.l.b16 %v1799
          %v1816 = vpack.c.b16 %v1813, %v1812
          %v1817 = vpack.c.b16 %v1815, %v1814
          %1820 = vmatprep.subr.bf16.mxu0 0
          %1821 = vmatpush1.bf16.msra.mxu0 0
          %1822 = vmatprep.subr.bf16.mxu0 0
          %1823 = vmatpush1.bf16.msra.mxu0 0
          %1824 = vmatprep.subr.bf16.mxu0 0
          %1825 = vmatpush1.bf16.msra.mxu0 0
          %1826 = vmatprep.subr.bf16.mxu0 0
          %1827 = vmatpush1.bf16.msra.mxu0 0
          %1828 = vmatprep.subr.bf16.mxu0 0
          %1829 = vmatpush1.bf16.msra.mxu0 0
          %1830 = vmatprep.subr.bf16.mxu0 0
          %1831 = vmatpush1.bf16.msra.mxu0 0
          %1832 = vmatprep.subr.bf16.mxu0 0
          %1833 = vmatpush1.bf16.msra.mxu0 %v1817
          %1834 = vmatprep.subr.bf16.mxu0 0
          %1835 = vmatpush1.bf16.msra.mxu0 %v1816
          %1836 = vmatprep.subr.bf16.mxu0 0
          %1837 = vmatpush2.bf16.msra.mxu0 0
          %1838 = vmatprep.subr.bf16.mxu0 0
          %1839 = vmatpush2.bf16.msra.mxu0 0
          %1840 = vmatprep.subr.bf16.mxu0 0
          %1841 = vmatpush2.bf16.msra.mxu0 0
          %1842 = vmatprep.subr.bf16.mxu0 0
          %1843 = vmatpush2.bf16.msra.mxu0 0
          %1844 = vmatprep.subr.bf16.mxu0 0
          %1845 = vmatpush2.bf16.msra.mxu0 0
          %1846 = vmatprep.subr.bf16.mxu0 0
          %1847 = vmatpush2.bf16.msra.mxu0 0
          %1848 = vmatprep.subr.bf16.mxu0 0
          %1849 = vmatpush2.bf16.msra.mxu0 0
          %1850 = vmatprep.subr.bf16.mxu0 0
          %1851 = vmatpush2.bf16.msra.mxu0 0
          %1852 = vmatprep.mubr.bf16.mxu0 0
          %1853 = vmatmul.mubr.bf16.gmra.mxu0 %v1751
          %v1854 = vpop.f32.mrf.mxu0
          %v1855 = vadd.f32 %v1806, %v1854
          %v1856 = vpop.f32.mrf.mxu0
          %v1857 = vpop.f32.mrf.mxu0
          %v1858 = vpop.f32.mrf.mxu0
          %1859 = vdwg.mxu0
          %v1860 = vpack.c.bf16 %v1855, %v1855
          %s1861 = scalar_lea.vmem [#allocation5], 4
          %1862 = vst.msk [vmem:[%s1861] sm:$0xf] %vm1096, %v1860
          %s1863 = scalar_lea.vmem %s9, 32
          %v1864 = vld [vmem:[%s1863] sm:$0xf]
          %v1865 = vld [vmem:[%s1863 + $0x4] sm:$0xf]
          %v1866 = vld [vmem:[%s1863 + $0x8] sm:$0xf]
          %v1867 = vld [vmem:[%s1863 + $0xc] sm:$0xf]
          %s1868 = scalar_lea.vmem %s11, 2
          %v1869 = vld [vmem:[%s1868] sm:$0x1]
          %v1871 = vlaneseq
          %v1872 = vshrl.u32 %v1871, 7
          %v1873 = vsub.s32 0, %v1872
          %v1874 = vrot.slane %v1869, %v1873
          %v1880 = vunpack.c.l.b16 %v1864
          %v1881 = vunpack.c.l.b16 %v1865
          %v1882 = vunpack.c.l.b16 %v1866
          %v1883 = vunpack.c.l.b16 %v1867
          %v1884 = vpack.c.b16 %v1881, %v1880
          %v1885 = vpack.c.b16 %v1883, %v1882
          %1888 = vmatprep.subr.bf16.mxu0 0
          %1889 = vmatpush1.bf16.msra.mxu0 0
          %1890 = vmatprep.subr.bf16.mxu0 0
          %1891 = vmatpush1.bf16.msra.mxu0 0
          %1892 = vmatprep.subr.bf16.mxu0 0
          %1893 = vmatpush1.bf16.msra.mxu0 0
          %1894 = vmatprep.subr.bf16.mxu0 0
          %1895 = vmatpush1.bf16.msra.mxu0 0
          %1896 = vmatprep.subr.bf16.mxu0 0
          %1897 = vmatpush1.bf16.msra.mxu0 0
          %1898 = vmatprep.subr.bf16.mxu0 0
          %1899 = vmatpush1.bf16.msra.mxu0 0
          %1900 = vmatprep.subr.bf16.mxu0 0
          %1901 = vmatpush1.bf16.msra.mxu0 %v1885
          %1902 = vmatprep.subr.bf16.mxu0 0
          %1903 = vmatpush1.bf16.msra.mxu0 %v1884
          %1904 = vmatprep.subr.bf16.mxu0 0
          %1905 = vmatpush2.bf16.msra.mxu0 0
          %1906 = vmatprep.subr.bf16.mxu0 0
          %1907 = vmatpush2.bf16.msra.mxu0 0
          %1908 = vmatprep.subr.bf16.mxu0 0
          %1909 = vmatpush2.bf16.msra.mxu0 0
          %1910 = vmatprep.subr.bf16.mxu0 0
          %1911 = vmatpush2.bf16.msra.mxu0 0
          %1912 = vmatprep.subr.bf16.mxu0 0
          %1913 = vmatpush2.bf16.msra.mxu0 0
          %1914 = vmatprep.subr.bf16.mxu0 0
          %1915 = vmatpush2.bf16.msra.mxu0 0
          %1916 = vmatprep.subr.bf16.mxu0 0
          %1917 = vmatpush2.bf16.msra.mxu0 0
          %1918 = vmatprep.subr.bf16.mxu0 0
          %1919 = vmatpush2.bf16.msra.mxu0 0
          %1920 = vmatprep.mubr.bf16.mxu0 0
          %1921 = vmatmul.mubr.bf16.gmra.mxu0 %v1751
          %v1922 = vpop.f32.mrf.mxu0
          %v1923 = vadd.f32 %v1874, %v1922
          %v1924 = vpop.f32.mrf.mxu0
          %v1925 = vpop.f32.mrf.mxu0
          %v1926 = vpop.f32.mrf.mxu0
          %1927 = vdwg.mxu0
          %v1928 = vpack.c.bf16 %v1923, %v1923
          %s1929 = scalar_lea.vmem [#allocation5], 8
          %1930 = vst.msk [vmem:[%s1929] sm:$0xf] %vm1096, %v1928
          %s1931 = scalar_lea.vmem %s9, 48
          %v1932 = vld [vmem:[%s1931] sm:$0xf]
          %v1933 = vld [vmem:[%s1931 + $0x4] sm:$0xf]
          %v1934 = vld [vmem:[%s1931 + $0x8] sm:$0xf]
          %v1935 = vld [vmem:[%s1931 + $0xc] sm:$0xf]
          %s1936 = scalar_lea.vmem %s11, 3
          %v1937 = vld [vmem:[%s1936] sm:$0x1]
          %v1939 = vlaneseq
          %v1940 = vshrl.u32 %v1939, 7
          %v1941 = vsub.s32 0, %v1940
          %v1942 = vrot.slane %v1937, %v1941
          %v1948 = vunpack.c.l.b16 %v1932
          %v1949 = vunpack.c.l.b16 %v1933
          %v1950 = vunpack.c.l.b16 %v1934
          %v1951 = vunpack.c.l.b16 %v1935
          %v1952 = vpack.c.b16 %v1949, %v1948
          %v1953 = vpack.c.b16 %v1951, %v1950
          %1956 = vmatprep.subr.bf16.mxu0 0
          %1957 = vmatpush1.bf16.msra.mxu0 0
          %1958 = vmatprep.subr.bf16.mxu0 0
          %1959 = vmatpush1.bf16.msra.mxu0 0
          %1960 = vmatprep.subr.bf16.mxu0 0
          %1961 = vmatpush1.bf16.msra.mxu0 0
          %1962 = vmatprep.subr.bf16.mxu0 0
          %1963 = vmatpush1.bf16.msra.mxu0 0
          %1964 = vmatprep.subr.bf16.mxu0 0
          %1965 = vmatpush1.bf16.msra.mxu0 0
          %1966 = vmatprep.subr.bf16.mxu0 0
          %1967 = vmatpush1.bf16.msra.mxu0 0
          %1968 = vmatprep.subr.bf16.mxu0 0
          %1969 = vmatpush1.bf16.msra.mxu0 %v1953
          %1970 = vmatprep.subr.bf16.mxu0 0
          %1971 = vmatpush1.bf16.msra.mxu0 %v1952
          %1972 = vmatprep.subr.bf16.mxu0 0
          %1973 = vmatpush2.bf16.msra.mxu0 0
          %1974 = vmatprep.subr.bf16.mxu0 0
          %1975 = vmatpush2.bf16.msra.mxu0 0
          %1976 = vmatprep.subr.bf16.mxu0 0
          %1977 = vmatpush2.bf16.msra.mxu0 0
          %1978 = vmatprep.subr.bf16.mxu0 0
          %1979 = vmatpush2.bf16.msra.mxu0 0
          %1980 = vmatprep.subr.bf16.mxu0 0
          %1981 = vmatpush2.bf16.msra.mxu0 0
          %1982 = vmatprep.subr.bf16.mxu0 0
          %1983 = vmatpush2.bf16.msra.mxu0 0
          %1984 = vmatprep.subr.bf16.mxu0 0
          %1985 = vmatpush2.bf16.msra.mxu0 0
          %1986 = vmatprep.subr.bf16.mxu0 0
          %1987 = vmatpush2.bf16.msra.mxu0 0
          %1988 = vmatprep.mubr.bf16.mxu0 0
          %1989 = vmatmul.mubr.bf16.gmra.mxu0 %v1751
          %v1990 = vpop.f32.mrf.mxu0
          %v1991 = vadd.f32 %v1942, %v1990
          %v1992 = vpop.f32.mrf.mxu0
          %v1993 = vpop.f32.mrf.mxu0
          %v1994 = vpop.f32.mrf.mxu0
          %1995 = vdwg.mxu0
          %v1996 = vpack.c.bf16 %v1991, %v1991
          %s1997 = scalar_lea.vmem [#allocation5], 12
          %1998 = vst.msk [vmem:[%s1997] sm:$0xf] %vm1096, %v1996
          %v1999 = vld [vmem:[#allocation5] sm:$0xf]
          %v2000 = vld [vmem:[#allocation5 + $0x4] sm:$0xf]
          %v2001 = vld [vmem:[#allocation5 + $0x8] sm:$0xf]
          %v2002 = vld [vmem:[#allocation5 + $0xc] sm:$0xf]
          %v2003 = vld [vmem:[#allocation2] sm:$0xf]
          %v2004 = vld [vmem:[#allocation2 + $0x4] sm:$0xf]
          %v2005 = vld [vmem:[#allocation2 + $0x8] sm:$0xf]
          %v2006 = vld [vmem:[#allocation2 + $0xc] sm:$0xf]
          %v2007 = vld [vmem:[#allocation2 + $0x10] sm:$0xf]
          %v2008 = vld [vmem:[#allocation2 + $0x14] sm:$0xf]
          %v2009 = vld [vmem:[#allocation2 + $0x18] sm:$0xf]
          %v2010 = vld [vmem:[#allocation2 + $0x1c] sm:$0xf]
          %v2011 = vld [vmem:[#allocation2 + $0x20] sm:$0xf]
          %v2012 = vld [vmem:[#allocation2 + $0x24] sm:$0xf]
          %v2013 = vld [vmem:[#allocation2 + $0x28] sm:$0xf]
          %v2014 = vld [vmem:[#allocation2 + $0x2c] sm:$0xf]
          %v2016 = vlaneseq
          %v2017 = vshrl.u32 %v2016, 7
          %v2018 = vsub.s32 0, %v2017
          %v2019 = vrot.slane %v989, %v2018
          %v2024 = vunpack.c.l.b16 %v2003
          %v2025 = vunpack.c.l.b16 %v2004
          %v2026 = vunpack.c.l.b16 %v2005
          %v2027 = vpack.c.b16 %v2025, %v2024
          %v2028 = vpack.c.b16 %v2026, %v2026
          %vm2029 = vcmask 64512
          %v2031 = vsel %vm2029, %v1999, 0
          %v2034 = vsel %vm2029, %v2027, 0
          %v2037 = vsel %vm2029, %v2028, 0
          %2039 = vmatprep.subr.bf16.mxu0 0
          %2040 = vmatpush1.bf16.xpose.msra.mxu0 0
          %2041 = vmatprep.subr.bf16.mxu0 0
          %2042 = vmatpush1.bf16.xpose.msra.mxu0 0
          %2043 = vmatprep.subr.bf16.mxu0 0
          %2044 = vmatpush1.bf16.xpose.msra.mxu0 0
          %2045 = vmatprep.subr.bf16.mxu0 0
          %2046 = vmatpush1.bf16.xpose.msra.mxu0 0
          %2047 = vmatprep.subr.bf16.mxu0 0
          %2048 = vmatpush1.bf16.xpose.msra.mxu0 0
          %2049 = vmatprep.subr.bf16.mxu0 0
          %2050 = vmatpush1.bf16.xpose.msra.mxu0 0
          %2051 = vmatprep.subr.bf16.mxu0 0
          %2052 = vmatpush1.bf16.xpose.msra.mxu0 %v2037
          %2053 = vmatprep.subr.bf16.mxu0 0
          %2054 = vmatpush1.bf16.xpose.msra.mxu0 %v2034
          %2055 = vmatprep.subr.bf16.mxu0 0
          %2056 = vmatpush2.bf16.xpose.msra.mxu0 0
          %2057 = vmatprep.subr.bf16.mxu0 0
          %2058 = vmatpush2.bf16.xpose.msra.mxu0 0
          %2059 = vmatprep.subr.bf16.mxu0 0
          %2060 = vmatpush2.bf16.xpose.msra.mxu0 0
          %2061 = vmatprep.subr.bf16.mxu0 0
          %2062 = vmatpush2.bf16.xpose.msra.mxu0 0
          %2063 = vmatprep.subr.bf16.mxu0 0
          %2064 = vmatpush2.bf16.xpose.msra.mxu0 0
          %2065 = vmatprep.subr.bf16.mxu0 0
          %2066 = vmatpush2.bf16.xpose.msra.mxu0 0
          %2067 = vmatprep.subr.bf16.mxu0 0
          %2068 = vmatpush2.bf16.xpose.msra.mxu0 0
          %2069 = vmatprep.subr.bf16.mxu0 0
          %2070 = vmatpush2.bf16.xpose.msra.mxu0 0
          %2071 = vmatprep.mubr.bf16.mxu0 0
          %2072 = vmatmul.mubr.bf16.gmra.mxu0 %v2031
          %v2073 = vpop.f32.mrf.mxu0
          %v2074 = vadd.f32 %v2019, %v2073
          %v2075 = vpop.f32.mrf.mxu0
          %v2076 = vpop.f32.mrf.mxu0
          %v2077 = vpop.f32.mrf.mxu0
          %2078 = vdwg.mxu0
          %v2082 = vunpack.c.l.b16 %v2006
          %v2083 = vunpack.c.l.b16 %v2007
          %v2084 = vunpack.c.l.b16 %v2008
          %v2085 = vpack.c.b16 %v2083, %v2082
          %v2086 = vpack.c.b16 %v2084, %v2084
          %v2088 = vsel %vm2029, %v2000, 0
          %v2091 = vsel %vm2029, %v2085, 0
          %v2094 = vsel %vm2029, %v2086, 0
          %2096 = vmatprep.subr.bf16.mxu0 0
          %2097 = vmatpush1.bf16.xpose.msra.mxu0 0
          %2098 = vmatprep.subr.bf16.mxu0 0
          %2099 = vmatpush1.bf16.xpose.msra.mxu0 0
          %2100 = vmatprep.subr.bf16.mxu0 0
          %2101 = vmatpush1.bf16.xpose.msra.mxu0 0
          %2102 = vmatprep.subr.bf16.mxu0 0
          %2103 = vmatpush1.bf16.xpose.msra.mxu0 0
          %2104 = vmatprep.subr.bf16.mxu0 0
          %2105 = vmatpush1.bf16.xpose.msra.mxu0 0
          %2106 = vmatprep.subr.bf16.mxu0 0
          %2107 = vmatpush1.bf16.xpose.msra.mxu0 0
          %2108 = vmatprep.subr.bf16.mxu0 0
          %2109 = vmatpush1.bf16.xpose.msra.mxu0 %v2094
          %2110 = vmatprep.subr.bf16.mxu0 0
          %2111 = vmatpush1.bf16.xpose.msra.mxu0 %v2091
          %2112 = vmatprep.subr.bf16.mxu0 0
          %2113 = vmatpush2.bf16.xpose.msra.mxu0 0
          %2114 = vmatprep.subr.bf16.mxu0 0
          %2115 = vmatpush2.bf16.xpose.msra.mxu0 0
          %2116 = vmatprep.subr.bf16.mxu0 0
          %2117 = vmatpush2.bf16.xpose.msra.mxu0 0
          %2118 = vmatprep.subr.bf16.mxu0 0
          %2119 = vmatpush2.bf16.xpose.msra.mxu0 0
          %2120 = vmatprep.subr.bf16.mxu0 0
          %2121 = vmatpush2.bf16.xpose.msra.mxu0 0
          %2122 = vmatprep.subr.bf16.mxu0 0
          %2123 = vmatpush2.bf16.xpose.msra.mxu0 0
          %2124 = vmatprep.subr.bf16.mxu0 0
          %2125 = vmatpush2.bf16.xpose.msra.mxu0 0
          %2126 = vmatprep.subr.bf16.mxu0 0
          %2127 = vmatpush2.bf16.xpose.msra.mxu0 0
          %2128 = vmatprep.mubr.bf16.mxu0 0
          %2129 = vmatmul.mubr.bf16.gmra.mxu0 %v2088
          %v2130 = vpop.f32.mrf.mxu0
          %v2131 = vadd.f32 %v2019, %v2130
          %v2132 = vpop.f32.mrf.mxu0
          %v2133 = vpop.f32.mrf.mxu0
          %v2134 = vpop.f32.mrf.mxu0
          %2135 = vdwg.mxu0
          %v2139 = vunpack.c.l.b16 %v2009
          %v2140 = vunpack.c.l.b16 %v2010
          %v2141 = vunpack.c.l.b16 %v2011
          %v2142 = vpack.c.b16 %v2140, %v2139
          %v2143 = vpack.c.b16 %v2141, %v2141
          %v2145 = vsel %vm2029, %v2001, 0
          %v2148 = vsel %vm2029, %v2142, 0
          %v2151 = vsel %vm2029, %v2143, 0
          %2153 = vmatprep.subr.bf16.mxu0 0
          %2154 = vmatpush1.bf16.xpose.msra.mxu0 0
          %2155 = vmatprep.subr.bf16.mxu0 0
          %2156 = vmatpush1.bf16.xpose.msra.mxu0 0
          %2157 = vmatprep.subr.bf16.mxu0 0
          %2158 = vmatpush1.bf16.xpose.msra.mxu0 0
          %2159 = vmatprep.subr.bf16.mxu0 0
          %2160 = vmatpush1.bf16.xpose.msra.mxu0 0
          %2161 = vmatprep.subr.bf16.mxu0 0
          %2162 = vmatpush1.bf16.xpose.msra.mxu0 0
          %2163 = vmatprep.subr.bf16.mxu0 0
          %2164 = vmatpush1.bf16.xpose.msra.mxu0 0
          %2165 = vmatprep.subr.bf16.mxu0 0
          %2166 = vmatpush1.bf16.xpose.msra.mxu0 %v2151
          %2167 = vmatprep.subr.bf16.mxu0 0
          %2168 = vmatpush1.bf16.xpose.msra.mxu0 %v2148
          %2169 = vmatprep.subr.bf16.mxu0 0
          %2170 = vmatpush2.bf16.xpose.msra.mxu0 0
          %2171 = vmatprep.subr.bf16.mxu0 0
          %2172 = vmatpush2.bf16.xpose.msra.mxu0 0
          %2173 = vmatprep.subr.bf16.mxu0 0
          %2174 = vmatpush2.bf16.xpose.msra.mxu0 0
          %2175 = vmatprep.subr.bf16.mxu0 0
          %2176 = vmatpush2.bf16.xpose.msra.mxu0 0
          %2177 = vmatprep.subr.bf16.mxu0 0
          %2178 = vmatpush2.bf16.xpose.msra.mxu0 0
          %2179 = vmatprep.subr.bf16.mxu0 0
          %2180 = vmatpush2.bf16.xpose.msra.mxu0 0
          %2181 = vmatprep.subr.bf16.mxu0 0
          %2182 = vmatpush2.bf16.xpose.msra.mxu0 0
          %2183 = vmatprep.subr.bf16.mxu0 0
          %2184 = vmatpush2.bf16.xpose.msra.mxu0 0
          %2185 = vmatprep.mubr.bf16.mxu0 0
          %2186 = vmatmul.mubr.bf16.gmra.mxu0 %v2145
          %v2187 = vpop.f32.mrf.mxu0
          %v2188 = vadd.f32 %v2019, %v2187
          %v2189 = vpop.f32.mrf.mxu0
          %v2190 = vpop.f32.mrf.mxu0
          %v2191 = vpop.f32.mrf.mxu0
          %2192 = vdwg.mxu0
          %v2196 = vunpack.c.l.b16 %v2012
          %v2197 = vunpack.c.l.b16 %v2013
          %v2198 = vunpack.c.l.b16 %v2014
          %v2199 = vpack.c.b16 %v2197, %v2196
          %v2200 = vpack.c.b16 %v2198, %v2198
          %v2202 = vsel %vm2029, %v2002, 0
          %v2205 = vsel %vm2029, %v2199, 0
          %v2208 = vsel %vm2029, %v2200, 0
          %2210 = vmatprep.subr.bf16.mxu0 0
          %2211 = vmatpush1.bf16.xpose.msra.mxu0 0
          %2212 = vmatprep.subr.bf16.mxu0 0
          %2213 = vmatpush1.bf16.xpose.msra.mxu0 0
          %2214 = vmatprep.subr.bf16.mxu0 0
          %2215 = vmatpush1.bf16.xpose.msra.mxu0 0
          %2216 = vmatprep.subr.bf16.mxu0 0
          %2217 = vmatpush1.bf16.xpose.msra.mxu0 0
          %2218 = vmatprep.subr.bf16.mxu0 0
          %2219 = vmatpush1.bf16.xpose.msra.mxu0 0
          %2220 = vmatprep.subr.bf16.mxu0 0
          %2221 = vmatpush1.bf16.xpose.msra.mxu0 0
          %2222 = vmatprep.subr.bf16.mxu0 0
          %2223 = vmatpush1.bf16.xpose.msra.mxu0 %v2208
          %2224 = vmatprep.subr.bf16.mxu0 0
          %2225 = vmatpush1.bf16.xpose.msra.mxu0 %v2205
          %2226 = vmatprep.subr.bf16.mxu0 0
          %2227 = vmatpush2.bf16.xpose.msra.mxu0 0
          %2228 = vmatprep.subr.bf16.mxu0 0
          %2229 = vmatpush2.bf16.xpose.msra.mxu0 0
          %2230 = vmatprep.subr.bf16.mxu0 0
          %2231 = vmatpush2.bf16.xpose.msra.mxu0 0
          %2232 = vmatprep.subr.bf16.mxu0 0
          %2233 = vmatpush2.bf16.xpose.msra.mxu0 0
          %2234 = vmatprep.subr.bf16.mxu0 0
          %2235 = vmatpush2.bf16.xpose.msra.mxu0 0
          %2236 = vmatprep.subr.bf16.mxu0 0
          %2237 = vmatpush2.bf16.xpose.msra.mxu0 0
          %2238 = vmatprep.subr.bf16.mxu0 0
          %2239 = vmatpush2.bf16.xpose.msra.mxu0 0
          %2240 = vmatprep.subr.bf16.mxu0 0
          %2241 = vmatpush2.bf16.xpose.msra.mxu0 0
          %2242 = vmatprep.mubr.bf16.mxu0 0
          %2243 = vmatmul.mubr.bf16.gmra.mxu0 %v2202
          %v2244 = vpop.f32.mrf.mxu0
          %v2245 = vadd.f32 %v2019, %v2244
          %v2246 = vpop.f32.mrf.mxu0
          %v2247 = vpop.f32.mrf.mxu0
          %v2248 = vpop.f32.mrf.mxu0
          %2249 = vdwg.mxu0
          %vm2250 = vcmask 195584
          %v2251 = vsel %vm2250, %v2074, -inf
          %2252 = vmax.xlane.f32.xlu0 %v2251
          %v2253 = vpop.xlane.xlu0 %2252
          %v2254 = vsel %vm2250, %v2131, -inf
          %2255 = vmax.xlane.f32.xlu0 %v2254
          %v2256 = vpop.xlane.xlu0 %2255
          %v2257 = vsel %vm2250, %v2188, -inf
          %2258 = vmax.xlane.f32.xlu0 %v2257
          %v2259 = vpop.xlane.xlu0 %2258
          %v2260 = vsel %vm2250, %v2245, -inf
          %2261 = vmax.xlane.f32.xlu0 %v2260
          %v2262 = vpop.xlane.xlu0 %2261
          %v2263 = vsub.f32 %v2074, %v2253
          %v2264 = vsub.f32 %v2131, %v2256
          %v2265 = vsub.f32 %v2188, %v2259
          %v2266 = vsub.f32 %v2245, %v2262
          %v2267 = vmul.f32 %v2263, 1.442695
          %v2268 = vpow.pop %v2267
          %v2269 = vmul.f32 %v2264, 1.442695
          %v2270 = vpow.pop %v2269
          %v2271 = vmul.f32 %v2265, 1.442695
          %v2272 = vpow.pop %v2271
          %v2273 = vmul.f32 %v2266, 1.442695
          %v2274 = vpow.pop %v2273
          %v2275 = vsel %vm2250, %v2268, 0.0
          %2276 = vadd.xlane.f32.xlu0 %v2275
          %v2277 = vpop.xlane.xlu0 %2276
          %v2278 = vsel %vm2250, %v2270, 0.0
          %2279 = vadd.xlane.f32.xlu0 %v2278
          %v2280 = vpop.xlane.xlu0 %2279
          %v2281 = vsel %vm2250, %v2272, 0.0
          %2282 = vadd.xlane.f32.xlu0 %v2281
          %v2283 = vpop.xlane.xlu0 %2282
          %v2284 = vsel %vm2250, %v2274, 0.0
          %2285 = vadd.xlane.f32.xlu0 %v2284
          %v2286 = vpop.xlane.xlu0 %2285
          %v2287 = vrcp.pop %v2277
          %v2288 = vrcp.pop %v2280
          %v2289 = vrcp.pop %v2283
          %v2290 = vrcp.pop %v2286
          %v2291 = vmul.f32 %v2268, %v2287
          %v2292 = vmul.f32 %v2270, %v2288
          %v2293 = vmul.f32 %v2272, %v2289
          %v2294 = vmul.f32 %v2274, %v2290
          %v2295 = vpack.c.bf16 %v2291, %v2291
          %v2296 = vpack.c.bf16 %v2292, %v2292
          %v2297 = vpack.c.bf16 %v2293, %v2293
          %v2298 = vpack.c.bf16 %v2294, %v2294
          %v2299 = vld [vmem:[#allocation3] sm:$0xf]
          %v2300 = vld [vmem:[#allocation3 + $0x4] sm:$0xf]
          %v2301 = vld [vmem:[#allocation3 + $0x8] sm:$0xf]
          %v2302 = vld [vmem:[#allocation3 + $0xc] sm:$0xf]
          %v2303 = vld [vmem:[#allocation3 + $0x10] sm:$0xf]
          %v2304 = vld [vmem:[#allocation3 + $0x14] sm:$0xf]
          %v2305 = vld [vmem:[#allocation3 + $0x18] sm:$0xf]
          %v2306 = vld [vmem:[#allocation3 + $0x1c] sm:$0xf]
          %v2307 = vld [vmem:[#allocation3 + $0x20] sm:$0xf]
          %v2308 = vld [vmem:[#allocation3 + $0x24] sm:$0xf]
          %v2309 = vld [vmem:[#allocation3 + $0x28] sm:$0xf]
          %v2310 = vld [vmem:[#allocation3 + $0x2c] sm:$0xf]
          %v2314 = vunpack.c.l.b16 %v2299
          %v2315 = vunpack.c.l.b16 %v2300
          %v2316 = vunpack.c.l.b16 %v2301
          %v2317 = vpack.c.b16 %v2315, %v2314
          %v2318 = vpack.c.b16 %v2316, %v2316
          %v2321 = vsel %vm2250, %v2295, 0
          %vm2323 = vcmask 1043456
          %v2325 = vsel %vm2323, %v2318, 0
          %2327 = vmatprep.subr.bf16.mxu0 0
          %2328 = vmatpush1.bf16.msra.mxu0 0
          %2329 = vmatprep.subr.bf16.mxu0 0
          %2330 = vmatpush1.bf16.msra.mxu0 0
          %2331 = vmatprep.subr.bf16.mxu0 0
          %2332 = vmatpush1.bf16.msra.mxu0 0
          %2333 = vmatprep.subr.bf16.mxu0 0
          %2334 = vmatpush1.bf16.msra.mxu0 0
          %2335 = vmatprep.subr.bf16.mxu0 0
          %2336 = vmatpush1.bf16.msra.mxu0 0
          %2337 = vmatprep.subr.bf16.mxu0 0
          %2338 = vmatpush1.bf16.msra.mxu0 0
          %2339 = vmatprep.subr.bf16.mxu0 0
          %2340 = vmatpush1.bf16.msra.mxu0 %v2325
          %2341 = vmatprep.subr.bf16.mxu0 0
          %2342 = vmatpush1.bf16.msra.mxu0 %v2317
          %2343 = vmatprep.subr.bf16.mxu0 0
          %2344 = vmatpush2.bf16.msra.mxu0 0
          %2345 = vmatprep.subr.bf16.mxu0 0
          %2346 = vmatpush2.bf16.msra.mxu0 0
          %2347 = vmatprep.subr.bf16.mxu0 0
          %2348 = vmatpush2.bf16.msra.mxu0 0
          %2349 = vmatprep.subr.bf16.mxu0 0
          %2350 = vmatpush2.bf16.msra.mxu0 0
          %2351 = vmatprep.subr.bf16.mxu0 0
          %2352 = vmatpush2.bf16.msra.mxu0 0
          %2353 = vmatprep.subr.bf16.mxu0 0
          %2354 = vmatpush2.bf16.msra.mxu0 0
          %2355 = vmatprep.subr.bf16.mxu0 0
          %2356 = vmatpush2.bf16.msra.mxu0 0
          %2357 = vmatprep.subr.bf16.mxu0 0
          %2358 = vmatpush2.bf16.msra.mxu0 0
          %2359 = vmatprep.mubr.bf16.mxu0 0
          %2360 = vmatmul.mubr.bf16.gmra.mxu0 %v2321
          %v2361 = vpop.f32.mrf.mxu0
          %v2362 = vadd.f32 0.0, %v2361
          %v2363 = vpop.f32.mrf.mxu0
          %v2364 = vpop.f32.mrf.mxu0
          %v2365 = vpop.f32.mrf.mxu0
          %2366 = vdwg.mxu0
          %v2370 = vunpack.c.l.b16 %v2302
          %v2371 = vunpack.c.l.b16 %v2303
          %v2372 = vunpack.c.l.b16 %v2304
          %v2373 = vpack.c.b16 %v2371, %v2370
          %v2374 = vpack.c.b16 %v2372, %v2372
          %v2377 = vsel %vm2250, %v2296, 0
          %v2380 = vsel %vm2323, %v2374, 0
          %2382 = vmatprep.subr.bf16.mxu0 0
          %2383 = vmatpush1.bf16.msra.mxu0 0
          %2384 = vmatprep.subr.bf16.mxu0 0
          %2385 = vmatpush1.bf16.msra.mxu0 0
          %2386 = vmatprep.subr.bf16.mxu0 0
          %2387 = vmatpush1.bf16.msra.mxu0 0
          %2388 = vmatprep.subr.bf16.mxu0 0
          %2389 = vmatpush1.bf16.msra.mxu0 0
          %2390 = vmatprep.subr.bf16.mxu0 0
          %2391 = vmatpush1.bf16.msra.mxu0 0
          %2392 = vmatprep.subr.bf16.mxu0 0
          %2393 = vmatpush1.bf16.msra.mxu0 0
          %2394 = vmatprep.subr.bf16.mxu0 0
          %2395 = vmatpush1.bf16.msra.mxu0 %v2380
          %2396 = vmatprep.subr.bf16.mxu0 0
          %2397 = vmatpush1.bf16.msra.mxu0 %v2373
          %2398 = vmatprep.subr.bf16.mxu0 0
          %2399 = vmatpush2.bf16.msra.mxu0 0
          %2400 = vmatprep.subr.bf16.mxu0 0
          %2401 = vmatpush2.bf16.msra.mxu0 0
          %2402 = vmatprep.subr.bf16.mxu0 0
          %2403 = vmatpush2.bf16.msra.mxu0 0
          %2404 = vmatprep.subr.bf16.mxu0 0
          %2405 = vmatpush2.bf16.msra.mxu0 0
          %2406 = vmatprep.subr.bf16.mxu0 0
          %2407 = vmatpush2.bf16.msra.mxu0 0
          %2408 = vmatprep.subr.bf16.mxu0 0
          %2409 = vmatpush2.bf16.msra.mxu0 0
          %2410 = vmatprep.subr.bf16.mxu0 0
          %2411 = vmatpush2.bf16.msra.mxu0 0
          %2412 = vmatprep.subr.bf16.mxu0 0
          %2413 = vmatpush2.bf16.msra.mxu0 0
          %2414 = vmatprep.mubr.bf16.mxu0 0
          %2415 = vmatmul.mubr.bf16.gmra.mxu0 %v2377
          %v2416 = vpop.f32.mrf.mxu0
          %v2417 = vadd.f32 0.0, %v2416
          %v2418 = vpop.f32.mrf.mxu0
          %v2419 = vpop.f32.mrf.mxu0
          %v2420 = vpop.f32.mrf.mxu0
          %2421 = vdwg.mxu0
          %v2425 = vunpack.c.l.b16 %v2305
          %v2426 = vunpack.c.l.b16 %v2306
          %v2427 = vunpack.c.l.b16 %v2307
          %v2428 = vpack.c.b16 %v2426, %v2425
          %v2429 = vpack.c.b16 %v2427, %v2427
          %v2432 = vsel %vm2250, %v2297, 0
          %v2435 = vsel %vm2323, %v2429, 0
          %2437 = vmatprep.subr.bf16.mxu0 0
          %2438 = vmatpush1.bf16.msra.mxu0 0
          %2439 = vmatprep.subr.bf16.mxu0 0
          %2440 = vmatpush1.bf16.msra.mxu0 0
          %2441 = vmatprep.subr.bf16.mxu0 0
          %2442 = vmatpush1.bf16.msra.mxu0 0
          %2443 = vmatprep.subr.bf16.mxu0 0
          %2444 = vmatpush1.bf16.msra.mxu0 0
          %2445 = vmatprep.subr.bf16.mxu0 0
          %2446 = vmatpush1.bf16.msra.mxu0 0
          %2447 = vmatprep.subr.bf16.mxu0 0
          %2448 = vmatpush1.bf16.msra.mxu0 0
          %2449 = vmatprep.subr.bf16.mxu0 0
          %2450 = vmatpush1.bf16.msra.mxu0 %v2435
          %2451 = vmatprep.subr.bf16.mxu0 0
          %2452 = vmatpush1.bf16.msra.mxu0 %v2428
          %2453 = vmatprep.subr.bf16.mxu0 0
          %2454 = vmatpush2.bf16.msra.mxu0 0
          %2455 = vmatprep.subr.bf16.mxu0 0
          %2456 = vmatpush2.bf16.msra.mxu0 0
          %2457 = vmatprep.subr.bf16.mxu0 0
          %2458 = vmatpush2.bf16.msra.mxu0 0
          %2459 = vmatprep.subr.bf16.mxu0 0
          %2460 = vmatpush2.bf16.msra.mxu0 0
          %2461 = vmatprep.subr.bf16.mxu0 0
          %2462 = vmatpush2.bf16.msra.mxu0 0
          %2463 = vmatprep.subr.bf16.mxu0 0
          %2464 = vmatpush2.bf16.msra.mxu0 0
          %2465 = vmatprep.subr.bf16.mxu0 0
          %2466 = vmatpush2.bf16.msra.mxu0 0
          %2467 = vmatprep.subr.bf16.mxu0 0
          %2468 = vmatpush2.bf16.msra.mxu0 0
          %2469 = vmatprep.mubr.bf16.mxu0 0
          %2470 = vmatmul.mubr.bf16.gmra.mxu0 %v2432
          %v2471 = vpop.f32.mrf.mxu0
          %v2472 = vadd.f32 0.0, %v2471
          %v2473 = vpop.f32.mrf.mxu0
          %v2474 = vpop.f32.mrf.mxu0
          %v2475 = vpop.f32.mrf.mxu0
          %2476 = vdwg.mxu0
          %v2480 = vunpack.c.l.b16 %v2308
          %v2481 = vunpack.c.l.b16 %v2309
          %v2482 = vunpack.c.l.b16 %v2310
          %v2483 = vpack.c.b16 %v2481, %v2480
          %v2484 = vpack.c.b16 %v2482, %v2482
          %v2487 = vsel %vm2250, %v2298, 0
          %v2490 = vsel %vm2323, %v2484, 0
          %2492 = vmatprep.subr.bf16.mxu0 0
          %2493 = vmatpush1.bf16.msra.mxu0 0
          %2494 = vmatprep.subr.bf16.mxu0 0
          %2495 = vmatpush1.bf16.msra.mxu0 0
          %2496 = vmatprep.subr.bf16.mxu0 0
          %2497 = vmatpush1.bf16.msra.mxu0 0
          %2498 = vmatprep.subr.bf16.mxu0 0
          %2499 = vmatpush1.bf16.msra.mxu0 0
          %2500 = vmatprep.subr.bf16.mxu0 0
          %2501 = vmatpush1.bf16.msra.mxu0 0
          %2502 = vmatprep.subr.bf16.mxu0 0
          %2503 = vmatpush1.bf16.msra.mxu0 0
          %2504 = vmatprep.subr.bf16.mxu0 0
          %2505 = vmatpush1.bf16.msra.mxu0 %v2490
          %2506 = vmatprep.subr.bf16.mxu0 0
          %2507 = vmatpush1.bf16.msra.mxu0 %v2483
          %2508 = vmatprep.subr.bf16.mxu0 0
          %2509 = vmatpush2.bf16.msra.mxu0 0
          %2510 = vmatprep.subr.bf16.mxu0 0
          %2511 = vmatpush2.bf16.msra.mxu0 0
          %2512 = vmatprep.subr.bf16.mxu0 0
          %2513 = vmatpush2.bf16.msra.mxu0 0
          %2514 = vmatprep.subr.bf16.mxu0 0
          %2515 = vmatpush2.bf16.msra.mxu0 0
          %2516 = vmatprep.subr.bf16.mxu0 0
          %2517 = vmatpush2.bf16.msra.mxu0 0
          %2518 = vmatprep.subr.bf16.mxu0 0
          %2519 = vmatpush2.bf16.msra.mxu0 0
          %2520 = vmatprep.subr.bf16.mxu0 0
          %2521 = vmatpush2.bf16.msra.mxu0 0
          %2522 = vmatprep.subr.bf16.mxu0 0
          %2523 = vmatpush2.bf16.msra.mxu0 0
          %2524 = vmatprep.mubr.bf16.mxu0 0
          %2525 = vmatmul.mubr.bf16.gmra.mxu0 %v2487
          %v2526 = vpop.f32.mrf.mxu0
          %v2527 = vadd.f32 0.0, %v2526
          %v2528 = vpop.f32.mrf.mxu0
          %v2529 = vpop.f32.mrf.mxu0
          %v2530 = vpop.f32.mrf.mxu0
          %2531 = vdwg.mxu0
          %v2532 = vpack.c.bf16 %v2362, %v2362
          %v2533 = vpack.c.bf16 %v2417, %v2417
          %v2534 = vpack.c.bf16 %v2472, %v2472
          %v2535 = vpack.c.bf16 %v2527, %v2527
          %v2536 = vld [vmem:[%s21] sm:$0xf]
          %v2537 = vld [vmem:[%s21 + $0x4] sm:$0xf]
          %v2538 = vld [vmem:[%s21 + $0x8] sm:$0xf]
          %v2539 = vld [vmem:[%s21 + $0xc] sm:$0xf]
          %v2541 = vsel %vm2029, %v2532, 0
          %v2544 = vsel %vm2323, %v2536, 0
          %2546 = vmatprep.subr.bf16.mxu0 0
          %2547 = vmatpush1.bf16.msra.mxu0 0
          %2548 = vmatprep.subr.bf16.mxu0 0
          %2549 = vmatpush1.bf16.msra.mxu0 0
          %2550 = vmatprep.subr.bf16.mxu0 0
          %2551 = vmatpush1.bf16.msra.mxu0 0
          %2552 = vmatprep.subr.bf16.mxu0 0
          %2553 = vmatpush1.bf16.msra.mxu0 0
          %2554 = vmatprep.subr.bf16.mxu0 0
          %2555 = vmatpush1.bf16.msra.mxu0 0
          %2556 = vmatprep.subr.bf16.mxu0 0
          %2557 = vmatpush1.bf16.msra.mxu0 0
          %2558 = vmatprep.subr.bf16.mxu0 0
          %2559 = vmatpush1.bf16.msra.mxu0 0
          %2560 = vmatprep.subr.bf16.mxu0 0
          %2561 = vmatpush1.bf16.msra.mxu0 %v2544
          %2562 = vmatprep.subr.bf16.mxu0 0
          %2563 = vmatpush2.bf16.msra.mxu0 0
          %2564 = vmatprep.subr.bf16.mxu0 0
          %2565 = vmatpush2.bf16.msra.mxu0 0
          %2566 = vmatprep.subr.bf16.mxu0 0
          %2567 = vmatpush2.bf16.msra.mxu0 0
          %2568 = vmatprep.subr.bf16.mxu0 0
          %2569 = vmatpush2.bf16.msra.mxu0 0
          %2570 = vmatprep.subr.bf16.mxu0 0
          %2571 = vmatpush2.bf16.msra.mxu0 0
          %2572 = vmatprep.subr.bf16.mxu0 0
          %2573 = vmatpush2.bf16.msra.mxu0 0
          %2574 = vmatprep.subr.bf16.mxu0 0
          %2575 = vmatpush2.bf16.msra.mxu0 0
          %2576 = vmatprep.subr.bf16.mxu0 0
          %2577 = vmatpush2.bf16.msra.mxu0 0
          %2578 = vmatprep.mubr.bf16.mxu0 0
          %2579 = vmatmul.mubr.bf16.gmra.mxu0 %v2541
          %v2580 = vpop.f32.mrf.mxu0
          %v2581 = vadd.f32 0.0, %v2580
          %v2582 = vpop.f32.mrf.mxu0
          %v2583 = vpop.f32.mrf.mxu0
          %v2584 = vpop.f32.mrf.mxu0
          %2585 = vdwg.mxu0
          %v2587 = vsel %vm2029, %v2533, 0
          %v2590 = vsel %vm2323, %v2537, 0
          %2592 = vmatprep.subr.bf16.mxu0 0
          %2593 = vmatpush1.bf16.msra.mxu0 0
          %2594 = vmatprep.subr.bf16.mxu0 0
          %2595 = vmatpush1.bf16.msra.mxu0 0
          %2596 = vmatprep.subr.bf16.mxu0 0
          %2597 = vmatpush1.bf16.msra.mxu0 0
          %2598 = vmatprep.subr.bf16.mxu0 0
          %2599 = vmatpush1.bf16.msra.mxu0 0
          %2600 = vmatprep.subr.bf16.mxu0 0
          %2601 = vmatpush1.bf16.msra.mxu0 0
          %2602 = vmatprep.subr.bf16.mxu0 0
          %2603 = vmatpush1.bf16.msra.mxu0 0
          %2604 = vmatprep.subr.bf16.mxu0 0
          %2605 = vmatpush1.bf16.msra.mxu0 0
          %2606 = vmatprep.subr.bf16.mxu0 0
          %2607 = vmatpush1.bf16.msra.mxu0 %v2590
          %2608 = vmatprep.subr.bf16.mxu0 0
          %2609 = vmatpush2.bf16.msra.mxu0 0
          %2610 = vmatprep.subr.bf16.mxu0 0
          %2611 = vmatpush2.bf16.msra.mxu0 0
          %2612 = vmatprep.subr.bf16.mxu0 0
          %2613 = vmatpush2.bf16.msra.mxu0 0
          %2614 = vmatprep.subr.bf16.mxu0 0
          %2615 = vmatpush2.bf16.msra.mxu0 0
          %2616 = vmatprep.subr.bf16.mxu0 0
          %2617 = vmatpush2.bf16.msra.mxu0 0
          %2618 = vmatprep.subr.bf16.mxu0 0
          %2619 = vmatpush2.bf16.msra.mxu0 0
          %2620 = vmatprep.subr.bf16.mxu0 0
          %2621 = vmatpush2.bf16.msra.mxu0 0
          %2622 = vmatprep.subr.bf16.mxu0 0
          %2623 = vmatpush2.bf16.msra.mxu0 0
          %2624 = vmatprep.mubr.bf16.mxu0 0
          %2625 = vmatmul.mubr.bf16.gmra.mxu0 %v2587
          %v2626 = vpop.f32.mrf.mxu0
          %v2627 = vadd.f32 0.0, %v2626
          %v2628 = vpop.f32.mrf.mxu0
          %v2629 = vpop.f32.mrf.mxu0
          %v2630 = vpop.f32.mrf.mxu0
          %2631 = vdwg.mxu0
          %v2633 = vsel %vm2029, %v2534, 0
          %v2636 = vsel %vm2323, %v2538, 0
          %2638 = vmatprep.subr.bf16.mxu0 0
          %2639 = vmatpush1.bf16.msra.mxu0 0
          %2640 = vmatprep.subr.bf16.mxu0 0
          %2641 = vmatpush1.bf16.msra.mxu0 0
          %2642 = vmatprep.subr.bf16.mxu0 0
          %2643 = vmatpush1.bf16.msra.mxu0 0
          %2644 = vmatprep.subr.bf16.mxu0 0
          %2645 = vmatpush1.bf16.msra.mxu0 0
          %2646 = vmatprep.subr.bf16.mxu0 0
          %2647 = vmatpush1.bf16.msra.mxu0 0
          %2648 = vmatprep.subr.bf16.mxu0 0
          %2649 = vmatpush1.bf16.msra.mxu0 0
          %2650 = vmatprep.subr.bf16.mxu0 0
          %2651 = vmatpush1.bf16.msra.mxu0 0
          %2652 = vmatprep.subr.bf16.mxu0 0
          %2653 = vmatpush1.bf16.msra.mxu0 %v2636
          %2654 = vmatprep.subr.bf16.mxu0 0
          %2655 = vmatpush2.bf16.msra.mxu0 0
          %2656 = vmatprep.subr.bf16.mxu0 0
          %2657 = vmatpush2.bf16.msra.mxu0 0
          %2658 = vmatprep.subr.bf16.mxu0 0
          %2659 = vmatpush2.bf16.msra.mxu0 0
          %2660 = vmatprep.subr.bf16.mxu0 0
          %2661 = vmatpush2.bf16.msra.mxu0 0
          %2662 = vmatprep.subr.bf16.mxu0 0
          %2663 = vmatpush2.bf16.msra.mxu0 0
          %2664 = vmatprep.subr.bf16.mxu0 0
          %2665 = vmatpush2.bf16.msra.mxu0 0
          %2666 = vmatprep.subr.bf16.mxu0 0
          %2667 = vmatpush2.bf16.msra.mxu0 0
          %2668 = vmatprep.subr.bf16.mxu0 0
          %2669 = vmatpush2.bf16.msra.mxu0 0
          %2670 = vmatprep.mubr.bf16.mxu0 0
          %2671 = vmatmul.mubr.bf16.gmra.mxu0 %v2633
          %v2672 = vpop.f32.mrf.mxu0
          %v2673 = vadd.f32 0.0, %v2672
          %v2674 = vpop.f32.mrf.mxu0
          %v2675 = vpop.f32.mrf.mxu0
          %v2676 = vpop.f32.mrf.mxu0
          %2677 = vdwg.mxu0
          %v2679 = vsel %vm2029, %v2535, 0
          %v2682 = vsel %vm2323, %v2539, 0
          %2684 = vmatprep.subr.bf16.mxu0 0
          %2685 = vmatpush1.bf16.msra.mxu0 0
          %2686 = vmatprep.subr.bf16.mxu0 0
          %2687 = vmatpush1.bf16.msra.mxu0 0
          %2688 = vmatprep.subr.bf16.mxu0 0
          %2689 = vmatpush1.bf16.msra.mxu0 0
          %2690 = vmatprep.subr.bf16.mxu0 0
          %2691 = vmatpush1.bf16.msra.mxu0 0
          %2692 = vmatprep.subr.bf16.mxu0 0
          %2693 = vmatpush1.bf16.msra.mxu0 0
          %2694 = vmatprep.subr.bf16.mxu0 0
          %2695 = vmatpush1.bf16.msra.mxu0 0
          %2696 = vmatprep.subr.bf16.mxu0 0
          %2697 = vmatpush1.bf16.msra.mxu0 0
          %2698 = vmatprep.subr.bf16.mxu0 0
          %2699 = vmatpush1.bf16.msra.mxu0 %v2682
          %2700 = vmatprep.subr.bf16.mxu0 0
          %2701 = vmatpush2.bf16.msra.mxu0 0
          %2702 = vmatprep.subr.bf16.mxu0 0
          %2703 = vmatpush2.bf16.msra.mxu0 0
          %2704 = vmatprep.subr.bf16.mxu0 0
          %2705 = vmatpush2.bf16.msra.mxu0 0
          %2706 = vmatprep.subr.bf16.mxu0 0
          %2707 = vmatpush2.bf16.msra.mxu0 0
          %2708 = vmatprep.subr.bf16.mxu0 0
          %2709 = vmatpush2.bf16.msra.mxu0 0
          %2710 = vmatprep.subr.bf16.mxu0 0
          %2711 = vmatpush2.bf16.msra.mxu0 0
          %2712 = vmatprep.subr.bf16.mxu0 0
          %2713 = vmatpush2.bf16.msra.mxu0 0
          %2714 = vmatprep.subr.bf16.mxu0 0
          %2715 = vmatpush2.bf16.msra.mxu0 0
          %2716 = vmatprep.mubr.bf16.mxu0 0
          %2717 = vmatmul.mubr.bf16.gmra.mxu0 %v2679
          %v2718 = vpop.f32.mrf.mxu0
          %v2719 = vadd.f32 0.0, %v2718
          %v2720 = vpop.f32.mrf.mxu0
          %v2721 = vpop.f32.mrf.mxu0
          %v2722 = vpop.f32.mrf.mxu0
          %2723 = vdwg.mxu0
          %v2724 = vsel %vm1028, %v2581, 0.0
          %v2725 = vsel %vm1028, %v2627, 0.0
          %v2726 = vadd.f32 %v2724, %v2725
          %v2727 = vsel %vm1028, %v2673, 0.0
          %v2728 = vadd.f32 %v2726, %v2727
          %v2729 = vsel %vm1028, %v2719, 0.0
          %v2730 = vadd.f32 %v2728, %v2729
          %v2731 = vld [vmem:[%s23] sm:$0x1]
          %v2733 = vlaneseq
          %v2734 = vshrl.u32 %v2733, 7
          %v2735 = vsub.s32 0, %v2734
          %v2736 = vrot.slane %v2731, %v2735
          %v2738 = vadd.f32 %v2730, %v2736
          %v2739 = vld [vmem:[%s979] sm:$0xff]
          %v2740 = vadd.f32 %v2739, %v2738
          %v2741 = vld [vmem:[%s41] sm:$0x1]
          %v2742 = vld [vmem:[%s43] sm:$0x1]
          %v2743 = vsel %vm1028, %v2740, 0.0
          %2744 = vadd.xlane.f32.xlu0 %v2743
          %v2745 = vpop.xlane.xlu0 %2744
          %v2746 = vrcp.pop 32.0
          %v2747 = vmul.f32 %v2745, %v2746
          %v2748 = vsub.f32 %v2740, %v2747
          %v2749 = vmul.f32 %v2748, %v2748
          %v2750 = vsel %vm1028, %v2749, 0.0
          %2751 = vadd.xlane.f32.xlu0 %v2750
          %v2752 = vpop.xlane.xlu0 %2751
          %v2753 = vmul.f32 %v2752, %v2746
          %v2754 = vadd.f32 %v2753, 1e-05
          %v2755 = vrsqrt.pop %v2754
          %v2756 = vmul.f32 %v2748, %v2755
          %v2758 = vlaneseq
          %v2759 = vshrl.u32 %v2758, 7
          %v2760 = vsub.s32 0, %v2759
          %v2761 = vrot.slane %v2741, %v2760
          %v2763 = vmul.f32 %v2756, %v2761
          %v2765 = vlaneseq
          %v2766 = vshrl.u32 %v2765, 7
          %v2767 = vsub.s32 0, %v2766
          %v2768 = vrot.slane %v2742, %v2767
          %v2770 = vadd.f32 %v2763, %v2768
          %v2771 = vpack.c.bf16 %v2770, %v2770
          %v2772 = vld [vmem:[%s45] sm:$0xf]
          %v2773 = vld [vmem:[%s45 + $0x4] sm:$0xf]
          %v2774 = vld [vmem:[%s45 + $0x8] sm:$0xf]
          %v2775 = vld [vmem:[%s45 + $0xc] sm:$0xf]
          %v2776 = vld [vmem:[%s47] sm:$0x1]
          %v2778 = vlaneseq
          %v2779 = vshrl.u32 %v2778, 7
          %v2780 = vsub.s32 0, %v2779
          %v2781 = vrot.slane %v2776, %v2780
          %v2787 = vunpack.c.l.b16 %v2772
          %v2788 = vunpack.c.l.b16 %v2773
          %v2789 = vunpack.c.l.b16 %v2774
          %v2790 = vunpack.c.l.b16 %v2775
          %v2791 = vpack.c.b16 %v2788, %v2787
          %v2792 = vpack.c.b16 %v2790, %v2789
          %v2796 = vsel %vm1028, %v2771, 0
          %2798 = vmatprep.subr.bf16.mxu0 0
          %2799 = vmatpush1.bf16.msra.mxu0 0
          %2800 = vmatprep.subr.bf16.mxu0 0
          %2801 = vmatpush1.bf16.msra.mxu0 0
          %2802 = vmatprep.subr.bf16.mxu0 0
          %2803 = vmatpush1.bf16.msra.mxu0 0
          %2804 = vmatprep.subr.bf16.mxu0 0
          %2805 = vmatpush1.bf16.msra.mxu0 0
          %2806 = vmatprep.subr.bf16.mxu0 0
          %2807 = vmatpush1.bf16.msra.mxu0 0
          %2808 = vmatprep.subr.bf16.mxu0 0
          %2809 = vmatpush1.bf16.msra.mxu0 0
          %2810 = vmatprep.subr.bf16.mxu0 0
          %2811 = vmatpush1.bf16.msra.mxu0 %v2792
          %2812 = vmatprep.subr.bf16.mxu0 0
          %2813 = vmatpush1.bf16.msra.mxu0 %v2791
          %2814 = vmatprep.subr.bf16.mxu0 0
          %2815 = vmatpush2.bf16.msra.mxu0 0
          %2816 = vmatprep.subr.bf16.mxu0 0
          %2817 = vmatpush2.bf16.msra.mxu0 0
          %2818 = vmatprep.subr.bf16.mxu0 0
          %2819 = vmatpush2.bf16.msra.mxu0 0
          %2820 = vmatprep.subr.bf16.mxu0 0
          %2821 = vmatpush2.bf16.msra.mxu0 0
          %2822 = vmatprep.subr.bf16.mxu0 0
          %2823 = vmatpush2.bf16.msra.mxu0 0
          %2824 = vmatprep.subr.bf16.mxu0 0
          %2825 = vmatpush2.bf16.msra.mxu0 0
          %2826 = vmatprep.subr.bf16.mxu0 0
          %2827 = vmatpush2.bf16.msra.mxu0 0
          %2828 = vmatprep.subr.bf16.mxu0 0
          %2829 = vmatpush2.bf16.msra.mxu0 0
          %2830 = vmatprep.mubr.bf16.mxu0 0
          %2831 = vmatmul.mubr.bf16.gmra.mxu0 %v2796
          %v2832 = vpop.f32.mrf.mxu0
          %v2833 = vadd.f32 %v2781, %v2832
          %v2834 = vpop.f32.mrf.mxu0
          %v2835 = vpop.f32.mrf.mxu0
          %v2836 = vpop.f32.mrf.mxu0
          %2837 = vdwg.mxu0
          %v2838 = vmul.f32 %v2833, 0.5
          %v2839 = vmul.f32 %v2833, 0.70710677
          %v2840 = verf.f32.pop %v2839
          %v2841 = vadd.f32 %v2840, 1.0
          %v2842 = vmul.f32 %v2838, %v2841
          %v2843 = vpack.c.bf16 %v2842, %v2842
          %v2844 = vld [vmem:[%s49] sm:$0xf]
          %v2845 = vld [vmem:[%s49 + $0x4] sm:$0xf]
          %v2846 = vld [vmem:[%s49 + $0x8] sm:$0xf]
          %v2847 = vld [vmem:[%s49 + $0xc] sm:$0xf]
          %v2848 = vld [vmem:[%s49 + $0x10] sm:$0xf]
          %v2849 = vld [vmem:[%s49 + $0x14] sm:$0xf]
          %v2850 = vld [vmem:[%s49 + $0x18] sm:$0xf]
          %v2851 = vld [vmem:[%s49 + $0x1c] sm:$0xf]
          %v2852 = vld [vmem:[%s51] sm:$0x1]
          %v2854 = vlaneseq
          %v2855 = vshrl.u32 %v2854, 7
          %v2856 = vsub.s32 0, %v2855
          %v2857 = vrot.slane %v2852, %v2856
          %v2867 = vunpack.c.l.b16 %v2844
          %v2868 = vunpack.c.l.b16 %v2845
          %v2869 = vunpack.c.l.b16 %v2846
          %v2870 = vunpack.c.l.b16 %v2847
          %v2871 = vunpack.c.l.b16 %v2848
          %v2872 = vunpack.c.l.b16 %v2849
          %v2873 = vunpack.c.l.b16 %v2850
          %v2874 = vunpack.c.l.b16 %v2851
          %v2875 = vpack.c.b16 %v2868, %v2867
          %v2876 = vpack.c.b16 %v2870, %v2869
          %v2877 = vpack.c.b16 %v2872, %v2871
          %v2878 = vpack.c.b16 %v2874, %v2873
          %vm2883 = vcmask 523264
          %v2885 = vsel %vm2883, %v2843, 0
          %2887 = vmatprep.subr.bf16.mxu0 0
          %2888 = vmatpush1.bf16.msra.mxu0 0
          %2889 = vmatprep.subr.bf16.mxu0 0
          %2890 = vmatpush1.bf16.msra.mxu0 0
          %2891 = vmatprep.subr.bf16.mxu0 0
          %2892 = vmatpush1.bf16.msra.mxu0 0
          %2893 = vmatprep.subr.bf16.mxu0 0
          %2894 = vmatpush1.bf16.msra.mxu0 0
          %2895 = vmatprep.subr.bf16.mxu0 0
          %2896 = vmatpush1.bf16.msra.mxu0 %v2878
          %2897 = vmatprep.subr.bf16.mxu0 0
          %2898 = vmatpush1.bf16.msra.mxu0 %v2877
          %2899 = vmatprep.subr.bf16.mxu0 0
          %2900 = vmatpush1.bf16.msra.mxu0 %v2876
          %2901 = vmatprep.subr.bf16.mxu0 0
          %2902 = vmatpush1.bf16.msra.mxu0 %v2875
          %2903 = vmatprep.subr.bf16.mxu0 0
          %2904 = vmatpush2.bf16.msra.mxu0 0
          %2905 = vmatprep.subr.bf16.mxu0 0
          %2906 = vmatpush2.bf16.msra.mxu0 0
          %2907 = vmatprep.subr.bf16.mxu0 0
          %2908 = vmatpush2.bf16.msra.mxu0 0
          %2909 = vmatprep.subr.bf16.mxu0 0
          %2910 = vmatpush2.bf16.msra.mxu0 0
          %2911 = vmatprep.subr.bf16.mxu0 0
          %2912 = vmatpush2.bf16.msra.mxu0 0
          %2913 = vmatprep.subr.bf16.mxu0 0
          %2914 = vmatpush2.bf16.msra.mxu0 0
          %2915 = vmatprep.subr.bf16.mxu0 0
          %2916 = vmatpush2.bf16.msra.mxu0 0
          %2917 = vmatprep.subr.bf16.mxu0 0
          %2918 = vmatpush2.bf16.msra.mxu0 0
          %2919 = vmatprep.mubr.bf16.mxu0 0
          %2920 = vmatmul.mubr.bf16.gmra.mxu0 %v2885
          %v2921 = vpop.f32.mrf.mxu0
          %v2922 = vadd.f32 %v2857, %v2921
          %v2923 = vpop.f32.mrf.mxu0
          %v2924 = vpop.f32.mrf.mxu0
          %v2925 = vpop.f32.mrf.mxu0
          %2926 = vdwg.mxu0
          %v2927 = vadd.f32 %v2770, %v2922
          %v2928 = vld [vmem:[%s53] sm:$0x1]
          %v2929 = vld [vmem:[%s55] sm:$0x1]
          %v2930 = vsel %vm1028, %v2927, 0.0
          %2931 = vadd.xlane.f32.xlu0 %v2930
          %v2932 = vpop.xlane.xlu0 %2931
          %v2933 = vmul.f32 %v2932, %v2746
          %v2934 = vsub.f32 %v2927, %v2933
          %v2935 = vmul.f32 %v2934, %v2934
          %v2936 = vsel %vm1028, %v2935, 0.0
          %2937 = vadd.xlane.f32.xlu0 %v2936
          %v2938 = vpop.xlane.xlu0 %2937
          %v2939 = vmul.f32 %v2938, %v2746
          %v2940 = vadd.f32 %v2939, 1e-05
          %v2941 = vrsqrt.pop %v2940
          %v2942 = vmul.f32 %v2934, %v2941
          %v2944 = vlaneseq
          %v2945 = vshrl.u32 %v2944, 7
          %v2946 = vsub.s32 0, %v2945
          %v2947 = vrot.slane %v2928, %v2946
          %v2949 = vmul.f32 %v2942, %v2947
          %v2951 = vlaneseq
          %v2952 = vshrl.u32 %v2951, 7
          %v2953 = vsub.s32 0, %v2952
          %v2954 = vrot.slane %v2929, %v2953
          %v2956 = vadd.f32 %v2949, %v2954
          %2957 = vst.msk [vmem:[%s967] sm:$0xff] %vm1028, %v2956
        $region136: #{tpu_custom_call.1} parent=131 // pred_fallthru
          _
        %v2958 = vld [vmem:[%s987] sm:$0xff]
        %v2959 = vpack.c.bf16 %v2958, %v2958
        %v2960 = vld [vmem:[%s9] sm:$0xf]
        %v2961 = vld [vmem:[%s9 + $0x4] sm:$0xf]
        %v2962 = vld [vmem:[%s9 + $0x8] sm:$0xf]
        %v2963 = vld [vmem:[%s9 + $0xc] sm:$0xf]
        %v2964 = vld [vmem:[%s11] sm:$0x1]
        %v2966 = vlaneseq
        %v2967 = vshrl.u32 %v2966, 7
        %v2968 = vsub.s32 0, %v2967
        %v2969 = vrot.slane %v2964, %v2968
        %v2975 = vunpack.c.l.b16 %v2960
        %v2976 = vunpack.c.l.b16 %v2961
        %v2977 = vunpack.c.l.b16 %v2962
        %v2978 = vunpack.c.l.b16 %v2963
        %v2979 = vpack.c.b16 %v2976, %v2975
        %v2980 = vpack.c.b16 %v2978, %v2977
        %vm2983 = vcmask 261120
        %v2985 = vsel %vm2983, %v2959, 0
        %2987 = vmatprep.subr.bf16.mxu0 0
        %2988 = vmatpush1.bf16.msra.mxu0 0
        %2989 = vmatprep.subr.bf16.mxu0 0
        %2990 = vmatpush1.bf16.msra.mxu0 0
        %2991 = vmatprep.subr.bf16.mxu0 0
        %2992 = vmatpush1.bf16.msra.mxu0 0
        %2993 = vmatprep.subr.bf16.mxu0 0
        %2994 = vmatpush1.bf16.msra.mxu0 0
        %2995 = vmatprep.subr.bf16.mxu0 0
        %2996 = vmatpush1.bf16.msra.mxu0 0
        %2997 = vmatprep.subr.bf16.mxu0 0
        %2998 = vmatpush1.bf16.msra.mxu0 0
        %2999 = vmatprep.subr.bf16.mxu0 0
        %3000 = vmatpush1.bf16.msra.mxu0 %v2980
        %3001 = vmatprep.subr.bf16.mxu0 0
        %3002 = vmatpush1.bf16.msra.mxu0 %v2979
        %3003 = vmatprep.subr.bf16.mxu0 0
        %3004 = vmatpush2.bf16.msra.mxu0 0
        %3005 = vmatprep.subr.bf16.mxu0 0
        %3006 = vmatpush2.bf16.msra.mxu0 0
        %3007 = vmatprep.subr.bf16.mxu0 0
        %3008 = vmatpush2.bf16.msra.mxu0 0
        %3009 = vmatprep.subr.bf16.mxu0 0
        %3010 = vmatpush2.bf16.msra.mxu0 0
        %3011 = vmatprep.subr.bf16.mxu0 0
        %3012 = vmatpush2.bf16.msra.mxu0 0
        %3013 = vmatprep.subr.bf16.mxu0 0
        %3014 = vmatpush2.bf16.msra.mxu0 0
        %3015 = vmatprep.subr.bf16.mxu0 0
        %3016 = vmatpush2.bf16.msra.mxu0 0
        %3017 = vmatprep.subr.bf16.mxu0 0
        %3018 = vmatpush2.bf16.msra.mxu0 0
        %3019 = vmatprep.mubr.bf16.mxu0 0
        %3020 = vmatmul.mubr.bf16.gmra.mxu0 %v2985
        %v3021 = vpop.f32.mrf.mxu0
        %v3022 = vadd.f32 %v2969, %v3021
        %v3023 = vpop.f32.mrf.mxu0
        %v3024 = vpop.f32.mrf.mxu0
        %v3025 = vpop.f32.mrf.mxu0
        %3026 = vdwg.mxu0
        %v3027 = vpack.c.bf16 %v3022, %v3022
        %vm3028 = vcmask 60416
        %3029 = vst.msk [vmem:[#allocation4] sm:$0xf] %vm3028, %v3027
        %s3030 = scalar_lea.vmem %s9, 16
        %v3031 = vld [vmem:[%s3030] sm:$0xf]
        %v3032 = vld [vmem:[%s3030 + $0x4] sm:$0xf]
        %v3033 = vld [vmem:[%s3030 + $0x8] sm:$0xf]
        %v3034 = vld [vmem:[%s3030 + $0xc] sm:$0xf]
        %s3035 = scalar_lea.vmem %s11, 1
        %v3036 = vld [vmem:[%s3035] sm:$0x1]
        %v3038 = vlaneseq
        %v3039 = vshrl.u32 %v3038, 7
        %v3040 = vsub.s32 0, %v3039
        %v3041 = vrot.slane %v3036, %v3040
        %v3047 = vunpack.c.l.b16 %v3031
        %v3048 = vunpack.c.l.b16 %v3032
        %v3049 = vunpack.c.l.b16 %v3033
        %v3050 = vunpack.c.l.b16 %v3034
        %v3051 = vpack.c.b16 %v3048, %v3047
        %v3052 = vpack.c.b16 %v3050, %v3049
        %3055 = vmatprep.subr.bf16.mxu0 0
        %3056 = vmatpush1.bf16.msra.mxu0 0
        %3057 = vmatprep.subr.bf16.mxu0 0
        %3058 = vmatpush1.bf16.msra.mxu0 0
        %3059 = vmatprep.subr.bf16.mxu0 0
        %3060 = vmatpush1.bf16.msra.mxu0 0
        %3061 = vmatprep.subr.bf16.mxu0 0
        %3062 = vmatpush1.bf16.msra.mxu0 0
        %3063 = vmatprep.subr.bf16.mxu0 0
        %3064 = vmatpush1.bf16.msra.mxu0 0
        %3065 = vmatprep.subr.bf16.mxu0 0
        %3066 = vmatpush1.bf16.msra.mxu0 0
        %3067 = vmatprep.subr.bf16.mxu0 0
        %3068 = vmatpush1.bf16.msra.mxu0 %v3052
        %3069 = vmatprep.subr.bf16.mxu0 0
        %3070 = vmatpush1.bf16.msra.mxu0 %v3051
        %3071 = vmatprep.subr.bf16.mxu0 0
        %3072 = vmatpush2.bf16.msra.mxu0 0
        %3073 = vmatprep.subr.bf16.mxu0 0
        %3074 = vmatpush2.bf16.msra.mxu0 0
        %3075 = vmatprep.subr.bf16.mxu0 0
        %3076 = vmatpush2.bf16.msra.mxu0 0
        %3077 = vmatprep.subr.bf16.mxu0 0
        %3078 = vmatpush2.bf16.msra.mxu0 0
        %3079 = vmatprep.subr.bf16.mxu0 0
        %3080 = vmatpush2.bf16.msra.mxu0 0
        %3081 = vmatprep.subr.bf16.mxu0 0
        %3082 = vmatpush2.bf16.msra.mxu0 0
        %3083 = vmatprep.subr.bf16.mxu0 0
        %3084 = vmatpush2.bf16.msra.mxu0 0
        %3085 = vmatprep.subr.bf16.mxu0 0
        %3086 = vmatpush2.bf16.msra.mxu0 0
        %3087 = vmatprep.mubr.bf16.mxu0 0
        %3088 = vmatmul.mubr.bf16.gmra.mxu0 %v2985
        %v3089 = vpop.f32.mrf.mxu0
        %v3090 = vadd.f32 %v3041, %v3089
        %v3091 = vpop.f32.mrf.mxu0
        %v3092 = vpop.f32.mrf.mxu0
        %v3093 = vpop.f32.mrf.mxu0
        %3094 = vdwg.mxu0
        %v3095 = vpack.c.bf16 %v3090, %v3090
        %s3096 = scalar_lea.vmem [#allocation4], 4
        %3097 = vst.msk [vmem:[%s3096] sm:$0xf] %vm3028, %v3095
        %s3098 = scalar_lea.vmem %s9, 32
        %v3099 = vld [vmem:[%s3098] sm:$0xf]
        %v3100 = vld [vmem:[%s3098 + $0x4] sm:$0xf]
        %v3101 = vld [vmem:[%s3098 + $0x8] sm:$0xf]
        %v3102 = vld [vmem:[%s3098 + $0xc] sm:$0xf]
        %s3103 = scalar_lea.vmem %s11, 2
        %v3104 = vld [vmem:[%s3103] sm:$0x1]
        %v3106 = vlaneseq
        %v3107 = vshrl.u32 %v3106, 7
        %v3108 = vsub.s32 0, %v3107
        %v3109 = vrot.slane %v3104, %v3108
        %v3115 = vunpack.c.l.b16 %v3099
        %v3116 = vunpack.c.l.b16 %v3100
        %v3117 = vunpack.c.l.b16 %v3101
        %v3118 = vunpack.c.l.b16 %v3102
        %v3119 = vpack.c.b16 %v3116, %v3115
        %v3120 = vpack.c.b16 %v3118, %v3117
        %3123 = vmatprep.subr.bf16.mxu0 0
        %3124 = vmatpush1.bf16.msra.mxu0 0
        %3125 = vmatprep.subr.bf16.mxu0 0
        %3126 = vmatpush1.bf16.msra.mxu0 0
        %3127 = vmatprep.subr.bf16.mxu0 0
        %3128 = vmatpush1.bf16.msra.mxu0 0
        %3129 = vmatprep.subr.bf16.mxu0 0
        %3130 = vmatpush1.bf16.msra.mxu0 0
        %3131 = vmatprep.subr.bf16.mxu0 0
        %3132 = vmatpush1.bf16.msra.mxu0 0
        %3133 = vmatprep.subr.bf16.mxu0 0
        %3134 = vmatpush1.bf16.msra.mxu0 0
        %3135 = vmatprep.subr.bf16.mxu0 0
        %3136 = vmatpush1.bf16.msra.mxu0 %v3120
        %3137 = vmatprep.subr.bf16.mxu0 0
        %3138 = vmatpush1.bf16.msra.mxu0 %v3119
        %3139 = vmatprep.subr.bf16.mxu0 0
        %3140 = vmatpush2.bf16.msra.mxu0 0
        %3141 = vmatprep.subr.bf16.mxu0 0
        %3142 = vmatpush2.bf16.msra.mxu0 0
        %3143 = vmatprep.subr.bf16.mxu0 0
        %3144 = vmatpush2.bf16.msra.mxu0 0
        %3145 = vmatprep.subr.bf16.mxu0 0
        %3146 = vmatpush2.bf16.msra.mxu0 0
        %3147 = vmatprep.subr.bf16.mxu0 0
        %3148 = vmatpush2.bf16.msra.mxu0 0
        %3149 = vmatprep.subr.bf16.mxu0 0
        %3150 = vmatpush2.bf16.msra.mxu0 0
        %3151 = vmatprep.subr.bf16.mxu0 0
        %3152 = vmatpush2.bf16.msra.mxu0 0
        %3153 = vmatprep.subr.bf16.mxu0 0
        %3154 = vmatpush2.bf16.msra.mxu0 0
        %3155 = vmatprep.mubr.bf16.mxu0 0
        %3156 = vmatmul.mubr.bf16.gmra.mxu0 %v2985
        %v3157 = vpop.f32.mrf.mxu0
        %v3158 = vadd.f32 %v3109, %v3157
        %v3159 = vpop.f32.mrf.mxu0
        %v3160 = vpop.f32.mrf.mxu0
        %v3161 = vpop.f32.mrf.mxu0
        %3162 = vdwg.mxu0
        %v3163 = vpack.c.bf16 %v3158, %v3158
        %s3164 = scalar_lea.vmem [#allocation4], 8
        %3165 = vst.msk [vmem:[%s3164] sm:$0xf] %vm3028, %v3163
        %s3166 = scalar_lea.vmem %s9, 48
        %v3167 = vld [vmem:[%s3166] sm:$0xf]
        %v3168 = vld [vmem:[%s3166 + $0x4] sm:$0xf]
        %v3169 = vld [vmem:[%s3166 + $0x8] sm:$0xf]
        %v3170 = vld [vmem:[%s3166 + $0xc] sm:$0xf]
        %s3171 = scalar_lea.vmem %s11, 3
        %v3172 = vld [vmem:[%s3171] sm:$0x1]
        %v3174 = vlaneseq
        %v3175 = vshrl.u32 %v3174, 7
        %v3176 = vsub.s32 0, %v3175
        %v3177 = vrot.slane %v3172, %v3176
        %v3183 = vunpack.c.l.b16 %v3167
        %v3184 = vunpack.c.l.b16 %v3168
        %v3185 = vunpack.c.l.b16 %v3169
        %v3186 = vunpack.c.l.b16 %v3170
        %v3187 = vpack.c.b16 %v3184, %v3183
        %v3188 = vpack.c.b16 %v3186, %v3185
        %3191 = vmatprep.subr.bf16.mxu0 0
        %3192 = vmatpush1.bf16.msra.mxu0 0
        %3193 = vmatprep.subr.bf16.mxu0 0
        %3194 = vmatpush1.bf16.msra.mxu0 0
        %3195 = vmatprep.subr.bf16.mxu0 0
        %3196 = vmatpush1.bf16.msra.mxu0 0
        %3197 = vmatprep.subr.bf16.mxu0 0
        %3198 = vmatpush1.bf16.msra.mxu0 0
        %3199 = vmatprep.subr.bf16.mxu0 0
        %3200 = vmatpush1.bf16.msra.mxu0 0
        %3201 = vmatprep.subr.bf16.mxu0 0
        %3202 = vmatpush1.bf16.msra.mxu0 0
        %3203 = vmatprep.subr.bf16.mxu0 0
        %3204 = vmatpush1.bf16.msra.mxu0 %v3188
        %3205 = vmatprep.subr.bf16.mxu0 0
        %3206 = vmatpush1.bf16.msra.mxu0 %v3187
        %3207 = vmatprep.subr.bf16.mxu0 0
        %3208 = vmatpush2.bf16.msra.mxu0 0
        %3209 = vmatprep.subr.bf16.mxu0 0
        %3210 = vmatpush2.bf16.msra.mxu0 0
        %3211 = vmatprep.subr.bf16.mxu0 0
        %3212 = vmatpush2.bf16.msra.mxu0 0
        %3213 = vmatprep.subr.bf16.mxu0 0
        %3214 = vmatpush2.bf16.msra.mxu0 0
        %3215 = vmatprep.subr.bf16.mxu0 0
        %3216 = vmatpush2.bf16.msra.mxu0 0
        %3217 = vmatprep.subr.bf16.mxu0 0
        %3218 = vmatpush2.bf16.msra.mxu0 0
        %3219 = vmatprep.subr.bf16.mxu0 0
        %3220 = vmatpush2.bf16.msra.mxu0 0
        %3221 = vmatprep.subr.bf16.mxu0 0
        %3222 = vmatpush2.bf16.msra.mxu0 0
        %3223 = vmatprep.mubr.bf16.mxu0 0
        %3224 = vmatmul.mubr.bf16.gmra.mxu0 %v2985
        %v3225 = vpop.f32.mrf.mxu0
        %v3226 = vadd.f32 %v3177, %v3225
        %v3227 = vpop.f32.mrf.mxu0
        %v3228 = vpop.f32.mrf.mxu0
        %v3229 = vpop.f32.mrf.mxu0
        %3230 = vdwg.mxu0
        %v3231 = vpack.c.bf16 %v3226, %v3226
        %s3232 = scalar_lea.vmem [#allocation4], 12
        %3233 = vst.msk [vmem:[%s3232] sm:$0xf] %vm3028, %v3231
        %v3234 = vld [vmem:[#allocation4] sm:$0xf]
        %v3235 = vld [vmem:[#allocation4 + $0x4] sm:$0xf]
        %v3236 = vld [vmem:[#allocation4 + $0x8] sm:$0xf]
        %v3237 = vld [vmem:[#allocation4 + $0xc] sm:$0xf]
        %v3238 = vld [vmem:[#allocation2] sm:$0xf]
        %v3239 = vld [vmem:[#allocation2 + $0x4] sm:$0xf]
        %v3240 = vld [vmem:[#allocation2 + $0x8] sm:$0xf]
        %v3241 = vld [vmem:[#allocation2 + $0xc] sm:$0xf]
        %v3242 = vld [vmem:[#allocation2 + $0x10] sm:$0xf]
        %v3243 = vld [vmem:[#allocation2 + $0x14] sm:$0xf]
        %v3244 = vld [vmem:[#allocation2 + $0x18] sm:$0xf]
        %v3245 = vld [vmem:[#allocation2 + $0x1c] sm:$0xf]
        %v3246 = vld [vmem:[#allocation2 + $0x20] sm:$0xf]
        %v3247 = vld [vmem:[#allocation2 + $0x24] sm:$0xf]
        %v3248 = vld [vmem:[#allocation2 + $0x28] sm:$0xf]
        %v3249 = vld [vmem:[#allocation2 + $0x2c] sm:$0xf]
        %v3251 = vlaneseq
        %v3252 = vshrl.u32 %v3251, 7
        %v3253 = vsub.s32 0, %v3252
        %v3254 = vrot.slane %v989, %v3253
        %v3259 = vunpack.c.l.b16 %v3238
        %v3260 = vunpack.c.l.b16 %v3239
        %v3261 = vunpack.c.l.b16 %v3240
        %v3262 = vpack.c.b16 %v3260, %v3259
        %v3263 = vpack.c.b16 %v3261, %v3261
        %vm3264 = vcmask 64512
        %v3266 = vsel %vm3264, %v3234, 0
        %v3269 = vsel %vm3264, %v3262, 0
        %v3272 = vsel %vm3264, %v3263, 0
        %3274 = vmatprep.subr.bf16.mxu0 0
        %3275 = vmatpush1.bf16.xpose.msra.mxu0 0
        %3276 = vmatprep.subr.bf16.mxu0 0
        %3277 = vmatpush1.bf16.xpose.msra.mxu0 0
        %3278 = vmatprep.subr.bf16.mxu0 0
        %3279 = vmatpush1.bf16.xpose.msra.mxu0 0
        %3280 = vmatprep.subr.bf16.mxu0 0
        %3281 = vmatpush1.bf16.xpose.msra.mxu0 0
        %3282 = vmatprep.subr.bf16.mxu0 0
        %3283 = vmatpush1.bf16.xpose.msra.mxu0 0
        %3284 = vmatprep.subr.bf16.mxu0 0
        %3285 = vmatpush1.bf16.xpose.msra.mxu0 0
        %3286 = vmatprep.subr.bf16.mxu0 0
        %3287 = vmatpush1.bf16.xpose.msra.mxu0 %v3272
        %3288 = vmatprep.subr.bf16.mxu0 0
        %3289 = vmatpush1.bf16.xpose.msra.mxu0 %v3269
        %3290 = vmatprep.subr.bf16.mxu0 0
        %3291 = vmatpush2.bf16.xpose.msra.mxu0 0
        %3292 = vmatprep.subr.bf16.mxu0 0
        %3293 = vmatpush2.bf16.xpose.msra.mxu0 0
        %3294 = vmatprep.subr.bf16.mxu0 0
        %3295 = vmatpush2.bf16.xpose.msra.mxu0 0
        %3296 = vmatprep.subr.bf16.mxu0 0
        %3297 = vmatpush2.bf16.xpose.msra.mxu0 0
        %3298 = vmatprep.subr.bf16.mxu0 0
        %3299 = vmatpush2.bf16.xpose.msra.mxu0 0
        %3300 = vmatprep.subr.bf16.mxu0 0
        %3301 = vmatpush2.bf16.xpose.msra.mxu0 0
        %3302 = vmatprep.subr.bf16.mxu0 0
        %3303 = vmatpush2.bf16.xpose.msra.mxu0 0
        %3304 = vmatprep.subr.bf16.mxu0 0
        %3305 = vmatpush2.bf16.xpose.msra.mxu0 0
        %3306 = vmatprep.mubr.bf16.mxu0 0
        %3307 = vmatmul.mubr.bf16.gmra.mxu0 %v3266
        %v3308 = vpop.f32.mrf.mxu0
        %v3309 = vadd.f32 %v3254, %v3308
        %v3310 = vpop.f32.mrf.mxu0
        %v3311 = vpop.f32.mrf.mxu0
        %v3312 = vpop.f32.mrf.mxu0
        %3313 = vdwg.mxu0
        %v3317 = vunpack.c.l.b16 %v3241
        %v3318 = vunpack.c.l.b16 %v3242
        %v3319 = vunpack.c.l.b16 %v3243
        %v3320 = vpack.c.b16 %v3318, %v3317
        %v3321 = vpack.c.b16 %v3319, %v3319
        %v3323 = vsel %vm3264, %v3235, 0
        %v3326 = vsel %vm3264, %v3320, 0
        %v3329 = vsel %vm3264, %v3321, 0
        %3331 = vmatprep.subr.bf16.mxu0 0
        %3332 = vmatpush1.bf16.xpose.msra.mxu0 0
        %3333 = vmatprep.subr.bf16.mxu0 0
        %3334 = vmatpush1.bf16.xpose.msra.mxu0 0
        %3335 = vmatprep.subr.bf16.mxu0 0
        %3336 = vmatpush1.bf16.xpose.msra.mxu0 0
        %3337 = vmatprep.subr.bf16.mxu0 0
        %3338 = vmatpush1.bf16.xpose.msra.mxu0 0
        %3339 = vmatprep.subr.bf16.mxu0 0
        %3340 = vmatpush1.bf16.xpose.msra.mxu0 0
        %3341 = vmatprep.subr.bf16.mxu0 0
        %3342 = vmatpush1.bf16.xpose.msra.mxu0 0
        %3343 = vmatprep.subr.bf16.mxu0 0
        %3344 = vmatpush1.bf16.xpose.msra.mxu0 %v3329
        %3345 = vmatprep.subr.bf16.mxu0 0
        %3346 = vmatpush1.bf16.xpose.msra.mxu0 %v3326
        %3347 = vmatprep.subr.bf16.mxu0 0
        %3348 = vmatpush2.bf16.xpose.msra.mxu0 0
        %3349 = vmatprep.subr.bf16.mxu0 0
        %3350 = vmatpush2.bf16.xpose.msra.mxu0 0
        %3351 = vmatprep.subr.bf16.mxu0 0
        %3352 = vmatpush2.bf16.xpose.msra.mxu0 0
        %3353 = vmatprep.subr.bf16.mxu0 0
        %3354 = vmatpush2.bf16.xpose.msra.mxu0 0
        %3355 = vmatprep.subr.bf16.mxu0 0
        %3356 = vmatpush2.bf16.xpose.msra.mxu0 0
        %3357 = vmatprep.subr.bf16.mxu0 0
        %3358 = vmatpush2.bf16.xpose.msra.mxu0 0
        %3359 = vmatprep.subr.bf16.mxu0 0
        %3360 = vmatpush2.bf16.xpose.msra.mxu0 0
        %3361 = vmatprep.subr.bf16.mxu0 0
        %3362 = vmatpush2.bf16.xpose.msra.mxu0 0
        %3363 = vmatprep.mubr.bf16.mxu0 0
        %3364 = vmatmul.mubr.bf16.gmra.mxu0 %v3323
        %v3365 = vpop.f32.mrf.mxu0
        %v3366 = vadd.f32 %v3254, %v3365
        %v3367 = vpop.f32.mrf.mxu0
        %v3368 = vpop.f32.mrf.mxu0
        %v3369 = vpop.f32.mrf.mxu0
        %3370 = vdwg.mxu0
        %v3374 = vunpack.c.l.b16 %v3244
        %v3375 = vunpack.c.l.b16 %v3245
        %v3376 = vunpack.c.l.b16 %v3246
        %v3377 = vpack.c.b16 %v3375, %v3374
        %v3378 = vpack.c.b16 %v3376, %v3376
        %v3380 = vsel %vm3264, %v3236, 0
        %v3383 = vsel %vm3264, %v3377, 0
        %v3386 = vsel %vm3264, %v3378, 0
        %3388 = vmatprep.subr.bf16.mxu0 0
        %3389 = vmatpush1.bf16.xpose.msra.mxu0 0
        %3390 = vmatprep.subr.bf16.mxu0 0
        %3391 = vmatpush1.bf16.xpose.msra.mxu0 0
        %3392 = vmatprep.subr.bf16.mxu0 0
        %3393 = vmatpush1.bf16.xpose.msra.mxu0 0
        %3394 = vmatprep.subr.bf16.mxu0 0
        %3395 = vmatpush1.bf16.xpose.msra.mxu0 0
        %3396 = vmatprep.subr.bf16.mxu0 0
        %3397 = vmatpush1.bf16.xpose.msra.mxu0 0
        %3398 = vmatprep.subr.bf16.mxu0 0
        %3399 = vmatpush1.bf16.xpose.msra.mxu0 0
        %3400 = vmatprep.subr.bf16.mxu0 0
        %3401 = vmatpush1.bf16.xpose.msra.mxu0 %v3386
        %3402 = vmatprep.subr.bf16.mxu0 0
        %3403 = vmatpush1.bf16.xpose.msra.mxu0 %v3383
        %3404 = vmatprep.subr.bf16.mxu0 0
        %3405 = vmatpush2.bf16.xpose.msra.mxu0 0
        %3406 = vmatprep.subr.bf16.mxu0 0
        %3407 = vmatpush2.bf16.xpose.msra.mxu0 0
        %3408 = vmatprep.subr.bf16.mxu0 0
        %3409 = vmatpush2.bf16.xpose.msra.mxu0 0
        %3410 = vmatprep.subr.bf16.mxu0 0
        %3411 = vmatpush2.bf16.xpose.msra.mxu0 0
        %3412 = vmatprep.subr.bf16.mxu0 0
        %3413 = vmatpush2.bf16.xpose.msra.mxu0 0
        %3414 = vmatprep.subr.bf16.mxu0 0
        %3415 = vmatpush2.bf16.xpose.msra.mxu0 0
        %3416 = vmatprep.subr.bf16.mxu0 0
        %3417 = vmatpush2.bf16.xpose.msra.mxu0 0
        %3418 = vmatprep.subr.bf16.mxu0 0
        %3419 = vmatpush2.bf16.xpose.msra.mxu0 0
        %3420 = vmatprep.mubr.bf16.mxu0 0
        %3421 = vmatmul.mubr.bf16.gmra.mxu0 %v3380
        %v3422 = vpop.f32.mrf.mxu0
        %v3423 = vadd.f32 %v3254, %v3422
        %v3424 = vpop.f32.mrf.mxu0
        %v3425 = vpop.f32.mrf.mxu0
        %v3426 = vpop.f32.mrf.mxu0
        %3427 = vdwg.mxu0
        %v3431 = vunpack.c.l.b16 %v3247
        %v3432 = vunpack.c.l.b16 %v3248
        %v3433 = vunpack.c.l.b16 %v3249
        %v3434 = vpack.c.b16 %v3432, %v3431
        %v3435 = vpack.c.b16 %v3433, %v3433
        %v3437 = vsel %vm3264, %v3237, 0
        %v3440 = vsel %vm3264, %v3434, 0
        %v3443 = vsel %vm3264, %v3435, 0
        %3445 = vmatprep.subr.bf16.mxu0 0
        %3446 = vmatpush1.bf16.xpose.msra.mxu0 0
        %3447 = vmatprep.subr.bf16.mxu0 0
        %3448 = vmatpush1.bf16.xpose.msra.mxu0 0
        %3449 = vmatprep.subr.bf16.mxu0 0
        %3450 = vmatpush1.bf16.xpose.msra.mxu0 0
        %3451 = vmatprep.subr.bf16.mxu0 0
        %3452 = vmatpush1.bf16.xpose.msra.mxu0 0
        %3453 = vmatprep.subr.bf16.mxu0 0
        %3454 = vmatpush1.bf16.xpose.msra.mxu0 0
        %3455 = vmatprep.subr.bf16.mxu0 0
        %3456 = vmatpush1.bf16.xpose.msra.mxu0 0
        %3457 = vmatprep.subr.bf16.mxu0 0
        %3458 = vmatpush1.bf16.xpose.msra.mxu0 %v3443
        %3459 = vmatprep.subr.bf16.mxu0 0
        %3460 = vmatpush1.bf16.xpose.msra.mxu0 %v3440
        %3461 = vmatprep.subr.bf16.mxu0 0
        %3462 = vmatpush2.bf16.xpose.msra.mxu0 0
        %3463 = vmatprep.subr.bf16.mxu0 0
        %3464 = vmatpush2.bf16.xpose.msra.mxu0 0
        %3465 = vmatprep.subr.bf16.mxu0 0
        %3466 = vmatpush2.bf16.xpose.msra.mxu0 0
        %3467 = vmatprep.subr.bf16.mxu0 0
        %3468 = vmatpush2.bf16.xpose.msra.mxu0 0
        %3469 = vmatprep.subr.bf16.mxu0 0
        %3470 = vmatpush2.bf16.xpose.msra.mxu0 0
        %3471 = vmatprep.subr.bf16.mxu0 0
        %3472 = vmatpush2.bf16.xpose.msra.mxu0 0
        %3473 = vmatprep.subr.bf16.mxu0 0
        %3474 = vmatpush2.bf16.xpose.msra.mxu0 0
        %3475 = vmatprep.subr.bf16.mxu0 0
        %3476 = vmatpush2.bf16.xpose.msra.mxu0 0
        %3477 = vmatprep.mubr.bf16.mxu0 0
        %3478 = vmatmul.mubr.bf16.gmra.mxu0 %v3437
        %v3479 = vpop.f32.mrf.mxu0
        %v3480 = vadd.f32 %v3254, %v3479
        %v3481 = vpop.f32.mrf.mxu0
        %v3482 = vpop.f32.mrf.mxu0
        %v3483 = vpop.f32.mrf.mxu0
        %3484 = vdwg.mxu0
        %vm3485 = vcmask 195584
        %v3486 = vsel %vm3485, %v3309, -inf
        %3487 = vmax.xlane.f32.xlu0 %v3486
        %v3488 = vpop.xlane.xlu0 %3487
        %v3489 = vsel %vm3485, %v3366, -inf
        %3490 = vmax.xlane.f32.xlu0 %v3489
        %v3491 = vpop.xlane.xlu0 %3490
        %v3492 = vsel %vm3485, %v3423, -inf
        %3493 = vmax.xlane.f32.xlu0 %v3492
        %v3494 = vpop.xlane.xlu0 %3493
        %v3495 = vsel %vm3485, %v3480, -inf
        %3496 = vmax.xlane.f32.xlu0 %v3495
        %v3497 = vpop.xlane.xlu0 %3496
        %v3498 = vsub.f32 %v3309, %v3488
        %v3499 = vsub.f32 %v3366, %v3491
        %v3500 = vsub.f32 %v3423, %v3494
        %v3501 = vsub.f32 %v3480, %v3497
        %v3502 = vmul.f32 %v3498, 1.442695
        %v3503 = vpow.pop %v3502
        %v3504 = vmul.f32 %v3499, 1.442695
        %v3505 = vpow.pop %v3504
        %v3506 = vmul.f32 %v3500, 1.442695
        %v3507 = vpow.pop %v3506
        %v3508 = vmul.f32 %v3501, 1.442695
        %v3509 = vpow.pop %v3508
        %v3510 = vsel %vm3485, %v3503, 0.0
        %3511 = vadd.xlane.f32.xlu0 %v3510
        %v3512 = vpop.xlane.xlu0 %3511
        %v3513 = vsel %vm3485, %v3505, 0.0
        %3514 = vadd.xlane.f32.xlu0 %v3513
        %v3515 = vpop.xlane.xlu0 %3514
        %v3516 = vsel %vm3485, %v3507, 0.0
        %3517 = vadd.xlane.f32.xlu0 %v3516
        %v3518 = vpop.xlane.xlu0 %3517
        %v3519 = vsel %vm3485, %v3509, 0.0
        %3520 = vadd.xlane.f32.xlu0 %v3519
        %v3521 = vpop.xlane.xlu0 %3520
        %v3522 = vrcp.pop %v3512
        %v3523 = vrcp.pop %v3515
        %v3524 = vrcp.pop %v3518
        %v3525 = vrcp.pop %v3521
        %v3526 = vmul.f32 %v3503, %v3522
        %v3527 = vmul.f32 %v3505, %v3523
        %v3528 = vmul.f32 %v3507, %v3524
        %v3529 = vmul.f32 %v3509, %v3525
        %v3530 = vpack.c.bf16 %v3526, %v3526
        %v3531 = vpack.c.bf16 %v3527, %v3527
        %v3532 = vpack.c.bf16 %v3528, %v3528
        %v3533 = vpack.c.bf16 %v3529, %v3529
        %v3534 = vld [vmem:[#allocation3] sm:$0xf]
        %v3535 = vld [vmem:[#allocation3 + $0x4] sm:$0xf]
        %v3536 = vld [vmem:[#allocation3 + $0x8] sm:$0xf]
        %v3537 = vld [vmem:[#allocation3 + $0xc] sm:$0xf]
        %v3538 = vld [vmem:[#allocation3 + $0x10] sm:$0xf]
        %v3539 = vld [vmem:[#allocation3 + $0x14] sm:$0xf]
        %v3540 = vld [vmem:[#allocation3 + $0x18] sm:$0xf]
        %v3541 = vld [vmem:[#allocation3 + $0x1c] sm:$0xf]
        %v3542 = vld [vmem:[#allocation3 + $0x20] sm:$0xf]
        %v3543 = vld [vmem:[#allocation3 + $0x24] sm:$0xf]
        %v3544 = vld [vmem:[#allocation3 + $0x28] sm:$0xf]
        %v3545 = vld [vmem:[#allocation3 + $0x2c] sm:$0xf]
        %v3549 = vunpack.c.l.b16 %v3534
        %v3550 = vunpack.c.l.b16 %v3535
        %v3551 = vunpack.c.l.b16 %v3536
        %v3552 = vpack.c.b16 %v3550, %v3549
        %v3553 = vpack.c.b16 %v3551, %v3551
        %v3556 = vsel %vm3485, %v3530, 0
        %vm3558 = vcmask 1043456
        %v3560 = vsel %vm3558, %v3553, 0
        %3562 = vmatprep.subr.bf16.mxu0 0
        %3563 = vmatpush1.bf16.msra.mxu0 0
        %3564 = vmatprep.subr.bf16.mxu0 0
        %3565 = vmatpush1.bf16.msra.mxu0 0
        %3566 = vmatprep.subr.bf16.mxu0 0
        %3567 = vmatpush1.bf16.msra.mxu0 0
        %3568 = vmatprep.subr.bf16.mxu0 0
        %3569 = vmatpush1.bf16.msra.mxu0 0
        %3570 = vmatprep.subr.bf16.mxu0 0
        %3571 = vmatpush1.bf16.msra.mxu0 0
        %3572 = vmatprep.subr.bf16.mxu0 0
        %3573 = vmatpush1.bf16.msra.mxu0 0
        %3574 = vmatprep.subr.bf16.mxu0 0
        %3575 = vmatpush1.bf16.msra.mxu0 %v3560
        %3576 = vmatprep.subr.bf16.mxu0 0
        %3577 = vmatpush1.bf16.msra.mxu0 %v3552
        %3578 = vmatprep.subr.bf16.mxu0 0
        %3579 = vmatpush2.bf16.msra.mxu0 0
        %3580 = vmatprep.subr.bf16.mxu0 0
        %3581 = vmatpush2.bf16.msra.mxu0 0
        %3582 = vmatprep.subr.bf16.mxu0 0
        %3583 = vmatpush2.bf16.msra.mxu0 0
        %3584 = vmatprep.subr.bf16.mxu0 0
        %3585 = vmatpush2.bf16.msra.mxu0 0
        %3586 = vmatprep.subr.bf16.mxu0 0
        %3587 = vmatpush2.bf16.msra.mxu0 0
        %3588 = vmatprep.subr.bf16.mxu0 0
        %3589 = vmatpush2.bf16.msra.mxu0 0
        %3590 = vmatprep.subr.bf16.mxu0 0
        %3591 = vmatpush2.bf16.msra.mxu0 0
        %3592 = vmatprep.subr.bf16.mxu0 0
        %3593 = vmatpush2.bf16.msra.mxu0 0
        %3594 = vmatprep.mubr.bf16.mxu0 0
        %3595 = vmatmul.mubr.bf16.gmra.mxu0 %v3556
        %v3596 = vpop.f32.mrf.mxu0
        %v3597 = vadd.f32 0.0, %v3596
        %v3598 = vpop.f32.mrf.mxu0
        %v3599 = vpop.f32.mrf.mxu0
        %v3600 = vpop.f32.mrf.mxu0
        %3601 = vdwg.mxu0
        %v3605 = vunpack.c.l.b16 %v3537
        %v3606 = vunpack.c.l.b16 %v3538
        %v3607 = vunpack.c.l.b16 %v3539
        %v3608 = vpack.c.b16 %v3606, %v3605
        %v3609 = vpack.c.b16 %v3607, %v3607
        %v3612 = vsel %vm3485, %v3531, 0
        %v3615 = vsel %vm3558, %v3609, 0
        %3617 = vmatprep.subr.bf16.mxu0 0
        %3618 = vmatpush1.bf16.msra.mxu0 0
        %3619 = vmatprep.subr.bf16.mxu0 0
        %3620 = vmatpush1.bf16.msra.mxu0 0
        %3621 = vmatprep.subr.bf16.mxu0 0
        %3622 = vmatpush1.bf16.msra.mxu0 0
        %3623 = vmatprep.subr.bf16.mxu0 0
        %3624 = vmatpush1.bf16.msra.mxu0 0
        %3625 = vmatprep.subr.bf16.mxu0 0
        %3626 = vmatpush1.bf16.msra.mxu0 0
        %3627 = vmatprep.subr.bf16.mxu0 0
        %3628 = vmatpush1.bf16.msra.mxu0 0
        %3629 = vmatprep.subr.bf16.mxu0 0
        %3630 = vmatpush1.bf16.msra.mxu0 %v3615
        %3631 = vmatprep.subr.bf16.mxu0 0
        %3632 = vmatpush1.bf16.msra.mxu0 %v3608
        %3633 = vmatprep.subr.bf16.mxu0 0
        %3634 = vmatpush2.bf16.msra.mxu0 0
        %3635 = vmatprep.subr.bf16.mxu0 0
        %3636 = vmatpush2.bf16.msra.mxu0 0
        %3637 = vmatprep.subr.bf16.mxu0 0
        %3638 = vmatpush2.bf16.msra.mxu0 0
        %3639 = vmatprep.subr.bf16.mxu0 0
        %3640 = vmatpush2.bf16.msra.mxu0 0
        %3641 = vmatprep.subr.bf16.mxu0 0
        %3642 = vmatpush2.bf16.msra.mxu0 0
        %3643 = vmatprep.subr.bf16.mxu0 0
        %3644 = vmatpush2.bf16.msra.mxu0 0
        %3645 = vmatprep.subr.bf16.mxu0 0
        %3646 = vmatpush2.bf16.msra.mxu0 0
        %3647 = vmatprep.subr.bf16.mxu0 0
        %3648 = vmatpush2.bf16.msra.mxu0 0
        %3649 = vmatprep.mubr.bf16.mxu0 0
        %3650 = vmatmul.mubr.bf16.gmra.mxu0 %v3612
        %v3651 = vpop.f32.mrf.mxu0
        %v3652 = vadd.f32 0.0, %v3651
        %v3653 = vpop.f32.mrf.mxu0
        %v3654 = vpop.f32.mrf.mxu0
        %v3655 = vpop.f32.mrf.mxu0
        %3656 = vdwg.mxu0
        %v3660 = vunpack.c.l.b16 %v3540
        %v3661 = vunpack.c.l.b16 %v3541
        %v3662 = vunpack.c.l.b16 %v3542
        %v3663 = vpack.c.b16 %v3661, %v3660
        %v3664 = vpack.c.b16 %v3662, %v3662
        %v3667 = vsel %vm3485, %v3532, 0
        %v3670 = vsel %vm3558, %v3664, 0
        %3672 = vmatprep.subr.bf16.mxu0 0
        %3673 = vmatpush1.bf16.msra.mxu0 0
        %3674 = vmatprep.subr.bf16.mxu0 0
        %3675 = vmatpush1.bf16.msra.mxu0 0
        %3676 = vmatprep.subr.bf16.mxu0 0
        %3677 = vmatpush1.bf16.msra.mxu0 0
        %3678 = vmatprep.subr.bf16.mxu0 0
        %3679 = vmatpush1.bf16.msra.mxu0 0
        %3680 = vmatprep.subr.bf16.mxu0 0
        %3681 = vmatpush1.bf16.msra.mxu0 0
        %3682 = vmatprep.subr.bf16.mxu0 0
        %3683 = vmatpush1.bf16.msra.mxu0 0
        %3684 = vmatprep.subr.bf16.mxu0 0
        %3685 = vmatpush1.bf16.msra.mxu0 %v3670
        %3686 = vmatprep.subr.bf16.mxu0 0
        %3687 = vmatpush1.bf16.msra.mxu0 %v3663
        %3688 = vmatprep.subr.bf16.mxu0 0
        %3689 = vmatpush2.bf16.msra.mxu0 0
        %3690 = vmatprep.subr.bf16.mxu0 0
        %3691 = vmatpush2.bf16.msra.mxu0 0
        %3692 = vmatprep.subr.bf16.mxu0 0
        %3693 = vmatpush2.bf16.msra.mxu0 0
        %3694 = vmatprep.subr.bf16.mxu0 0
        %3695 = vmatpush2.bf16.msra.mxu0 0
        %3696 = vmatprep.subr.bf16.mxu0 0
        %3697 = vmatpush2.bf16.msra.mxu0 0
        %3698 = vmatprep.subr.bf16.mxu0 0
        %3699 = vmatpush2.bf16.msra.mxu0 0
        %3700 = vmatprep.subr.bf16.mxu0 0
        %3701 = vmatpush2.bf16.msra.mxu0 0
        %3702 = vmatprep.subr.bf16.mxu0 0
        %3703 = vmatpush2.bf16.msra.mxu0 0
        %3704 = vmatprep.mubr.bf16.mxu0 0
        %3705 = vmatmul.mubr.bf16.gmra.mxu0 %v3667
        %v3706 = vpop.f32.mrf.mxu0
        %v3707 = vadd.f32 0.0, %v3706
        %v3708 = vpop.f32.mrf.mxu0
        %v3709 = vpop.f32.mrf.mxu0
        %v3710 = vpop.f32.mrf.mxu0
        %3711 = vdwg.mxu0
        %v3715 = vunpack.c.l.b16 %v3543
        %v3716 = vunpack.c.l.b16 %v3544
        %v3717 = vunpack.c.l.b16 %v3545
        %v3718 = vpack.c.b16 %v3716, %v3715
        %v3719 = vpack.c.b16 %v3717, %v3717
        %v3722 = vsel %vm3485, %v3533, 0
        %v3725 = vsel %vm3558, %v3719, 0
        %3727 = vmatprep.subr.bf16.mxu0 0
        %3728 = vmatpush1.bf16.msra.mxu0 0
        %3729 = vmatprep.subr.bf16.mxu0 0
        %3730 = vmatpush1.bf16.msra.mxu0 0
        %3731 = vmatprep.subr.bf16.mxu0 0
        %3732 = vmatpush1.bf16.msra.mxu0 0
        %3733 = vmatprep.subr.bf16.mxu0 0
        %3734 = vmatpush1.bf16.msra.mxu0 0
        %3735 = vmatprep.subr.bf16.mxu0 0
        %3736 = vmatpush1.bf16.msra.mxu0 0
        %3737 = vmatprep.subr.bf16.mxu0 0
        %3738 = vmatpush1.bf16.msra.mxu0 0
        %3739 = vmatprep.subr.bf16.mxu0 0
        %3740 = vmatpush1.bf16.msra.mxu0 %v3725
        %3741 = vmatprep.subr.bf16.mxu0 0
        %3742 = vmatpush1.bf16.msra.mxu0 %v3718
        %3743 = vmatprep.subr.bf16.mxu0 0
        %3744 = vmatpush2.bf16.msra.mxu0 0
        %3745 = vmatprep.subr.bf16.mxu0 0
        %3746 = vmatpush2.bf16.msra.mxu0 0
        %3747 = vmatprep.subr.bf16.mxu0 0
        %3748 = vmatpush2.bf16.msra.mxu0 0
        %3749 = vmatprep.subr.bf16.mxu0 0
        %3750 = vmatpush2.bf16.msra.mxu0 0
        %3751 = vmatprep.subr.bf16.mxu0 0
        %3752 = vmatpush2.bf16.msra.mxu0 0
        %3753 = vmatprep.subr.bf16.mxu0 0
        %3754 = vmatpush2.bf16.msra.mxu0 0
        %3755 = vmatprep.subr.bf16.mxu0 0
        %3756 = vmatpush2.bf16.msra.mxu0 0
        %3757 = vmatprep.subr.bf16.mxu0 0
        %3758 = vmatpush2.bf16.msra.mxu0 0
        %3759 = vmatprep.mubr.bf16.mxu0 0
        %3760 = vmatmul.mubr.bf16.gmra.mxu0 %v3722
        %v3761 = vpop.f32.mrf.mxu0
        %v3762 = vadd.f32 0.0, %v3761
        %v3763 = vpop.f32.mrf.mxu0
        %v3764 = vpop.f32.mrf.mxu0
        %v3765 = vpop.f32.mrf.mxu0
        %3766 = vdwg.mxu0
        %v3767 = vpack.c.bf16 %v3597, %v3597
        %v3768 = vpack.c.bf16 %v3652, %v3652
        %v3769 = vpack.c.bf16 %v3707, %v3707
        %v3770 = vpack.c.bf16 %v3762, %v3762
        %v3771 = vld [vmem:[%s21] sm:$0xf]
        %v3772 = vld [vmem:[%s21 + $0x4] sm:$0xf]
        %v3773 = vld [vmem:[%s21 + $0x8] sm:$0xf]
        %v3774 = vld [vmem:[%s21 + $0xc] sm:$0xf]
        %v3776 = vsel %vm3264, %v3767, 0
        %v3779 = vsel %vm3558, %v3771, 0
        %3781 = vmatprep.subr.bf16.mxu0 0
        %3782 = vmatpush1.bf16.msra.mxu0 0
        %3783 = vmatprep.subr.bf16.mxu0 0
        %3784 = vmatpush1.bf16.msra.mxu0 0
        %3785 = vmatprep.subr.bf16.mxu0 0
        %3786 = vmatpush1.bf16.msra.mxu0 0
        %3787 = vmatprep.subr.bf16.mxu0 0
        %3788 = vmatpush1.bf16.msra.mxu0 0
        %3789 = vmatprep.subr.bf16.mxu0 0
        %3790 = vmatpush1.bf16.msra.mxu0 0
        %3791 = vmatprep.subr.bf16.mxu0 0
        %3792 = vmatpush1.bf16.msra.mxu0 0
        %3793 = vmatprep.subr.bf16.mxu0 0
        %3794 = vmatpush1.bf16.msra.mxu0 0
        %3795 = vmatprep.subr.bf16.mxu0 0
        %3796 = vmatpush1.bf16.msra.mxu0 %v3779
        %3797 = vmatprep.subr.bf16.mxu0 0
        %3798 = vmatpush2.bf16.msra.mxu0 0
        %3799 = vmatprep.subr.bf16.mxu0 0
        %3800 = vmatpush2.bf16.msra.mxu0 0
        %3801 = vmatprep.subr.bf16.mxu0 0
        %3802 = vmatpush2.bf16.msra.mxu0 0
        %3803 = vmatprep.subr.bf16.mxu0 0
        %3804 = vmatpush2.bf16.msra.mxu0 0
        %3805 = vmatprep.subr.bf16.mxu0 0
        %3806 = vmatpush2.bf16.msra.mxu0 0
        %3807 = vmatprep.subr.bf16.mxu0 0
        %3808 = vmatpush2.bf16.msra.mxu0 0
        %3809 = vmatprep.subr.bf16.mxu0 0
        %3810 = vmatpush2.bf16.msra.mxu0 0
        %3811 = vmatprep.subr.bf16.mxu0 0
        %3812 = vmatpush2.bf16.msra.mxu0 0
        %3813 = vmatprep.mubr.bf16.mxu0 0
        %3814 = vmatmul.mubr.bf16.gmra.mxu0 %v3776
        %v3815 = vpop.f32.mrf.mxu0
        %v3816 = vadd.f32 0.0, %v3815
        %v3817 = vpop.f32.mrf.mxu0
        %v3818 = vpop.f32.mrf.mxu0
        %v3819 = vpop.f32.mrf.mxu0
        %3820 = vdwg.mxu0
        %v3822 = vsel %vm3264, %v3768, 0
        %v3825 = vsel %vm3558, %v3772, 0
        %3827 = vmatprep.subr.bf16.mxu0 0
        %3828 = vmatpush1.bf16.msra.mxu0 0
        %3829 = vmatprep.subr.bf16.mxu0 0
        %3830 = vmatpush1.bf16.msra.mxu0 0
        %3831 = vmatprep.subr.bf16.mxu0 0
        %3832 = vmatpush1.bf16.msra.mxu0 0
        %3833 = vmatprep.subr.bf16.mxu0 0
        %3834 = vmatpush1.bf16.msra.mxu0 0
        %3835 = vmatprep.subr.bf16.mxu0 0
        %3836 = vmatpush1.bf16.msra.mxu0 0
        %3837 = vmatprep.subr.bf16.mxu0 0
        %3838 = vmatpush1.bf16.msra.mxu0 0
        %3839 = vmatprep.subr.bf16.mxu0 0
        %3840 = vmatpush1.bf16.msra.mxu0 0
        %3841 = vmatprep.subr.bf16.mxu0 0
        %3842 = vmatpush1.bf16.msra.mxu0 %v3825
        %3843 = vmatprep.subr.bf16.mxu0 0
        %3844 = vmatpush2.bf16.msra.mxu0 0
        %3845 = vmatprep.subr.bf16.mxu0 0
        %3846 = vmatpush2.bf16.msra.mxu0 0
        %3847 = vmatprep.subr.bf16.mxu0 0
        %3848 = vmatpush2.bf16.msra.mxu0 0
        %3849 = vmatprep.subr.bf16.mxu0 0
        %3850 = vmatpush2.bf16.msra.mxu0 0
        %3851 = vmatprep.subr.bf16.mxu0 0
        %3852 = vmatpush2.bf16.msra.mxu0 0
        %3853 = vmatprep.subr.bf16.mxu0 0
        %3854 = vmatpush2.bf16.msra.mxu0 0
        %3855 = vmatprep.subr.bf16.mxu0 0
        %3856 = vmatpush2.bf16.msra.mxu0 0
        %3857 = vmatprep.subr.bf16.mxu0 0
        %3858 = vmatpush2.bf16.msra.mxu0 0
        %3859 = vmatprep.mubr.bf16.mxu0 0
        %3860 = vmatmul.mubr.bf16.gmra.mxu0 %v3822
        %v3861 = vpop.f32.mrf.mxu0
        %v3862 = vadd.f32 0.0, %v3861
        %v3863 = vpop.f32.mrf.mxu0
        %v3864 = vpop.f32.mrf.mxu0
        %v3865 = vpop.f32.mrf.mxu0
        %3866 = vdwg.mxu0
        %v3868 = vsel %vm3264, %v3769, 0
        %v3871 = vsel %vm3558, %v3773, 0
        %3873 = vmatprep.subr.bf16.mxu0 0
        %3874 = vmatpush1.bf16.msra.mxu0 0
        %3875 = vmatprep.subr.bf16.mxu0 0
        %3876 = vmatpush1.bf16.msra.mxu0 0
        %3877 = vmatprep.subr.bf16.mxu0 0
        %3878 = vmatpush1.bf16.msra.mxu0 0
        %3879 = vmatprep.subr.bf16.mxu0 0
        %3880 = vmatpush1.bf16.msra.mxu0 0
        %3881 = vmatprep.subr.bf16.mxu0 0
        %3882 = vmatpush1.bf16.msra.mxu0 0
        %3883 = vmatprep.subr.bf16.mxu0 0
        %3884 = vmatpush1.bf16.msra.mxu0 0
        %3885 = vmatprep.subr.bf16.mxu0 0
        %3886 = vmatpush1.bf16.msra.mxu0 0
        %3887 = vmatprep.subr.bf16.mxu0 0
        %3888 = vmatpush1.bf16.msra.mxu0 %v3871
        %3889 = vmatprep.subr.bf16.mxu0 0
        %3890 = vmatpush2.bf16.msra.mxu0 0
        %3891 = vmatprep.subr.bf16.mxu0 0
        %3892 = vmatpush2.bf16.msra.mxu0 0
        %3893 = vmatprep.subr.bf16.mxu0 0
        %3894 = vmatpush2.bf16.msra.mxu0 0
        %3895 = vmatprep.subr.bf16.mxu0 0
        %3896 = vmatpush2.bf16.msra.mxu0 0
        %3897 = vmatprep.subr.bf16.mxu0 0
        %3898 = vmatpush2.bf16.msra.mxu0 0
        %3899 = vmatprep.subr.bf16.mxu0 0
        %3900 = vmatpush2.bf16.msra.mxu0 0
        %3901 = vmatprep.subr.bf16.mxu0 0
        %3902 = vmatpush2.bf16.msra.mxu0 0
        %3903 = vmatprep.subr.bf16.mxu0 0
        %3904 = vmatpush2.bf16.msra.mxu0 0
        %3905 = vmatprep.mubr.bf16.mxu0 0
        %3906 = vmatmul.mubr.bf16.gmra.mxu0 %v3868
        %v3907 = vpop.f32.mrf.mxu0
        %v3908 = vadd.f32 0.0, %v3907
        %v3909 = vpop.f32.mrf.mxu0
        %v3910 = vpop.f32.mrf.mxu0
        %v3911 = vpop.f32.mrf.mxu0
        %3912 = vdwg.mxu0
        %v3914 = vsel %vm3264, %v3770, 0
        %v3917 = vsel %vm3558, %v3774, 0
        %3919 = vmatprep.subr.bf16.mxu0 0
        %3920 = vmatpush1.bf16.msra.mxu0 0
        %3921 = vmatprep.subr.bf16.mxu0 0
        %3922 = vmatpush1.bf16.msra.mxu0 0
        %3923 = vmatprep.subr.bf16.mxu0 0
        %3924 = vmatpush1.bf16.msra.mxu0 0
        %3925 = vmatprep.subr.bf16.mxu0 0
        %3926 = vmatpush1.bf16.msra.mxu0 0
        %3927 = vmatprep.subr.bf16.mxu0 0
        %3928 = vmatpush1.bf16.msra.mxu0 0
        %3929 = vmatprep.subr.bf16.mxu0 0
        %3930 = vmatpush1.bf16.msra.mxu0 0
        %3931 = vmatprep.subr.bf16.mxu0 0
        %3932 = vmatpush1.bf16.msra.mxu0 0
        %3933 = vmatprep.subr.bf16.mxu0 0
        %3934 = vmatpush1.bf16.msra.mxu0 %v3917
        %3935 = vmatprep.subr.bf16.mxu0 0
        %3936 = vmatpush2.bf16.msra.mxu0 0
        %3937 = vmatprep.subr.bf16.mxu0 0
        %3938 = vmatpush2.bf16.msra.mxu0 0
        %3939 = vmatprep.subr.bf16.mxu0 0
        %3940 = vmatpush2.bf16.msra.mxu0 0
        %3941 = vmatprep.subr.bf16.mxu0 0
        %3942 = vmatpush2.bf16.msra.mxu0 0
        %3943 = vmatprep.subr.bf16.mxu0 0
        %3944 = vmatpush2.bf16.msra.mxu0 0
        %3945 = vmatprep.subr.bf16.mxu0 0
        %3946 = vmatpush2.bf16.msra.mxu0 0
        %3947 = vmatprep.subr.bf16.mxu0 0
        %3948 = vmatpush2.bf16.msra.mxu0 0
        %3949 = vmatprep.subr.bf16.mxu0 0
        %3950 = vmatpush2.bf16.msra.mxu0 0
        %3951 = vmatprep.mubr.bf16.mxu0 0
        %3952 = vmatmul.mubr.bf16.gmra.mxu0 %v3914
        %v3953 = vpop.f32.mrf.mxu0
        %v3954 = vadd.f32 0.0, %v3953
        %v3955 = vpop.f32.mrf.mxu0
        %v3956 = vpop.f32.mrf.mxu0
        %v3957 = vpop.f32.mrf.mxu0
        %3958 = vdwg.mxu0
        %v3959 = vsel %vm2983, %v3816, 0.0
        %v3960 = vsel %vm2983, %v3862, 0.0
        %v3961 = vadd.f32 %v3959, %v3960
        %v3962 = vsel %vm2983, %v3908, 0.0
        %v3963 = vadd.f32 %v3961, %v3962
        %v3964 = vsel %vm2983, %v3954, 0.0
        %v3965 = vadd.f32 %v3963, %v3964
        %v3966 = vld [vmem:[%s23] sm:$0x1]
        %v3968 = vlaneseq
        %v3969 = vshrl.u32 %v3968, 7
        %v3970 = vsub.s32 0, %v3969
        %v3971 = vrot.slane %v3966, %v3970
        %v3973 = vadd.f32 %v3965, %v3971
        %v3974 = vadd.f32 %v2958, %v3973
        %v3975 = vld [vmem:[%s25] sm:$0x1]
        %v3976 = vld [vmem:[%s27] sm:$0x1]
        %v3977 = vsel %vm2983, %v3974, 0.0
        %3978 = vadd.xlane.f32.xlu0 %v3977
        %v3979 = vpop.xlane.xlu0 %3978
        %v3980 = vrcp.pop 32.0
        %v3981 = vmul.f32 %v3979, %v3980
        %v3982 = vsub.f32 %v3974, %v3981
        %v3983 = vmul.f32 %v3982, %v3982
        %v3984 = vsel %vm2983, %v3983, 0.0
        %3985 = vadd.xlane.f32.xlu0 %v3984
        %v3986 = vpop.xlane.xlu0 %3985
        %v3987 = vmul.f32 %v3986, %v3980
        %v3988 = vadd.f32 %v3987, 1e-05
        %v3989 = vrsqrt.pop %v3988
        %v3990 = vmul.f32 %v3982, %v3989
        %v3992 = vlaneseq
        %v3993 = vshrl.u32 %v3992, 7
        %v3994 = vsub.s32 0, %v3993
        %v3995 = vrot.slane %v3975, %v3994
        %v3997 = vmul.f32 %v3990, %v3995
        %v3999 = vlaneseq
        %v4000 = vshrl.u32 %v3999, 7
        %v4001 = vsub.s32 0, %v4000
        %v4002 = vrot.slane %v3976, %v4001
        %v4004 = vadd.f32 %v3997, %v4002
        %v4005 = vpack.c.bf16 %v4004, %v4004
        %v4006 = vld [vmem:[%s29] sm:$0xf]
        %v4007 = vld [vmem:[%s29 + $0x4] sm:$0xf]
        %v4008 = vld [vmem:[%s29 + $0x8] sm:$0xf]
        %v4009 = vld [vmem:[%s29 + $0xc] sm:$0xf]
        %v4010 = vld [vmem:[%s31] sm:$0x1]
        %v4012 = vlaneseq
        %v4013 = vshrl.u32 %v4012, 7
        %v4014 = vsub.s32 0, %v4013
        %v4015 = vrot.slane %v4010, %v4014
        %v4021 = vunpack.c.l.b16 %v4006
        %v4022 = vunpack.c.l.b16 %v4007
        %v4023 = vunpack.c.l.b16 %v4008
        %v4024 = vunpack.c.l.b16 %v4009
        %v4025 = vpack.c.b16 %v4022, %v4021
        %v4026 = vpack.c.b16 %v4024, %v4023
        %v4030 = vsel %vm2983, %v4005, 0
        %4032 = vmatprep.subr.bf16.mxu0 0
        %4033 = vmatpush1.bf16.msra.mxu0 0
        %4034 = vmatprep.subr.bf16.mxu0 0
        %4035 = vmatpush1.bf16.msra.mxu0 0
        %4036 = vmatprep.subr.bf16.mxu0 0
        %4037 = vmatpush1.bf16.msra.mxu0 0
        %4038 = vmatprep.subr.bf16.mxu0 0
        %4039 = vmatpush1.bf16.msra.mxu0 0
        %4040 = vmatprep.subr.bf16.mxu0 0
        %4041 = vmatpush1.bf16.msra.mxu0 0
        %4042 = vmatprep.subr.bf16.mxu0 0
        %4043 = vmatpush1.bf16.msra.mxu0 0
        %4044 = vmatprep.subr.bf16.mxu0 0
        %4045 = vmatpush1.bf16.msra.mxu0 %v4026
        %4046 = vmatprep.subr.bf16.mxu0 0
        %4047 = vmatpush1.bf16.msra.mxu0 %v4025
        %4048 = vmatprep.subr.bf16.mxu0 0
        %4049 = vmatpush2.bf16.msra.mxu0 0
        %4050 = vmatprep.subr.bf16.mxu0 0
        %4051 = vmatpush2.bf16.msra.mxu0 0
        %4052 = vmatprep.subr.bf16.mxu0 0
        %4053 = vmatpush2.bf16.msra.mxu0 0
        %4054 = vmatprep.subr.bf16.mxu0 0
        %4055 = vmatpush2.bf16.msra.mxu0 0
        %4056 = vmatprep.subr.bf16.mxu0 0
        %4057 = vmatpush2.bf16.msra.mxu0 0
        %4058 = vmatprep.subr.bf16.mxu0 0
        %4059 = vmatpush2.bf16.msra.mxu0 0
        %4060 = vmatprep.subr.bf16.mxu0 0
        %4061 = vmatpush2.bf16.msra.mxu0 0
        %4062 = vmatprep.subr.bf16.mxu0 0
        %4063 = vmatpush2.bf16.msra.mxu0 0
        %4064 = vmatprep.mubr.bf16.mxu0 0
        %4065 = vmatmul.mubr.bf16.gmra.mxu0 %v4030
        %v4066 = vpop.f32.mrf.mxu0
        %v4067 = vadd.f32 %v4015, %v4066
        %v4068 = vpop.f32.mrf.mxu0
        %v4069 = vpop.f32.mrf.mxu0
        %v4070 = vpop.f32.mrf.mxu0
        %4071 = vdwg.mxu0
        %v4072 = vmul.f32 %v4067, 0.5
        %v4073 = vmul.f32 %v4067, 0.70710677
        %v4074 = verf.f32.pop %v4073
        %v4075 = vadd.f32 %v4074, 1.0
        %v4076 = vmul.f32 %v4072, %v4075
        %v4077 = vpack.c.bf16 %v4076, %v4076
        %v4078 = vld [vmem:[%s33] sm:$0xf]
        %v4079 = vld [vmem:[%s33 + $0x4] sm:$0xf]
        %v4080 = vld [vmem:[%s33 + $0x8] sm:$0xf]
        %v4081 = vld [vmem:[%s33 + $0xc] sm:$0xf]
        %v4082 = vld [vmem:[%s33 + $0x10] sm:$0xf]
        %v4083 = vld [vmem:[%s33 + $0x14] sm:$0xf]
        %v4084 = vld [vmem:[%s33 + $0x18] sm:$0xf]
        %v4085 = vld [vmem:[%s33 + $0x1c] sm:$0xf]
        %v4086 = vld [vmem:[%s35] sm:$0x1]
        %v4088 = vlaneseq
        %v4089 = vshrl.u32 %v4088, 7
        %v4090 = vsub.s32 0, %v4089
        %v4091 = vrot.slane %v4086, %v4090
        %v4101 = vunpack.c.l.b16 %v4078
        %v4102 = vunpack.c.l.b16 %v4079
        %v4103 = vunpack.c.l.b16 %v4080
        %v4104 = vunpack.c.l.b16 %v4081
        %v4105 = vunpack.c.l.b16 %v4082
        %v4106 = vunpack.c.l.b16 %v4083
        %v4107 = vunpack.c.l.b16 %v4084
        %v4108 = vunpack.c.l.b16 %v4085
        %v4109 = vpack.c.b16 %v4102, %v4101
        %v4110 = vpack.c.b16 %v4104, %v4103
        %v4111 = vpack.c.b16 %v4106, %v4105
        %v4112 = vpack.c.b16 %v4108, %v4107
        %vm4117 = vcmask 523264
        %v4119 = vsel %vm4117, %v4077, 0
        %4121 = vmatprep.subr.bf16.mxu0 0
        %4122 = vmatpush1.bf16.msra.mxu0 0
        %4123 = vmatprep.subr.bf16.mxu0 0
        %4124 = vmatpush1.bf16.msra.mxu0 0
        %4125 = vmatprep.subr.bf16.mxu0 0
        %4126 = vmatpush1.bf16.msra.mxu0 0
        %4127 = vmatprep.subr.bf16.mxu0 0
        %4128 = vmatpush1.bf16.msra.mxu0 0
        %4129 = vmatprep.subr.bf16.mxu0 0
        %4130 = vmatpush1.bf16.msra.mxu0 %v4112
        %4131 = vmatprep.subr.bf16.mxu0 0
        %4132 = vmatpush1.bf16.msra.mxu0 %v4111
        %4133 = vmatprep.subr.bf16.mxu0 0
        %4134 = vmatpush1.bf16.msra.mxu0 %v4110
        %4135 = vmatprep.subr.bf16.mxu0 0
        %4136 = vmatpush1.bf16.msra.mxu0 %v4109
        %4137 = vmatprep.subr.bf16.mxu0 0
        %4138 = vmatpush2.bf16.msra.mxu0 0
        %4139 = vmatprep.subr.bf16.mxu0 0
        %4140 = vmatpush2.bf16.msra.mxu0 0
        %4141 = vmatprep.subr.bf16.mxu0 0
        %4142 = vmatpush2.bf16.msra.mxu0 0
        %4143 = vmatprep.subr.bf16.mxu0 0
        %4144 = vmatpush2.bf16.msra.mxu0 0
        %4145 = vmatprep.subr.bf16.mxu0 0
        %4146 = vmatpush2.bf16.msra.mxu0 0
        %4147 = vmatprep.subr.bf16.mxu0 0
        %4148 = vmatpush2.bf16.msra.mxu0 0
        %4149 = vmatprep.subr.bf16.mxu0 0
        %4150 = vmatpush2.bf16.msra.mxu0 0
        %4151 = vmatprep.subr.bf16.mxu0 0
        %4152 = vmatpush2.bf16.msra.mxu0 0
        %4153 = vmatprep.mubr.bf16.mxu0 0
        %4154 = vmatmul.mubr.bf16.gmra.mxu0 %v4119
        %v4155 = vpop.f32.mrf.mxu0
        %v4156 = vadd.f32 %v4091, %v4155
        %v4157 = vpop.f32.mrf.mxu0
        %v4158 = vpop.f32.mrf.mxu0
        %v4159 = vpop.f32.mrf.mxu0
        %4160 = vdwg.mxu0
        %v4161 = vadd.f32 %v4004, %v4156
        %v4162 = vld [vmem:[%s37] sm:$0x1]
        %v4163 = vld [vmem:[%s39] sm:$0x1]
        %v4164 = vsel %vm2983, %v4161, 0.0
        %4165 = vadd.xlane.f32.xlu0 %v4164
        %v4166 = vpop.xlane.xlu0 %4165
        %v4167 = vmul.f32 %v4166, %v3980
        %v4168 = vsub.f32 %v4161, %v4167
        %v4169 = vmul.f32 %v4168, %v4168
        %v4170 = vsel %vm2983, %v4169, 0.0
        %4171 = vadd.xlane.f32.xlu0 %v4170
        %v4172 = vpop.xlane.xlu0 %4171
        %v4173 = vmul.f32 %v4172, %v3980
        %v4174 = vadd.f32 %v4173, 1e-05
        %v4175 = vrsqrt.pop %v4174
        %v4176 = vmul.f32 %v4168, %v4175
        %v4178 = vlaneseq
        %v4179 = vshrl.u32 %v4178, 7
        %v4180 = vsub.s32 0, %v4179
        %v4181 = vrot.slane %v4162, %v4180
        %v4183 = vmul.f32 %v4176, %v4181
        %v4185 = vlaneseq
        %v4186 = vshrl.u32 %v4185, 7
        %v4187 = vsub.s32 0, %v4186
        %v4188 = vrot.slane %v4163, %v4187
        %v4190 = vadd.f32 %v4183, %v4188
        %4191 = vst.msk [vmem:[%s960] sm:$0xff] %vm2983, %v4190
        %s4192 = sand.u32 %s709, 1
        %s4193 = scalar_lea.sflag [#allocation7], %s4192
        %s4194 = sand.u32 %s709, 1
        %s4195 = smul.addr %s4194, 8
        %s4196 = scalar_lea.vmem [#allocation6], %s4195
        %s4197 = sand.u32 %s735, 1
        %s4198 = scalar_lea.sflag [#allocation9], %s4197
        %s4199 = sand.u32 %s735, 1
        %s4200 = smul.addr %s4199, 8
        %s4201 = scalar_lea.vmem [#allocation8], %s4200
        // Predicated region
        $region137: #{tpu_custom_call.1} parent=131 // pred_check
          %p4202 = pneg %p719
        $region138: #{tpu_custom_call.1} parent=131 // pred_check_branch
          %4204 = sbr.rel (%p4202) target = $region140
        $region139: #{tpu_custom_call.1} parent=131 // pred_region
          %s4206 = ssub.s32 128, 128
          %4207 = vsyncadd %s4193, %s4206
          %s4208 = smul.addr %s81, 2
          %s4209 = sadd.s32 %s82, %s4208
          %s4210 = smul.addr %s4209, 128
          %s4211 = scalar_lea.hbm %s57, %s4210
          %s4213 = sshll.u32 %s4196, 4
          %s4214 = int_to_ptr.vmem [resolvable:$true] %s4213
          %4216 = dma.vmem_to_hbm [thread:$0]  %s4214, 128, %s4211, %s4193
        $region140: #{tpu_custom_call.1} parent=131 // pred_fallthru
          _
        // Predicated region
        $region141: #{tpu_custom_call.1} parent=131 // pred_check
          %p4217 = pneg %p745
        $region142: #{tpu_custom_call.1} parent=131 // pred_check_branch
          %4219 = sbr.rel (%p4217) target = $region144
        $region143: #{tpu_custom_call.1} parent=131 // pred_region
          %s4221 = ssub.s32 128, 128
          %4222 = vsyncadd %s4198, %s4221
          %s4223 = smul.addr %s81, 128
          %s4224 = scalar_lea.hbm %s59, %s4223
          %s4226 = sshll.u32 %s4201, 4
          %s4227 = int_to_ptr.vmem [resolvable:$true] %s4226
          %4229 = dma.vmem_to_hbm [thread:$0]  %s4227, 128, %s4224, %s4198
        $region144: #{tpu_custom_call.1} parent=131 // pred_fallthru
          _
      $region132: #{tpu_custom_call.1} parent=5 // pred_fallthru
        _
      %p4230 = scmp.le.s32.totalorder 2, %s72
      // Predicated region
      $region145: #{tpu_custom_call.1} parent=5 // pred_check
        %p4231 = pneg %p4230
      $region146: #{tpu_custom_call.1} parent=5 // pred_check_branch
        %4233 = sbr.rel (%p4231) target = $region148
      $region147: #{tpu_custom_call.1} parent=5 // pred_region
        %s4234 = ssub.s32 %s72, 2
        // Predicated region
        $region149: #{tpu_custom_call.1} parent=147 // pred_check
          %p4235 = pneg %p725
        $region150: #{tpu_custom_call.1} parent=147 // pred_check_branch
          %4237 = sbr.rel (%p4235) target = $region152
        $region151: #{tpu_custom_call.1} parent=147 // pred_region
          %s4238 = sand.u32 %s710, 1
          %s4239 = scalar_lea.sflag [#allocation7], %s4238
          %s4240 = sand.u32 %s710, 1
          %s4241 = smul.addr %s4240, 8
          %s4242 = scalar_lea.vmem [#allocation6], %s4241
          %4243 = dma.done %s4239, 128
        $region152: #{tpu_custom_call.1} parent=147 // pred_fallthru
          _
        // Predicated region
        $region153: #{tpu_custom_call.1} parent=147 // pred_check
          %p4244 = pneg %p751
        $region154: #{tpu_custom_call.1} parent=147 // pred_check_branch
          %4246 = sbr.rel (%p4244) target = $region156
        $region155: #{tpu_custom_call.1} parent=147 // pred_region
          %s4247 = sand.u32 %s736, 1
          %s4248 = scalar_lea.sflag [#allocation9], %s4247
          %s4249 = sand.u32 %s736, 1
          %s4250 = smul.addr %s4249, 8
          %s4251 = scalar_lea.vmem [#allocation8], %s4250
          %4252 = dma.done %s4248, 128
        $region156: #{tpu_custom_call.1} parent=147 // pred_fallthru
          _
      $region148: #{tpu_custom_call.1} parent=5 // pred_fallthru
        _
    $region6: #{tpu_custom_call.1} parent=1 // loop_footer
      %s76 = sadd.s32 1, %s72
    $region7: #{tpu_custom_call.1} parent=1 // loop_footer_branch
      %71 = sbr.rel target = $region3
    $region8: #{tpu_custom_call.1} parent=1 // loop_exit
      _
    %4253 = vsyncpa [#allocation7], 1
    %s4254 = scalar_lea.sflag [#allocation7], 1
    %4255 = vsyncpa %s4254, 1
    %4256 = vsyncpa [#allocation9], 1
    %s4257 = scalar_lea.sflag [#allocation9], 1
    %4258 = vsyncpa %s4257, 1

</llo_original>
